<compile_context>
chip_gen: v7x
topology: tpu7x:2x2x1
jax: 0.10.0
libtpu: 0.0.40
codegen_flags: <defaults>
</compile_context>

<pallas_src>
import functools
import math

import jax
import jax.numpy as jnp
from jax.experimental import pallas as pl
from jax.experimental.pallas import tpu as pltpu

# ---- scaled-down BERT config (bert-base-uncased = 768 hidden / 12L / 12H) ----
VOCAB = 64
MAX_POS = 16
TYPE_VOCAB = 2
HIDDEN = 128
NUM_LAYERS = 2
NUM_HEADS = 4
HEAD_DIM = HIDDEN // NUM_HEADS
INTERMEDIATE = 4 * HIDDEN
NUM_CLASSES = 4
CLS_PAD = 128                 # classifier head padded to full lane width
LN_EPS = 1e-12
MM_DTYPE = jnp.bfloat16       # MXU operand dtype; accumulation stays f32


# ----------------------------- in-kernel helpers ------------------------------
def _mm(a, b):
    """Matmul with bf16 MXU operands and f32 accumulation."""
    return jnp.dot(a.astype(MM_DTYPE), b.astype(MM_DTYPE),
                   preferred_element_type=jnp.float32)


def _layer_norm(x, g, b):
    mean = jnp.mean(x, axis=-1, keepdims=True)
    var = jnp.mean(jnp.square(x - mean), axis=-1, keepdims=True)
    return (x - mean) * jax.lax.rsqrt(var + LN_EPS) * g + b


def _gelu(x):
    # TODO(synk): BERT uses exact erf-GELU; tanh approximation used here.
    return 0.5 * x * (1.0 + jnp.tanh(
        0.7978845608028654 * (x + 0.044715 * x * x * x)))


# dot_general dimension numbers (all batched over the head axis, dim 0):
_PROJ_DIMS = (((2,), (1,)), ((0,), (0,)))    # (N,S,H) . (N,H,D)  -> (N,S,D)
_SCORE_DIMS = (((2,), (2,)), ((0,), (0,)))   # (N,S,D) . (N,S,D)  -> (N,S,S)
_CTX_DIMS = (((2,), (1,)), ((0,), (0,)))     # (N,S,S) . (N,S,D)  -> (N,S,D)
                                             # (N,S,D) . (N,D,H)  -> (N,S,H)


# ------------------------ fully fused BERT forward kernel ---------------------
def _bert_kernel(x_ref, bias_ref, eg_ref, eb_ref,
                 wq_ref, bq_ref, wk_ref, bk_ref, wv_ref, bv_ref,
                 ao_w_ref, ao_b_ref, aln_g_ref, aln_b_ref,
                 i_w_ref, i_b_ref, fo_w_ref, fo_b_ref, fln_g_ref, fln_b_ref,
                 pw_ref, pb_ref, ow_ref, ob_ref,
                 logits_ref, h_scratch, *, batch, seq):
    l = pl.program_id(0)

    # ---- layer 0: embeddings LayerNorm into the resident activation scratch
    @pl.when(l == 0)
    def _():
        h_scratch[...] = _layer_norm(x_ref[...], eg_ref[...], eb_ref[...])

    h = h_scratch[...]                               # (B*S, H) f32, VMEM-resident

    wq, wk, wv = wq_ref[0], wk_ref[0], wv_ref[0]     # (N, H, D) bf16 (scale in Q)
    bq, bk, bv = bq_ref[0], bk_ref[0], bv_ref[0]     # (N, 1, D) f32
    ao_w = ao_w_ref[0]                               # (N, D, H) bf16

    # ---- multi-head self-attention: head-batched dots, no lane slicing/concat
    attn_rows = []
    for b in range(batch):                           # tiny static B -> unrolled
        xb = h[b * seq:(b + 1) * seq, :].astype(MM_DTYPE)        # (S, H)
        xb = jnp.broadcast_to(xb[None], (NUM_HEADS, seq, HIDDEN))
        q = jax.lax.dot_general(xb, wq, _PROJ_DIMS,
                                preferred_element_type=jnp.float32) + bq
        k = jax.lax.dot_general(xb, wk, _PROJ_DIMS,
                                preferred_element_type=jnp.float32) + bk
        v = jax.lax.dot_general(xb, wv, _PROJ_DIMS,
                                preferred_element_type=jnp.float32) + bv
        s = jax.lax.dot_general(q.astype(MM_DTYPE), k.astype(MM_DTYPE),
                                _SCORE_DIMS, preferred_element_type=jnp.float32)
        s = s + bias_ref[b]                          # (N,S,S) + (1,S) key-mask bias
        m = jnp.max(s, axis=-1, keepdims=True)
        p = jnp.exp(s - m)
        p = p * pl.reciprocal(jnp.sum(p, axis=-1, keepdims=True), approx=True)
        ctx = jax.lax.dot_general(p.astype(MM_DTYPE), v.astype(MM_DTYPE),
                                  _CTX_DIMS, preferred_element_type=jnp.float32)
        # per-head output projection, accumulate over heads -> lane-dense (S, H)
        attn_b = jnp.sum(
            jax.lax.dot_general(ctx.astype(MM_DTYPE), ao_w, _CTX_DIMS,
                                preferred_element_type=jnp.float32), axis=0)
        attn_rows.append(attn_b)
    attn = jnp.concatenate(attn_rows, axis=0)        # (B*S, H)

    # ---- attention output bias + residual + LayerNorm (fused)
    h1 = _layer_norm(attn + ao_b_ref[0] + h, aln_g_ref[0], aln_b_ref[0])

    # ---- FFN: intermediate + GELU, output projection + residual + LayerNorm
    inter = _gelu(_mm(h1, i_w_ref[0]) + i_b_ref[0])
    ffn = _mm(inter, fo_w_ref[0]) + fo_b_ref[0]
    h2 = _layer_norm(ffn + h1, fln_g_ref[0], fln_b_ref[0])
    h_scratch[...] = h2                              # carried to the next layer

    # ---- last layer: fused BERT pooler (tanh) + classifier head
    @pl.when(l == pl.num_programs(0) - 1)
    def _():
        cls = jnp.concatenate(
            [h2[b * seq:b * seq + 1, :] for b in range(batch)], axis=0)  # (B, H)
        pooled = jnp.tanh(_mm(cls, pw_ref[...]) + pb_ref[...])
        logits_ref[...] = (_mm(pooled, ow_ref[...]) + ob_ref[...]
                           ).astype(logits_ref.dtype)


# --------------------------- parameters / forward ------------------------------
def init_params(key):
    def w(k, fi, fo):
        return 0.02 * jax.random.normal(k, (fi, fo), jnp.float32)

    def head_cols(m):   # (H, H) with per-head column groups -> (N, H, D)
        return m.reshape(HIDDEN, NUM_HEADS, HEAD_DIM).transpose(1, 0, 2)

    keys = jax.random.split(key, 6)
    lkeys = jax.random.split(keys[5], NUM_LAYERS)
    scale = 1.0 / math.sqrt(HEAD_DIM)

    wq, wk, wv, ao_w, i_w, fo_w = [], [], [], [], [], []
    for lk in lkeys:
        k = jax.random.split(lk, 6)
        wq.append(head_cols(w(k[0], HIDDEN, HIDDEN)) * scale)   # scale folded into Q
        wk.append(head_cols(w(k[1], HIDDEN, HIDDEN)))
        wv.append(head_cols(w(k[2], HIDDEN, HIDDEN)))
        # output projection rows grouped per head -> (N, D, H)
        ao_w.append(w(k[3], HIDDEN, HIDDEN).reshape(NUM_HEADS, HEAD_DIM, HIDDEN))
        i_w.append(w(k[4], HIDDEN, INTERMEDIATE))
        fo_w.append(w(k[5], INTERMEDIATE, HIDDEN))

    ones_lh = jnp.ones((NUM_LAYERS, 1, HIDDEN), jnp.float32)
    zeros_lh = jnp.zeros((NUM_LAYERS, 1, HIDDEN), jnp.float32)
    zeros_hd = jnp.zeros((NUM_LAYERS, NUM_HEADS, 1, HEAD_DIM), jnp.float32)

    out_w = jnp.zeros((HIDDEN, CLS_PAD), jnp.float32
                      ).at[:, :NUM_CLASSES].set(w(keys[3], HIDDEN, NUM_CLASSES))

    return {
        "word_emb": w(keys[0], VOCAB, HIDDEN),
        "pos_emb": w(keys[1], MAX_POS, HIDDEN),
        "type_emb": w(keys[2], TYPE_VOCAB, HIDDEN),
        "emb_ln_g": jnp.ones((1, HIDDEN), jnp.float32),
        "emb_ln_b": jnp.zeros((1, HIDDEN), jnp.float32),
        "wq": jnp.stack(wq).astype(MM_DTYPE),        # (L, N, H, D), 1/sqrt(D) folded
        "wk": jnp.stack(wk).astype(MM_DTYPE),
        "wv": jnp.stack(wv).astype(MM_DTYPE),
        # Q/K/V biases (zero here; the Q bias would also carry the folded scale)
        "bq": zeros_hd, "bk": zeros_hd, "bv": zeros_hd,
        "ao_w": jnp.stack(ao_w).astype(MM_DTYPE),    # (L, N, D, H)
        "ao_b": zeros_lh,
        "aln_g": ones_lh, "aln_b": zeros_lh,
        "i_w": jnp.stack(i_w).astype(MM_DTYPE),      # (L, H, I)
        "i_b": jnp.zeros((NUM_LAYERS, 1, INTERMEDIATE), jnp.float32),
        "fo_w": jnp.stack(fo_w).astype(MM_DTYPE),    # (L, I, H)
        "fo_b": zeros_lh,
        "fln_g": ones_lh, "fln_b": zeros_lh,
        "pooler_w": w(keys[4], HIDDEN, HIDDEN).astype(MM_DTYPE),
        "pooler_b": jnp.zeros((1, HIDDEN), jnp.float32),
        "out_w": out_w.astype(MM_DTYPE),             # padded to 128 lanes
        "out_b": jnp.zeros((1, CLS_PAD), jnp.float32),
    }


def bert_classifier_forward(params, ids, mask):
    B, S = ids.shape

    # ---- embeddings (gathers = plain-JAX glue; LayerNorm is done in-kernel) ----
    # TODO(synk): token_type_ids assumed all-zero (single-segment inputs).
    pos = jnp.arange(S)
    x = (params["word_emb"][ids]
         + params["pos_emb"][pos][None, :, :]
         + params["type_emb"][jnp.zeros((B, S), jnp.int32)])
    x = x.reshape(B * S, HIDDEN)                                   # (B*S, H) f32

    # additive attention-mask bias, (B, 1, S); broadcast over heads/queries in-kernel
    bias = ((1.0 - mask.astype(jnp.float32)) * -10000.0)[:, None, :]

    def const_spec(shape):            # same block every grid step (fetched once)
        zeros = (0,) * len(shape)
        return pl.BlockSpec(shape, lambda l, z=zeros: z)

    def layer_spec(shape):            # leading layer axis indexed by program_id(0)
        zeros = (0,) * (len(shape) - 1)
        return pl.BlockSpec((1,) + tuple(shape[1:]), lambda l, z=zeros: (l,) + z)

    in_specs = [
        const_spec((B * S, HIDDEN)),                     # summed embeddings
        const_spec((B, 1, S)),                           # attention-mask bias
        const_spec((1, HIDDEN)), const_spec((1, HIDDEN)),  # embedding LN
        layer_spec(params["wq"].shape), layer_spec(params["bq"].shape),
        layer_spec(params["wk"].shape), layer_spec(params["bk"].shape),
        layer_spec(params["wv"].shape), layer_spec(params["bv"].shape),
        layer_spec(params["ao_w"].shape), layer_spec(params["ao_b"].shape),
        layer_spec(params["aln_g"].shape), layer_spec(params["aln_b"].shape),
        layer_spec(params["i_w"].shape), layer_spec(params["i_b"].shape),
        layer_spec(params["fo_w"].shape), layer_spec(params["fo_b"].shape),
        layer_spec(params["fln_g"].shape), layer_spec(params["fln_b"].shape),
        const_spec((HIDDEN, HIDDEN)), const_spec((1, HIDDEN)),      # pooler
        const_spec((HIDDEN, CLS_PAD)), const_spec((1, CLS_PAD)),    # padded head
    ]

    kern = functools.partial(_bert_kernel, batch=B, seq=S)
    logits = pl.pallas_call(
        kern,
        grid=(NUM_LAYERS,),
        out_shape=jax.ShapeDtypeStruct((B, CLS_PAD), jnp.float32),
        in_specs=in_specs,
        out_specs=const_spec((B, CLS_PAD)),
        scratch_shapes=[pltpu.VMEM((B * S, HIDDEN), jnp.float32)],  # resident acts
        compiler_params=pltpu.CompilerParams(
            dimension_semantics=("arbitrary",)),  # layer axis carries the scratch
    )(x, bias, params["emb_ln_g"], params["emb_ln_b"],
      params["wq"], params["bq"], params["wk"], params["bk"],
      params["wv"], params["bv"],
      params["ao_w"], params["ao_b"], params["aln_g"], params["aln_b"],
      params["i_w"], params["i_b"], params["fo_w"], params["fo_b"],
      params["fln_g"], params["fln_b"],
      params["pooler_w"], params["pooler_b"],
      params["out_w"], params["out_b"])
    return logits[:, :NUM_CLASSES]


if __name__ == "__main__":
    key = jax.random.PRNGKey(0)
    pkey, ikey = jax.random.split(key)
    params = init_params(pkey)

    B, S = 2, 8
    ids = jax.random.randint(ikey, (B, S), 0, VOCAB, dtype=jnp.int32)
    mask = jnp.array([[1, 1, 1, 1, 1, 1, 1, 1],
                      [1, 1, 1, 1, 1, 1, 0, 0]], dtype=jnp.int32)

    logits = jax.jit(bert_classifier_forward)(params, ids, mask)
    logits = jax.block_until_ready(logits)
    assert logits.shape == (B, NUM_CLASSES) and logits.dtype == jnp.float32
    print("KERNEL_OK")
</pallas_src>

<mosaic_0001>
module attributes {stable_mosaic.version = 11 : i64} {
  func.func @_bert_kernel(%arg0: i32, %arg1: memref<16x128xf32, #tpu.memory_space<vmem>>, %arg2: memref<2x1x8xf32, #tpu.memory_space<vmem>>, %arg3: memref<1x128xf32, #tpu.memory_space<vmem>>, %arg4: memref<1x128xf32, #tpu.memory_space<vmem>>, %arg5: memref<1x4x128x32xbf16, #tpu.memory_space<vmem>>, %arg6: memref<1x4x1x32xf32, #tpu.memory_space<vmem>>, %arg7: memref<1x4x128x32xbf16, #tpu.memory_space<vmem>>, %arg8: memref<1x4x1x32xf32, #tpu.memory_space<vmem>>, %arg9: memref<1x4x128x32xbf16, #tpu.memory_space<vmem>>, %arg10: memref<1x4x1x32xf32, #tpu.memory_space<vmem>>, %arg11: memref<1x4x32x128xbf16, #tpu.memory_space<vmem>>, %arg12: memref<1x1x128xf32, #tpu.memory_space<vmem>>, %arg13: memref<1x1x128xf32, #tpu.memory_space<vmem>>, %arg14: memref<1x1x128xf32, #tpu.memory_space<vmem>>, %arg15: memref<1x128x512xbf16, #tpu.memory_space<vmem>>, %arg16: memref<1x1x512xf32, #tpu.memory_space<vmem>>, %arg17: memref<1x512x128xbf16, #tpu.memory_space<vmem>>, %arg18: memref<1x1x128xf32, #tpu.memory_space<vmem>>, %arg19: memref<1x1x128xf32, #tpu.memory_space<vmem>>, %arg20: memref<1x1x128xf32, #tpu.memory_space<vmem>>, %arg21: memref<128x128xbf16, #tpu.memory_space<vmem>>, %arg22: memref<1x128xf32, #tpu.memory_space<vmem>>, %arg23: memref<128x128xbf16, #tpu.memory_space<vmem>>, %arg24: memref<1x128xf32, #tpu.memory_space<vmem>>, %arg25: memref<2x128xf32, #tpu.memory_space<vmem>>, %arg26: memref<16x128xf32, #tpu.memory_space<vmem>>) attributes {dimension_semantics = [#tpu.dimension_semantics<arbitrary>], iteration_bounds = array<i64: 2>, scalar_prefetch = 0 : i64, scratch_operands = 1 : i64, tpu.core_type = #tpu.core_type<tc>, window_params = [{pipeline_mode = #tpu.pipeline_mode<synchronous>, transform_indices = @transform_0, window_bounds = array<i64: 16, 128>}, {pipeline_mode = #tpu.pipeline_mode<synchronous>, transform_indices = @transform_1, window_bounds = array<i64: 2, 1, 8>}, {pipeline_mode = #tpu.pipeline_mode<synchronous>, transform_indices = @transform_2, window_bounds = array<i64: 1, 128>}, {pipeline_mode = #tpu.pipeline_mode<synchronous>, transform_indices = @transform_3, window_bounds = array<i64: 1, 128>}, {transform_indices = @transform_4, window_bounds = array<i64: 1, 4, 128, 32>}, {transform_indices = @transform_5, window_bounds = array<i64: 1, 4, 1, 32>}, {transform_indices = @transform_6, window_bounds = array<i64: 1, 4, 128, 32>}, {transform_indices = @transform_7, window_bounds = array<i64: 1, 4, 1, 32>}, {transform_indices = @transform_8, window_bounds = array<i64: 1, 4, 128, 32>}, {transform_indices = @transform_9, window_bounds = array<i64: 1, 4, 1, 32>}, {transform_indices = @transform_10, window_bounds = array<i64: 1, 4, 32, 128>}, {transform_indices = @transform_11, window_bounds = array<i64: 1, 1, 128>}, {transform_indices = @transform_12, window_bounds = array<i64: 1, 1, 128>}, {transform_indices = @transform_13, window_bounds = array<i64: 1, 1, 128>}, {transform_indices = @transform_14, window_bounds = array<i64: 1, 128, 512>}, {transform_indices = @transform_15, window_bounds = array<i64: 1, 1, 512>}, {transform_indices = @transform_16, window_bounds = array<i64: 1, 512, 128>}, {transform_indices = @transform_17, window_bounds = array<i64: 1, 1, 128>}, {transform_indices = @transform_18, window_bounds = array<i64: 1, 1, 128>}, {transform_indices = @transform_19, window_bounds = array<i64: 1, 1, 128>}, {pipeline_mode = #tpu.pipeline_mode<synchronous>, transform_indices = @transform_20, window_bounds = array<i64: 128, 128>}, {pipeline_mode = #tpu.pipeline_mode<synchronous>, transform_indices = @transform_21, window_bounds = array<i64: 1, 128>}, {pipeline_mode = #tpu.pipeline_mode<synchronous>, transform_indices = @transform_22, window_bounds = array<i64: 128, 128>}, {pipeline_mode = #tpu.pipeline_mode<synchronous>, transform_indices = @transform_23, window_bounds = array<i64: 1, 128>}, {pipeline_mode = #tpu.pipeline_mode<synchronous>, transform_indices = @transform_24, window_bounds = array<i64: 2, 128>}]} {
    %c0_i32 = arith.constant 0 : i32
    %0 = arith.cmpi eq, %arg0, %c0_i32 : i32
    %1 = arith.extui %0 : i1 to i32
    %c0_i32_0 = arith.constant 0 : i32
    %2 = arith.cmpi ne, %1, %c0_i32_0 : i32
    scf.if %2 {
      %c0_98 = arith.constant 0 : index
      %c0_99 = arith.constant 0 : index
      %186 = vector.load %arg1[%c0_98, %c0_99] : memref<16x128xf32, #tpu.memory_space<vmem>>, vector<16x128xf32>
      %c0_100 = arith.constant 0 : index
      %c0_101 = arith.constant 0 : index
      %187 = vector.load %arg3[%c0_100, %c0_101] : memref<1x128xf32, #tpu.memory_space<vmem>>, vector<1x128xf32>
      %c0_102 = arith.constant 0 : index
      %c0_103 = arith.constant 0 : index
      %188 = vector.load %arg4[%c0_102, %c0_103] : memref<1x128xf32, #tpu.memory_space<vmem>>, vector<1x128xf32>
      %cst_104 = arith.constant dense<0.000000e+00> : vector<16xf32>
      %189 = vector.multi_reduction <add>, %186, %cst_104 [1] : vector<16x128xf32> to vector<16xf32>
      %190 = vector.shape_cast %189 : vector<16xf32> to vector<16x1xf32>
      %cst_105 = arith.constant 1.280000e+02 : f32
      %191 = vector.broadcast %cst_105 : f32 to vector<16x1xf32>
      %192 = arith.divf %190, %191 : vector<16x1xf32>
      %193 = vector.broadcast %192 : vector<16x1xf32> to vector<16x128xf32>
      %194 = arith.subf %186, %193 : vector<16x128xf32>
      %195 = arith.mulf %194, %194 : vector<16x128xf32>
      %cst_106 = arith.constant dense<0.000000e+00> : vector<16xf32>
      %196 = vector.multi_reduction <add>, %195, %cst_106 [1] : vector<16x128xf32> to vector<16xf32>
      %197 = vector.shape_cast %196 : vector<16xf32> to vector<16x1xf32>
      %cst_107 = arith.constant 1.280000e+02 : f32
      %198 = vector.broadcast %cst_107 : f32 to vector<16x1xf32>
      %199 = arith.divf %197, %198 : vector<16x1xf32>
      %200 = vector.broadcast %192 : vector<16x1xf32> to vector<16x128xf32>
      %201 = arith.subf %186, %200 : vector<16x128xf32>
      %cst_108 = arith.constant 9.99999996E-13 : f32
      %202 = vector.broadcast %cst_108 : f32 to vector<16x1xf32>
      %203 = arith.addf %199, %202 : vector<16x1xf32>
      %204 = math.rsqrt %203 : vector<16x1xf32>
      %205 = vector.broadcast %204 : vector<16x1xf32> to vector<16x128xf32>
      %206 = arith.mulf %201, %205 : vector<16x128xf32>
      %207 = vector.broadcast %187 : vector<1x128xf32> to vector<16x128xf32>
      %208 = arith.mulf %206, %207 : vector<16x128xf32>
      %209 = vector.broadcast %188 : vector<1x128xf32> to vector<16x128xf32>
      %210 = arith.addf %208, %209 : vector<16x128xf32>
      %c0_109 = arith.constant 0 : index
      %c0_110 = arith.constant 0 : index
      %211 = vector.load %arg26[%c0_109, %c0_110] : memref<16x128xf32, #tpu.memory_space<vmem>>, vector<16x128xf32>
      tpu.vector_store %arg26[%c0_109, %c0_110], %210 {strides = array<i32>} : memref<16x128xf32, #tpu.memory_space<vmem>>, vector<16x128xf32>,
    } else {
    }
    %c0 = arith.constant 0 : index
    %c0_1 = arith.constant 0 : index
    %3 = vector.load %arg26[%c0, %c0_1] : memref<16x128xf32, #tpu.memory_space<vmem>>, vector<16x128xf32>
    %c0_2 = arith.constant 0 : index
    %c0_3 = arith.constant 0 : index
    %c0_4 = arith.constant 0 : index
    %c0_5 = arith.constant 0 : index
    %4 = vector.load %arg5[%c0_2, %c0_3, %c0_4, %c0_5] : memref<1x4x128x32xbf16, #tpu.memory_space<vmem>>, vector<1x4x128x32xbf16>
    %5 = vector.shape_cast %4 : vector<1x4x128x32xbf16> to vector<4x128x32xbf16>
    %c0_6 = arith.constant 0 : index
    %c0_7 = arith.constant 0 : index
    %c0_8 = arith.constant 0 : index
    %c0_9 = arith.constant 0 : index
    %6 = vector.load %arg7[%c0_6, %c0_7, %c0_8, %c0_9] : memref<1x4x128x32xbf16, #tpu.memory_space<vmem>>, vector<1x4x128x32xbf16>
    %7 = vector.shape_cast %6 : vector<1x4x128x32xbf16> to vector<4x128x32xbf16>
    %c0_10 = arith.constant 0 : index
    %c0_11 = arith.constant 0 : index
    %c0_12 = arith.constant 0 : index
    %c0_13 = arith.constant 0 : index
    %8 = vector.load %arg9[%c0_10, %c0_11, %c0_12, %c0_13] : memref<1x4x128x32xbf16, #tpu.memory_space<vmem>>, vector<1x4x128x32xbf16>
    %9 = vector.shape_cast %8 : vector<1x4x128x32xbf16> to vector<4x128x32xbf16>
    %c0_14 = arith.constant 0 : index
    %c0_15 = arith.constant 0 : index
    %c0_16 = arith.constant 0 : index
    %c0_17 = arith.constant 0 : index
    %10 = vector.load %arg6[%c0_14, %c0_15, %c0_16, %c0_17] : memref<1x4x1x32xf32, #tpu.memory_space<vmem>>, vector<1x4x1x32xf32>
    %11 = vector.shape_cast %10 : vector<1x4x1x32xf32> to vector<4x1x32xf32>
    %c0_18 = arith.constant 0 : index
    %c0_19 = arith.constant 0 : index
    %c0_20 = arith.constant 0 : index
    %c0_21 = arith.constant 0 : index
    %12 = vector.load %arg8[%c0_18, %c0_19, %c0_20, %c0_21] : memref<1x4x1x32xf32, #tpu.memory_space<vmem>>, vector<1x4x1x32xf32>
    %13 = vector.shape_cast %12 : vector<1x4x1x32xf32> to vector<4x1x32xf32>
    %c0_22 = arith.constant 0 : index
    %c0_23 = arith.constant 0 : index
    %c0_24 = arith.constant 0 : index
    %c0_25 = arith.constant 0 : index
    %14 = vector.load %arg10[%c0_22, %c0_23, %c0_24, %c0_25] : memref<1x4x1x32xf32, #tpu.memory_space<vmem>>, vector<1x4x1x32xf32>
    %15 = vector.shape_cast %14 : vector<1x4x1x32xf32> to vector<4x1x32xf32>
    %c0_26 = arith.constant 0 : index
    %c0_27 = arith.constant 0 : index
    %c0_28 = arith.constant 0 : index
    %c0_29 = arith.constant 0 : index
    %16 = vector.load %arg11[%c0_26, %c0_27, %c0_28, %c0_29] : memref<1x4x32x128xbf16, #tpu.memory_space<vmem>>, vector<1x4x32x128xbf16>
    %17 = vector.shape_cast %16 : vector<1x4x32x128xbf16> to vector<4x32x128xbf16>
    %18 = vector.extract_strided_slice %3 {offsets = [0, 0], sizes = [8, 128], strides = [1, 1]} : vector<16x128xf32> to vector<8x128xf32>
    %19 = arith.truncf %18 : vector<8x128xf32> to vector<8x128xbf16>
    %20 = vector.shape_cast %19 : vector<8x128xbf16> to vector<1x8x128xbf16>
    %21 = vector.shape_cast %20 : vector<1x8x128xbf16> to vector<1x8x128xbf16>
    %22 = vector.broadcast %21 : vector<1x8x128xbf16> to vector<4x8x128xbf16>
    %cst = arith.constant dense<0.000000e+00> : vector<4x8x32xf32>
    %23 = tpu.matmul %22, %5, %cst {dimension_numbers = #tpu.dot_dimension_numbers<[2], [1], [1], [2], [0, 0, 0, 1, 1, 2], [0], [0]>} : vector<4x8x128xbf16>, vector<4x128x32xbf16>, vector<4x8x32xf32> -> vector<4x8x32xf32>
    %24 = vector.broadcast %11 : vector<4x1x32xf32> to vector<4x8x32xf32>
    %25 = arith.addf %23, %24 : vector<4x8x32xf32>
    %cst_30 = arith.constant dense<0.000000e+00> : vector<4x8x32xf32>
    %26 = tpu.matmul %22, %7, %cst_30 {dimension_numbers = #tpu.dot_dimension_numbers<[2], [1], [1], [2], [0, 0, 0, 1, 1, 2], [0], [0]>} : vector<4x8x128xbf16>, vector<4x128x32xbf16>, vector<4x8x32xf32> -> vector<4x8x32xf32>
    %27 = vector.broadcast %13 : vector<4x1x32xf32> to vector<4x8x32xf32>
    %28 = arith.addf %26, %27 : vector<4x8x32xf32>
    %cst_31 = arith.constant dense<0.000000e+00> : vector<4x8x32xf32>
    %29 = tpu.matmul %22, %9, %cst_31 {dimension_numbers = #tpu.dot_dimension_numbers<[2], [1], [1], [2], [0, 0, 0, 1, 1, 2], [0], [0]>} : vector<4x8x128xbf16>, vector<4x128x32xbf16>, vector<4x8x32xf32> -> vector<4x8x32xf32>
    %30 = vector.broadcast %15 : vector<4x1x32xf32> to vector<4x8x32xf32>
    %31 = arith.addf %29, %30 : vector<4x8x32xf32>
    %32 = arith.truncf %25 : vector<4x8x32xf32> to vector<4x8x32xbf16>
    %33 = arith.truncf %28 : vector<4x8x32xf32> to vector<4x8x32xbf16>
    %cst_32 = arith.constant dense<0.000000e+00> : vector<4x8x8xf32>
    %34 = tpu.matmul %32, %33, %cst_32 {dimension_numbers = #tpu.dot_dimension_numbers<[2], [2], [1], [1], [0, 0, 0, 1, 1, 1], [0], [0]>} : vector<4x8x32xbf16>, vector<4x8x32xbf16>, vector<4x8x8xf32> -> vector<4x8x8xf32>
    %c0_33 = arith.constant 0 : index
    %c0_34 = arith.constant 0 : index
    %c0_35 = arith.constant 0 : index
    %35 = vector.load %arg2[%c0_33, %c0_34, %c0_35] : memref<2x1x8xf32, #tpu.memory_space<vmem>>, vector<1x1x8xf32>
    %36 = vector.shape_cast %35 : vector<1x1x8xf32> to vector<1x8xf32>
    %37 = vector.shape_cast %36 : vector<1x8xf32> to vector<1x1x8xf32>
    %38 = vector.broadcast %37 : vector<1x1x8xf32> to vector<4x8x8xf32>
    %39 = arith.addf %34, %38 : vector<4x8x8xf32>
    %cst_36 = arith.constant dense<0xFF800000> : vector<4x8xf32>
    %40 = vector.multi_reduction <maximumf>, %39, %cst_36 [2] : vector<4x8x8xf32> to vector<4x8xf32>
    %41 = vector.shape_cast %40 : vector<4x8xf32> to vector<4x8x1xf32>
    %42 = vector.broadcast %41 : vector<4x8x1xf32> to vector<4x8x8xf32>
    %43 = arith.subf %39, %42 : vector<4x8x8xf32>
    %44 = math.exp %43 : vector<4x8x8xf32>
    %cst_37 = arith.constant dense<0.000000e+00> : vector<4x8xf32>
    %45 = vector.multi_reduction <add>, %44, %cst_37 [2] : vector<4x8x8xf32> to vector<4x8xf32>
    %46 = vector.shape_cast %45 : vector<4x8xf32> to vector<4x8x1xf32>
    %47 = tpu.reciprocal %46 {approx = true} : vector<4x8x1xf32> -> vector<4x8x1xf32>
    %48 = vector.broadcast %47 : vector<4x8x1xf32> to vector<4x8x8xf32>
    %49 = arith.mulf %44, %48 : vector<4x8x8xf32>
    %50 = arith.truncf %49 : vector<4x8x8xf32> to vector<4x8x8xbf16>
    %51 = arith.truncf %31 : vector<4x8x32xf32> to vector<4x8x32xbf16>
    %cst_38 = arith.constant dense<0.000000e+00> : vector<4x8x32xf32>
    %52 = tpu.matmul %50, %51, %cst_38 {dimension_numbers = #tpu.dot_dimension_numbers<[2], [1], [1], [2], [0, 0, 0, 1, 1, 2], [0], [0]>} : vector<4x8x8xbf16>, vector<4x8x32xbf16>, vector<4x8x32xf32> -> vector<4x8x32xf32>
    %53 = arith.truncf %52 : vector<4x8x32xf32> to vector<4x8x32xbf16>
    %cst_39 = arith.constant dense<0.000000e+00> : vector<4x8x128xf32>
    %54 = tpu.matmul %53, %17, %cst_39 {dimension_numbers = #tpu.dot_dimension_numbers<[2], [1], [1], [2], [0, 0, 0, 1, 1, 2], [0], [0]>} : vector<4x8x32xbf16>, vector<4x32x128xbf16>, vector<4x8x128xf32> -> vector<4x8x128xf32>
    %cst_40 = arith.constant dense<0.000000e+00> : vector<8x128xf32>
    %55 = vector.multi_reduction <add>, %54, %cst_40 [0] : vector<4x8x128xf32> to vector<8x128xf32>
    %56 = vector.extract_strided_slice %3 {offsets = [8, 0], sizes = [8, 128], strides = [1, 1]} : vector<16x128xf32> to vector<8x128xf32>
    %57 = arith.truncf %56 : vector<8x128xf32> to vector<8x128xbf16>
    %58 = vector.shape_cast %57 : vector<8x128xbf16> to vector<1x8x128xbf16>
    %59 = vector.shape_cast %58 : vector<1x8x128xbf16> to vector<1x8x128xbf16>
    %60 = vector.broadcast %59 : vector<1x8x128xbf16> to vector<4x8x128xbf16>
    %cst_41 = arith.constant dense<0.000000e+00> : vector<4x8x32xf32>
    %61 = tpu.matmul %60, %5, %cst_41 {dimension_numbers = #tpu.dot_dimension_numbers<[2], [1], [1], [2], [0, 0, 0, 1, 1, 2], [0], [0]>} : vector<4x8x128xbf16>, vector<4x128x32xbf16>, vector<4x8x32xf32> -> vector<4x8x32xf32>
    %62 = vector.broadcast %11 : vector<4x1x32xf32> to vector<4x8x32xf32>
    %63 = arith.addf %61, %62 : vector<4x8x32xf32>
    %cst_42 = arith.constant dense<0.000000e+00> : vector<4x8x32xf32>
    %64 = tpu.matmul %60, %7, %cst_42 {dimension_numbers = #tpu.dot_dimension_numbers<[2], [1], [1], [2], [0, 0, 0, 1, 1, 2], [0], [0]>} : vector<4x8x128xbf16>, vector<4x128x32xbf16>, vector<4x8x32xf32> -> vector<4x8x32xf32>
    %65 = vector.broadcast %13 : vector<4x1x32xf32> to vector<4x8x32xf32>
    %66 = arith.addf %64, %65 : vector<4x8x32xf32>
    %cst_43 = arith.constant dense<0.000000e+00> : vector<4x8x32xf32>
    %67 = tpu.matmul %60, %9, %cst_43 {dimension_numbers = #tpu.dot_dimension_numbers<[2], [1], [1], [2], [0, 0, 0, 1, 1, 2], [0], [0]>} : vector<4x8x128xbf16>, vector<4x128x32xbf16>, vector<4x8x32xf32> -> vector<4x8x32xf32>
    %68 = vector.broadcast %15 : vector<4x1x32xf32> to vector<4x8x32xf32>
    %69 = arith.addf %67, %68 : vector<4x8x32xf32>
    %70 = arith.truncf %63 : vector<4x8x32xf32> to vector<4x8x32xbf16>
    %71 = arith.truncf %66 : vector<4x8x32xf32> to vector<4x8x32xbf16>
    %cst_44 = arith.constant dense<0.000000e+00> : vector<4x8x8xf32>
    %72 = tpu.matmul %70, %71, %cst_44 {dimension_numbers = #tpu.dot_dimension_numbers<[2], [2], [1], [1], [0, 0, 0, 1, 1, 1], [0], [0]>} : vector<4x8x32xbf16>, vector<4x8x32xbf16>, vector<4x8x8xf32> -> vector<4x8x8xf32>
    %c1 = arith.constant 1 : index
    %c0_45 = arith.constant 0 : index
    %c0_46 = arith.constant 0 : index
    %73 = vector.load %arg2[%c1, %c0_45, %c0_46] : memref<2x1x8xf32, #tpu.memory_space<vmem>>, vector<1x1x8xf32>
    %74 = vector.shape_cast %73 : vector<1x1x8xf32> to vector<1x8xf32>
    %75 = vector.shape_cast %74 : vector<1x8xf32> to vector<1x1x8xf32>
    %76 = vector.broadcast %75 : vector<1x1x8xf32> to vector<4x8x8xf32>
    %77 = arith.addf %72, %76 : vector<4x8x8xf32>
    %cst_47 = arith.constant dense<0xFF800000> : vector<4x8xf32>
    %78 = vector.multi_reduction <maximumf>, %77, %cst_47 [2] : vector<4x8x8xf32> to vector<4x8xf32>
    %79 = vector.shape_cast %78 : vector<4x8xf32> to vector<4x8x1xf32>
    %80 = vector.broadcast %79 : vector<4x8x1xf32> to vector<4x8x8xf32>
    %81 = arith.subf %77, %80 : vector<4x8x8xf32>
    %82 = math.exp %81 : vector<4x8x8xf32>
    %cst_48 = arith.constant dense<0.000000e+00> : vector<4x8xf32>
    %83 = vector.multi_reduction <add>, %82, %cst_48 [2] : vector<4x8x8xf32> to vector<4x8xf32>
    %84 = vector.shape_cast %83 : vector<4x8xf32> to vector<4x8x1xf32>
    %85 = tpu.reciprocal %84 {approx = true} : vector<4x8x1xf32> -> vector<4x8x1xf32>
    %86 = vector.broadcast %85 : vector<4x8x1xf32> to vector<4x8x8xf32>
    %87 = arith.mulf %82, %86 : vector<4x8x8xf32>
    %88 = arith.truncf %87 : vector<4x8x8xf32> to vector<4x8x8xbf16>
    %89 = arith.truncf %69 : vector<4x8x32xf32> to vector<4x8x32xbf16>
    %cst_49 = arith.constant dense<0.000000e+00> : vector<4x8x32xf32>
    %90 = tpu.matmul %88, %89, %cst_49 {dimension_numbers = #tpu.dot_dimension_numbers<[2], [1], [1], [2], [0, 0, 0, 1, 1, 2], [0], [0]>} : vector<4x8x8xbf16>, vector<4x8x32xbf16>, vector<4x8x32xf32> -> vector<4x8x32xf32>
    %91 = arith.truncf %90 : vector<4x8x32xf32> to vector<4x8x32xbf16>
    %cst_50 = arith.constant dense<0.000000e+00> : vector<4x8x128xf32>
    %92 = tpu.matmul %91, %17, %cst_50 {dimension_numbers = #tpu.dot_dimension_numbers<[2], [1], [1], [2], [0, 0, 0, 1, 1, 2], [0], [0]>} : vector<4x8x32xbf16>, vector<4x32x128xbf16>, vector<4x8x128xf32> -> vector<4x8x128xf32>
    %cst_51 = arith.constant dense<0.000000e+00> : vector<8x128xf32>
    %93 = vector.multi_reduction <add>, %92, %cst_51 [0] : vector<4x8x128xf32> to vector<8x128xf32>
    %94 = tpu.concatenate %55, %93 in 0 : vector<8x128xf32>, vector<8x128xf32> -> vector<16x128xf32>
    %c0_52 = arith.constant 0 : index
    %c0_53 = arith.constant 0 : index
    %c0_54 = arith.constant 0 : index
    %95 = vector.load %arg12[%c0_52, %c0_53, %c0_54] : memref<1x1x128xf32, #tpu.memory_space<vmem>>, vector<1x1x128xf32>
    %96 = vector.shape_cast %95 : vector<1x1x128xf32> to vector<1x128xf32>
    %97 = vector.broadcast %96 : vector<1x128xf32> to vector<16x128xf32>
    %98 = arith.addf %94, %97 : vector<16x128xf32>
    %99 = arith.addf %98, %3 : vector<16x128xf32>
    %c0_55 = arith.constant 0 : index
    %c0_56 = arith.constant 0 : index
    %c0_57 = arith.constant 0 : index
    %100 = vector.load %arg13[%c0_55, %c0_56, %c0_57] : memref<1x1x128xf32, #tpu.memory_space<vmem>>, vector<1x1x128xf32>
    %101 = vector.shape_cast %100 : vector<1x1x128xf32> to vector<1x128xf32>
    %c0_58 = arith.constant 0 : index
    %c0_59 = arith.constant 0 : index
    %c0_60 = arith.constant 0 : index
    %102 = vector.load %arg14[%c0_58, %c0_59, %c0_60] : memref<1x1x128xf32, #tpu.memory_space<vmem>>, vector<1x1x128xf32>
    %103 = vector.shape_cast %102 : vector<1x1x128xf32> to vector<1x128xf32>
    %cst_61 = arith.constant dense<0.000000e+00> : vector<16xf32>
    %104 = vector.multi_reduction <add>, %99, %cst_61 [1] : vector<16x128xf32> to vector<16xf32>
    %105 = vector.shape_cast %104 : vector<16xf32> to vector<16x1xf32>
    %cst_62 = arith.constant 1.280000e+02 : f32
    %106 = vector.broadcast %cst_62 : f32 to vector<16x1xf32>
    %107 = arith.divf %105, %106 : vector<16x1xf32>
    %108 = vector.broadcast %107 : vector<16x1xf32> to vector<16x128xf32>
    %109 = arith.subf %99, %108 : vector<16x128xf32>
    %110 = arith.mulf %109, %109 : vector<16x128xf32>
    %cst_63 = arith.constant dense<0.000000e+00> : vector<16xf32>
    %111 = vector.multi_reduction <add>, %110, %cst_63 [1] : vector<16x128xf32> to vector<16xf32>
    %112 = vector.shape_cast %111 : vector<16xf32> to vector<16x1xf32>
    %cst_64 = arith.constant 1.280000e+02 : f32
    %113 = vector.broadcast %cst_64 : f32 to vector<16x1xf32>
    %114 = arith.divf %112, %113 : vector<16x1xf32>
    %115 = vector.broadcast %107 : vector<16x1xf32> to vector<16x128xf32>
    %116 = arith.subf %99, %115 : vector<16x128xf32>
    %cst_65 = arith.constant 9.99999996E-13 : f32
    %117 = vector.broadcast %cst_65 : f32 to vector<16x1xf32>
    %118 = arith.addf %114, %117 : vector<16x1xf32>
    %119 = math.rsqrt %118 : vector<16x1xf32>
    %120 = vector.broadcast %119 : vector<16x1xf32> to vector<16x128xf32>
    %121 = arith.mulf %116, %120 : vector<16x128xf32>
    %122 = vector.broadcast %101 : vector<1x128xf32> to vector<16x128xf32>
    %123 = arith.mulf %121, %122 : vector<16x128xf32>
    %124 = vector.broadcast %103 : vector<1x128xf32> to vector<16x128xf32>
    %125 = arith.addf %123, %124 : vector<16x128xf32>
    %c0_66 = arith.constant 0 : index
    %c0_67 = arith.constant 0 : index
    %c0_68 = arith.constant 0 : index
    %126 = vector.load %arg15[%c0_66, %c0_67, %c0_68] : memref<1x128x512xbf16, #tpu.memory_space<vmem>>, vector<1x128x512xbf16>
    %127 = vector.shape_cast %126 : vector<1x128x512xbf16> to vector<128x512xbf16>
    %128 = arith.truncf %125 : vector<16x128xf32> to vector<16x128xbf16>
    %cst_69 = arith.constant dense<0.000000e+00> : vector<16x512xf32>
    %129 = tpu.matmul %128, %127, %cst_69 {dimension_numbers = #tpu.dot_dimension_numbers<[1], [0], [0], [1], [0, 0, 1, 1], [], []>} : vector<16x128xbf16>, vector<128x512xbf16>, vector<16x512xf32> -> vector<16x512xf32>
    %c0_70 = arith.constant 0 : index
    %c0_71 = arith.constant 0 : index
    %c0_72 = arith.constant 0 : index
    %130 = vector.load %arg16[%c0_70, %c0_71, %c0_72] : memref<1x1x512xf32, #tpu.memory_space<vmem>>, vector<1x1x512xf32>
    %131 = vector.shape_cast %130 : vector<1x1x512xf32> to vector<1x512xf32>
    %132 = vector.broadcast %131 : vector<1x512xf32> to vector<16x512xf32>
    %133 = arith.addf %129, %132 : vector<16x512xf32>
    %cst_73 = arith.constant 5.000000e-01 : f32
    %134 = vector.broadcast %cst_73 : f32 to vector<16x512xf32>
    %135 = arith.mulf %134, %133 : vector<16x512xf32>
    %cst_74 = arith.constant 4.471500e-02 : f32
    %136 = vector.broadcast %cst_74 : f32 to vector<16x512xf32>
    %137 = arith.mulf %136, %133 : vector<16x512xf32>
    %138 = arith.mulf %137, %133 : vector<16x512xf32>
    %139 = arith.mulf %138, %133 : vector<16x512xf32>
    %140 = arith.addf %133, %139 : vector<16x512xf32>
    %cst_75 = arith.constant 0.797884583 : f32
    %141 = vector.broadcast %cst_75 : f32 to vector<16x512xf32>
    %142 = arith.mulf %141, %140 : vector<16x512xf32>
    %143 = math.tanh %142 : vector<16x512xf32>
    %cst_76 = arith.constant 1.000000e+00 : f32
    %144 = vector.broadcast %cst_76 : f32 to vector<16x512xf32>
    %145 = arith.addf %144, %143 : vector<16x512xf32>
    %146 = arith.mulf %135, %145 : vector<16x512xf32>
    %c0_77 = arith.constant 0 : index
    %c0_78 = arith.constant 0 : index
    %c0_79 = arith.constant 0 : index
    %147 = vector.load %arg17[%c0_77, %c0_78, %c0_79] : memref<1x512x128xbf16, #tpu.memory_space<vmem>>, vector<1x512x128xbf16>
    %148 = vector.shape_cast %147 : vector<1x512x128xbf16> to vector<512x128xbf16>
    %149 = arith.truncf %146 : vector<16x512xf32> to vector<16x512xbf16>
    %cst_80 = arith.constant dense<0.000000e+00> : vector<16x128xf32>
    %150 = tpu.matmul %149, %148, %cst_80 {dimension_numbers = #tpu.dot_dimension_numbers<[1], [0], [0], [1], [0, 0, 1, 1], [], []>} : vector<16x512xbf16>, vector<512x128xbf16>, vector<16x128xf32> -> vector<16x128xf32>
    %c0_81 = arith.constant 0 : index
    %c0_82 = arith.constant 0 : index
    %c0_83 = arith.constant 0 : index
    %151 = vector.load %arg18[%c0_81, %c0_82, %c0_83] : memref<1x1x128xf32, #tpu.memory_space<vmem>>, vector<1x1x128xf32>
    %152 = vector.shape_cast %151 : vector<1x1x128xf32> to vector<1x128xf32>
    %153 = vector.broadcast %152 : vector<1x128xf32> to vector<16x128xf32>
    %154 = arith.addf %150, %153 : vector<16x128xf32>
    %155 = arith.addf %154, %125 : vector<16x128xf32>
    %c0_84 = arith.constant 0 : index
    %c0_85 = arith.constant 0 : index
    %c0_86 = arith.constant 0 : index
    %156 = vector.load %arg19[%c0_84, %c0_85, %c0_86] : memref<1x1x128xf32, #tpu.memory_space<vmem>>, vector<1x1x128xf32>
    %157 = vector.shape_cast %156 : vector<1x1x128xf32> to vector<1x128xf32>
    %c0_87 = arith.constant 0 : index
    %c0_88 = arith.constant 0 : index
    %c0_89 = arith.constant 0 : index
    %158 = vector.load %arg20[%c0_87, %c0_88, %c0_89] : memref<1x1x128xf32, #tpu.memory_space<vmem>>, vector<1x1x128xf32>
    %159 = vector.shape_cast %158 : vector<1x1x128xf32> to vector<1x128xf32>
    %cst_90 = arith.constant dense<0.000000e+00> : vector<16xf32>
    %160 = vector.multi_reduction <add>, %155, %cst_90 [1] : vector<16x128xf32> to vector<16xf32>
    %161 = vector.shape_cast %160 : vector<16xf32> to vector<16x1xf32>
    %cst_91 = arith.constant 1.280000e+02 : f32
    %162 = vector.broadcast %cst_91 : f32 to vector<16x1xf32>
    %163 = arith.divf %161, %162 : vector<16x1xf32>
    %164 = vector.broadcast %163 : vector<16x1xf32> to vector<16x128xf32>
    %165 = arith.subf %155, %164 : vector<16x128xf32>
    %166 = arith.mulf %165, %165 : vector<16x128xf32>
    %cst_92 = arith.constant dense<0.000000e+00> : vector<16xf32>
    %167 = vector.multi_reduction <add>, %166, %cst_92 [1] : vector<16x128xf32> to vector<16xf32>
    %168 = vector.shape_cast %167 : vector<16xf32> to vector<16x1xf32>
    %cst_93 = arith.constant 1.280000e+02 : f32
    %169 = vector.broadcast %cst_93 : f32 to vector<16x1xf32>
    %170 = arith.divf %168, %169 : vector<16x1xf32>
    %171 = vector.broadcast %163 : vector<16x1xf32> to vector<16x128xf32>
    %172 = arith.subf %155, %171 : vector<16x128xf32>
    %cst_94 = arith.constant 9.99999996E-13 : f32
    %173 = vector.broadcast %cst_94 : f32 to vector<16x1xf32>
    %174 = arith.addf %170, %173 : vector<16x1xf32>
    %175 = math.rsqrt %174 : vector<16x1xf32>
    %176 = vector.broadcast %175 : vector<16x1xf32> to vector<16x128xf32>
    %177 = arith.mulf %172, %176 : vector<16x128xf32>
    %178 = vector.broadcast %157 : vector<1x128xf32> to vector<16x128xf32>
    %179 = arith.mulf %177, %178 : vector<16x128xf32>
    %180 = vector.broadcast %159 : vector<1x128xf32> to vector<16x128xf32>
    %181 = arith.addf %179, %180 : vector<16x128xf32>
    %c0_95 = arith.constant 0 : index
    %c0_96 = arith.constant 0 : index
    %182 = vector.load %arg26[%c0_95, %c0_96] : memref<16x128xf32, #tpu.memory_space<vmem>>, vector<16x128xf32>
    tpu.vector_store %arg26[%c0_95, %c0_96], %181 {strides = array<i32>} : memref<16x128xf32, #tpu.memory_space<vmem>>, vector<16x128xf32>,
    %c1_i32 = arith.constant 1 : i32
    %183 = arith.cmpi eq, %arg0, %c1_i32 : i32
    %184 = arith.extui %183 : i1 to i32
    %c0_i32_97 = arith.constant 0 : i32
    %185 = arith.cmpi ne, %184, %c0_i32_97 : i32
    scf.if %185 {
      %186 = vector.extract_strided_slice %181 {offsets = [0, 0], sizes = [1, 128], strides = [1, 1]} : vector<16x128xf32> to vector<1x128xf32>
      %187 = vector.extract_strided_slice %181 {offsets = [8, 0], sizes = [1, 128], strides = [1, 1]} : vector<16x128xf32> to vector<1x128xf32>
      %188 = tpu.concatenate %186, %187 in 0 : vector<1x128xf32>, vector<1x128xf32> -> vector<2x128xf32>
      %c0_98 = arith.constant 0 : index
      %c0_99 = arith.constant 0 : index
      %189 = vector.load %arg21[%c0_98, %c0_99] : memref<128x128xbf16, #tpu.memory_space<vmem>>, vector<128x128xbf16>
      %190 = arith.truncf %188 : vector<2x128xf32> to vector<2x128xbf16>
      %cst_100 = arith.constant dense<0.000000e+00> : vector<2x128xf32>
      %191 = tpu.matmul %190, %189, %cst_100 {dimension_numbers = #tpu.dot_dimension_numbers<[1], [0], [0], [1], [0, 0, 1, 1], [], []>} : vector<2x128xbf16>, vector<128x128xbf16>, vector<2x128xf32> -> vector<2x128xf32>
      %c0_101 = arith.constant 0 : index
      %c0_102 = arith.constant 0 : index
      %192 = vector.load %arg22[%c0_101, %c0_102] : memref<1x128xf32, #tpu.memory_space<vmem>>, vector<1x128xf32>
      %193 = vector.broadcast %192 : vector<1x128xf32> to vector<2x128xf32>
      %194 = arith.addf %191, %193 : vector<2x128xf32>
      %195 = math.tanh %194 : vector<2x128xf32>
      %c0_103 = arith.constant 0 : index
      %c0_104 = arith.constant 0 : index
      %196 = vector.load %arg23[%c0_103, %c0_104] : memref<128x128xbf16, #tpu.memory_space<vmem>>, vector<128x128xbf16>
      %197 = arith.truncf %195 : vector<2x128xf32> to vector<2x128xbf16>
      %cst_105 = arith.constant dense<0.000000e+00> : vector<2x128xf32>
      %198 = tpu.matmul %197, %196, %cst_105 {dimension_numbers = #tpu.dot_dimension_numbers<[1], [0], [0], [1], [0, 0, 1, 1], [], []>} : vector<2x128xbf16>, vector<128x128xbf16>, vector<2x128xf32> -> vector<2x128xf32>
      %c0_106 = arith.constant 0 : index
      %c0_107 = arith.constant 0 : index
      %199 = vector.load %arg24[%c0_106, %c0_107] : memref<1x128xf32, #tpu.memory_space<vmem>>, vector<1x128xf32>
      %200 = vector.broadcast %199 : vector<1x128xf32> to vector<2x128xf32>
      %201 = arith.addf %198, %200 : vector<2x128xf32>
      %c0_108 = arith.constant 0 : index
      %c0_109 = arith.constant 0 : index
      %202 = vector.load %arg25[%c0_108, %c0_109] : memref<2x128xf32, #tpu.memory_space<vmem>>, vector<2x128xf32>
      tpu.vector_store %arg25[%c0_108, %c0_109], %201 {strides = array<i32>} : memref<2x128xf32, #tpu.memory_space<vmem>>, vector<2x128xf32>,
    } else {
    }
    return
  }
  func.func @transform_0(%arg0: i32) -> (i32, i32) {
    %c0_i32 = arith.constant 0 : i32
    %c0_i32_0 = arith.constant 0 : i32
    %c0_i32_1 = arith.constant 0 : i32
    return %c0_i32, %c0_i32_0 : i32, i32
  }
  func.func @transform_1(%arg0: i32) -> (i32, i32, i32) {
    %c0_i32 = arith.constant 0 : i32
    %c0_i32_0 = arith.constant 0 : i32
    %c0_i32_1 = arith.constant 0 : i32
    %c0_i32_2 = arith.constant 0 : i32
    return %c0_i32, %c0_i32_0, %c0_i32_1 : i32, i32, i32
  }
  func.func @transform_2(%arg0: i32) -> (i32, i32) {
    %c0_i32 = arith.constant 0 : i32
    %c0_i32_0 = arith.constant 0 : i32
    %c0_i32_1 = arith.constant 0 : i32
    return %c0_i32, %c0_i32_0 : i32, i32
  }
  func.func @transform_3(%arg0: i32) -> (i32, i32) {
    %c0_i32 = arith.constant 0 : i32
    %c0_i32_0 = arith.constant 0 : i32
    %c0_i32_1 = arith.constant 0 : i32
    return %c0_i32, %c0_i32_0 : i32, i32
  }
  func.func @transform_4(%arg0: i32) -> (i32, i32, i32, i32) {
    %c0_i32 = arith.constant 0 : i32
    %c0_i32_0 = arith.constant 0 : i32
    %c0_i32_1 = arith.constant 0 : i32
    %c0_i32_2 = arith.constant 0 : i32
    return %arg0, %c0_i32, %c0_i32_0, %c0_i32_1 : i32, i32, i32, i32
  }
  func.func @transform_5(%arg0: i32) -> (i32, i32, i32, i32) {
    %c0_i32 = arith.constant 0 : i32
    %c0_i32_0 = arith.constant 0 : i32
    %c0_i32_1 = arith.constant 0 : i32
    %c0_i32_2 = arith.constant 0 : i32
    return %arg0, %c0_i32, %c0_i32_0, %c0_i32_1 : i32, i32, i32, i32
  }
  func.func @transform_6(%arg0: i32) -> (i32, i32, i32, i32) {
    %c0_i32 = arith.constant 0 : i32
    %c0_i32_0 = arith.constant 0 : i32
    %c0_i32_1 = arith.constant 0 : i32
    %c0_i32_2 = arith.constant 0 : i32
    return %arg0, %c0_i32, %c0_i32_0, %c0_i32_1 : i32, i32, i32, i32
  }
  func.func @transform_7(%arg0: i32) -> (i32, i32, i32, i32) {
    %c0_i32 = arith.constant 0 : i32
    %c0_i32_0 = arith.constant 0 : i32
    %c0_i32_1 = arith.constant 0 : i32
    %c0_i32_2 = arith.constant 0 : i32
    return %arg0, %c0_i32, %c0_i32_0, %c0_i32_1 : i32, i32, i32, i32
  }
  func.func @transform_8(%arg0: i32) -> (i32, i32, i32, i32) {
    %c0_i32 = arith.constant 0 : i32
    %c0_i32_0 = arith.constant 0 : i32
    %c0_i32_1 = arith.constant 0 : i32
    %c0_i32_2 = arith.constant 0 : i32
    return %arg0, %c0_i32, %c0_i32_0, %c0_i32_1 : i32, i32, i32, i32
  }
  func.func @transform_9(%arg0: i32) -> (i32, i32, i32, i32) {
    %c0_i32 = arith.constant 0 : i32
    %c0_i32_0 = arith.constant 0 : i32
    %c0_i32_1 = arith.constant 0 : i32
    %c0_i32_2 = arith.constant 0 : i32
    return %arg0, %c0_i32, %c0_i32_0, %c0_i32_1 : i32, i32, i32, i32
  }
  func.func @transform_10(%arg0: i32) -> (i32, i32, i32, i32) {
    %c0_i32 = arith.constant 0 : i32
    %c0_i32_0 = arith.constant 0 : i32
    %c0_i32_1 = arith.constant 0 : i32
    %c0_i32_2 = arith.constant 0 : i32
    return %arg0, %c0_i32, %c0_i32_0, %c0_i32_1 : i32, i32, i32, i32
  }
  func.func @transform_11(%arg0: i32) -> (i32, i32, i32) {
    %c0_i32 = arith.constant 0 : i32
    %c0_i32_0 = arith.constant 0 : i32
    %c0_i32_1 = arith.constant 0 : i32
    return %arg0, %c0_i32, %c0_i32_0 : i32, i32, i32
  }
  func.func @transform_12(%arg0: i32) -> (i32, i32, i32) {
    %c0_i32 = arith.constant 0 : i32
    %c0_i32_0 = arith.constant 0 : i32
    %c0_i32_1 = arith.constant 0 : i32
    return %arg0, %c0_i32, %c0_i32_0 : i32, i32, i32
  }
  func.func @transform_13(%arg0: i32) -> (i32, i32, i32) {
    %c0_i32 = arith.constant 0 : i32
    %c0_i32_0 = arith.constant 0 : i32
    %c0_i32_1 = arith.constant 0 : i32
    return %arg0, %c0_i32, %c0_i32_0 : i32, i32, i32
  }
  func.func @transform_14(%arg0: i32) -> (i32, i32, i32) {
    %c0_i32 = arith.constant 0 : i32
    %c0_i32_0 = arith.constant 0 : i32
    %c0_i32_1 = arith.constant 0 : i32
    return %arg0, %c0_i32, %c0_i32_0 : i32, i32, i32
  }
  func.func @transform_15(%arg0: i32) -> (i32, i32, i32) {
    %c0_i32 = arith.constant 0 : i32
    %c0_i32_0 = arith.constant 0 : i32
    %c0_i32_1 = arith.constant 0 : i32
    return %arg0, %c0_i32, %c0_i32_0 : i32, i32, i32
  }
  func.func @transform_16(%arg0: i32) -> (i32, i32, i32) {
    %c0_i32 = arith.constant 0 : i32
    %c0_i32_0 = arith.constant 0 : i32
    %c0_i32_1 = arith.constant 0 : i32
    return %arg0, %c0_i32, %c0_i32_0 : i32, i32, i32
  }
  func.func @transform_17(%arg0: i32) -> (i32, i32, i32) {
    %c0_i32 = arith.constant 0 : i32
    %c0_i32_0 = arith.constant 0 : i32
    %c0_i32_1 = arith.constant 0 : i32
    return %arg0, %c0_i32, %c0_i32_0 : i32, i32, i32
  }
  func.func @transform_18(%arg0: i32) -> (i32, i32, i32) {
    %c0_i32 = arith.constant 0 : i32
    %c0_i32_0 = arith.constant 0 : i32
    %c0_i32_1 = arith.constant 0 : i32
    return %arg0, %c0_i32, %c0_i32_0 : i32, i32, i32
  }
  func.func @transform_19(%arg0: i32) -> (i32, i32, i32) {
    %c0_i32 = arith.constant 0 : i32
    %c0_i32_0 = arith.constant 0 : i32
    %c0_i32_1 = arith.constant 0 : i32
    return %arg0, %c0_i32, %c0_i32_0 : i32, i32, i32
  }
  func.func @transform_20(%arg0: i32) -> (i32, i32) {
    %c0_i32 = arith.constant 0 : i32
    %c0_i32_0 = arith.constant 0 : i32
    %c0_i32_1 = arith.constant 0 : i32
    return %c0_i32, %c0_i32_0 : i32, i32
  }
  func.func @transform_21(%arg0: i32) -> (i32, i32) {
    %c0_i32 = arith.constant 0 : i32
    %c0_i32_0 = arith.constant 0 : i32
    %c0_i32_1 = arith.constant 0 : i32
    return %c0_i32, %c0_i32_0 : i32, i32
  }
  func.func @transform_22(%arg0: i32) -> (i32, i32) {
    %c0_i32 = arith.constant 0 : i32
    %c0_i32_0 = arith.constant 0 : i32
    %c0_i32_1 = arith.constant 0 : i32
    return %c0_i32, %c0_i32_0 : i32, i32
  }
  func.func @transform_23(%arg0: i32) -> (i32, i32) {
    %c0_i32 = arith.constant 0 : i32
    %c0_i32_0 = arith.constant 0 : i32
    %c0_i32_1 = arith.constant 0 : i32
    return %c0_i32, %c0_i32_0 : i32, i32
  }
  func.func @transform_24(%arg0: i32) -> (i32, i32) {
    %c0_i32 = arith.constant 0 : i32
    %c0_i32_0 = arith.constant 0 : i32
    %c0_i32_1 = arith.constant 0 : i32
    return %c0_i32, %c0_i32_0 : i32, i32
  }
}

</mosaic_0001>

<llo_original>
// kernel: bert_classifier_forward.1
$region0: #{bert_classifier_forward.1}
  #allocation0 [shape = 'u32[]', space=smem, size = 0x4, offset = 0x4, fixed_abs, tag = 'smem constant byte address 0x4 - core index']
  #allocation1 [shape = 'u32[144,128]{1,0:T(1,128)}', space=vmem, size = 0x12000, scoped, tag = 'internal scratch']
  #allocation2 [shape = 'f32[16,128]{1,0:T(8,128)}', space=vmem, size = 0x2000, scoped, tag = 'scratch operand']
  %s0 = inlined_call_operand.vmem [shape: f32[16,128], index: 0, kind: input, shape index: {}]
  %s1 = inlined_call_operand.vmem [shape: f32[2,1,8], index: 1, kind: input, shape index: {}]
  %s2 = inlined_call_operand.vmem [shape: f32[1,128], index: 2, kind: input, shape index: {}]
  %s3 = inlined_call_operand.vmem [shape: f32[1,128], index: 3, kind: input, shape index: {}]
  %s4 = inlined_call_operand.vmem [shape: bf16[2,4,128,32], index: 4, kind: input, shape index: {}]
  %s5 = inlined_call_operand.vmem [shape: f32[2,4,1,32], index: 5, kind: input, shape index: {}]
  %s6 = inlined_call_operand.vmem [shape: bf16[2,4,128,32], index: 6, kind: input, shape index: {}]
  %s7 = inlined_call_operand.vmem [shape: f32[2,4,1,32], index: 7, kind: input, shape index: {}]
  %s8 = inlined_call_operand.vmem [shape: bf16[2,4,128,32], index: 8, kind: input, shape index: {}]
  %s9 = inlined_call_operand.vmem [shape: f32[2,4,1,32], index: 9, kind: input, shape index: {}]
  %s10 = inlined_call_operand.vmem [shape: bf16[2,4,32,128], index: 10, kind: input, shape index: {}]
  %s11 = inlined_call_operand.vmem [shape: f32[2,1,128], index: 11, kind: input, shape index: {}]
  %s12 = inlined_call_operand.vmem [shape: f32[2,1,128], index: 12, kind: input, shape index: {}]
  %s13 = inlined_call_operand.vmem [shape: f32[2,1,128], index: 13, kind: input, shape index: {}]
  %s14 = inlined_call_operand.vmem [shape: bf16[2,128,512], index: 14, kind: input, shape index: {}]
  %s15 = inlined_call_operand.vmem [shape: f32[2,1,512], index: 15, kind: input, shape index: {}]
  %s16 = inlined_call_operand.vmem [shape: bf16[2,512,128], index: 16, kind: input, shape index: {}]
  %s17 = inlined_call_operand.vmem [shape: f32[2,1,128], index: 17, kind: input, shape index: {}]
  %s18 = inlined_call_operand.vmem [shape: f32[2,1,128], index: 18, kind: input, shape index: {}]
  %s19 = inlined_call_operand.vmem [shape: f32[2,1,128], index: 19, kind: input, shape index: {}]
  %s20 = inlined_call_operand.vmem [shape: bf16[128,128], index: 20, kind: input, shape index: {}]
  %s21 = inlined_call_operand.vmem [shape: f32[1,128], index: 21, kind: input, shape index: {}]
  %s22 = inlined_call_operand.vmem [shape: bf16[128,128], index: 22, kind: input, shape index: {}]
  %s23 = inlined_call_operand.vmem [shape: f32[1,128], index: 23, kind: input, shape index: {}]
  %s24 = inlined_call_operand.hbm [shape: f32[2,128], index: 24, kind: output, shape index: {}]
  %s25 = sld [smem:[#allocation0]]
  $region137: #{bert_classifier_forward.1} parent=0
    _
  %s27 = ssub.s32 1, %s25
  %s28 = scalar_select 0, %s27, %s25
  $region1: #{bert_classifier_forward.1} parent=0
    #allocation3 [shape = 'u8[1024]{0}', space=vmem, size = 0x400, scoped, tag = 'output window, operand 0, single buffered']
    #allocation4 [shape = 's32[2]{0}', space=sflag, size = 0x8, scoped, tag = 'scoped memory for bert_classifier_forward.1']
    %29 = vsyncpa [#allocation4], 0
    loop: start=0, step=1, limit=4
    $region2: #{bert_classifier_forward.1} parent=1 // loop_pre_header
      _
    $region3: #{bert_classifier_forward.1} parent=1 // loop_header
      %s31 = sphi 0, %s35
      %p32 = scmp.ge.s32.totalorder %s31, 4
      %s39 = sphi 0, %s39
      %s41 = sphi 0, %s39
      %s42 = sphi 0, %s41
      %s56 = sphi 0, %s42
      %s60 = sphi 0, %s60
      %s62 = sphi 0, %s60
      %s63 = sphi 0, %s62
      %s77 = sphi 0, %s63
      %s81 = sphi 0, %s81
      %s83 = sphi 0, %s81
      %s84 = sphi 0, %s83
      %s98 = sphi 0, %s84
      %s102 = sphi 0, %s102
      %s104 = sphi 0, %s102
      %s105 = sphi 0, %s104
      %s119 = sphi 0, %s105
      %s125 = sphi 0, %s127
      %s128 = sphi 0, %s125
      %s129 = sphi 0, %s128
      %s145 = sphi 0, %s129
      %s151 = sphi 0, %s153
      %s154 = sphi 0, %s151
      %s155 = sphi 0, %s154
      %s171 = sphi 0, %s155
      %s177 = sphi 0, %s179
      %s180 = sphi 0, %s177
      %s181 = sphi 0, %s180
      %s197 = sphi 0, %s181
      %s203 = sphi 0, %s205
      %s206 = sphi 0, %s203
      %s207 = sphi 0, %s206
      %s223 = sphi 0, %s207
      %s229 = sphi 0, %s231
      %s232 = sphi 0, %s229
      %s233 = sphi 0, %s232
      %s249 = sphi 0, %s233
      %s255 = sphi 0, %s257
      %s258 = sphi 0, %s255
      %s259 = sphi 0, %s258
      %s275 = sphi 0, %s259
      %s281 = sphi 0, %s283
      %s284 = sphi 0, %s281
      %s285 = sphi 0, %s284
      %s301 = sphi 0, %s285
      %s307 = sphi 0, %s309
      %s310 = sphi 0, %s307
      %s311 = sphi 0, %s310
      %s327 = sphi 0, %s311
      %s333 = sphi 0, %s335
      %s336 = sphi 0, %s333
      %s337 = sphi 0, %s336
      %s353 = sphi 0, %s337
      %s359 = sphi 0, %s361
      %s362 = sphi 0, %s359
      %s363 = sphi 0, %s362
      %s379 = sphi 0, %s363
      %s385 = sphi 0, %s387
      %s388 = sphi 0, %s385
      %s389 = sphi 0, %s388
      %s405 = sphi 0, %s389
      %s411 = sphi 0, %s413
      %s414 = sphi 0, %s411
      %s415 = sphi 0, %s414
      %s431 = sphi 0, %s415
      %s437 = sphi 0, %s439
      %s440 = sphi 0, %s437
      %s441 = sphi 0, %s440
      %s457 = sphi 0, %s441
      %s463 = sphi 0, %s465
      %s466 = sphi 0, %s463
      %s467 = sphi 0, %s466
      %s483 = sphi 0, %s467
      %s489 = sphi 0, %s491
      %s492 = sphi 0, %s489
      %s493 = sphi 0, %s492
      %s509 = sphi 0, %s493
      %s515 = sphi 0, %s517
      %s518 = sphi 0, %s515
      %s519 = sphi 0, %s518
      %s535 = sphi 0, %s519
      %s539 = sphi 0, %s539
      %s541 = sphi 0, %s539
      %s542 = sphi 0, %s541
      %s556 = sphi 0, %s542
      %s560 = sphi 0, %s560
      %s562 = sphi 0, %s560
      %s563 = sphi 0, %s562
      %s577 = sphi 0, %s563
      %s581 = sphi 0, %s581
      %s583 = sphi 0, %s581
      %s584 = sphi 0, %s583
      %s598 = sphi 0, %s584
      %s602 = sphi 0, %s602
      %s604 = sphi 0, %s602
      %s605 = sphi 0, %s604
      %s619 = sphi 0, %s605
      %s623 = sphi 0, %s623
      %s625 = sphi 0, %s623
      %s626 = sphi 0, %s625
      %s640 = sphi 0, %s626
    $region4: #{bert_classifier_forward.1} parent=1 // loop_header_branch
      %34 = sbr.rel (%p32) target = $region8
    $region5: #{bert_classifier_forward.1} parent=1 // loop_body
      %s36 = ssub.s32 %s31, 1
      %s37 = ssub.s32 %s31, 2
      %s38 = sadd.s32 %s31, 1
      %s40 = sadd.s32 %s39, 1
      %p43 = scmp.eq.s32.totalorder %s31, 1
      %p44 = scmp.ne.s32.totalorder %s39, %s41
      %p45 = scmp.eq.s32.totalorder %s31, 0
      %p46 = por %p44, %p45
      %p47 = scmp.ne.s32.totalorder %s39, %s41
      %p48 = scmp.eq.s32.totalorder %s36, 1
      %p49 = por %p47, %p48
      %p50 = scmp.ne.s32.totalorder %s41, %s42
      %p51 = scmp.eq.s32.totalorder %s36, 0
      %p52 = por %p50, %p51
      %p53 = scmp.ne.s32.totalorder %s41, %s42
      %p54 = scmp.eq.s32.totalorder %s37, 1
      %p55 = por %p53, %p54
      %p57 = scmp.ne.s32.totalorder %s42, %s56
      %p58 = scmp.eq.s32.totalorder %s37, 0
      %p59 = por %p57, %p58
      %s61 = sadd.s32 %s60, 1
      %p64 = scmp.eq.s32.totalorder %s31, 1
      %p65 = scmp.ne.s32.totalorder %s60, %s62
      %p66 = scmp.eq.s32.totalorder %s31, 0
      %p67 = por %p65, %p66
      %p68 = scmp.ne.s32.totalorder %s60, %s62
      %p69 = scmp.eq.s32.totalorder %s36, 1
      %p70 = por %p68, %p69
      %p71 = scmp.ne.s32.totalorder %s62, %s63
      %p72 = scmp.eq.s32.totalorder %s36, 0
      %p73 = por %p71, %p72
      %p74 = scmp.ne.s32.totalorder %s62, %s63
      %p75 = scmp.eq.s32.totalorder %s37, 1
      %p76 = por %p74, %p75
      %p78 = scmp.ne.s32.totalorder %s63, %s77
      %p79 = scmp.eq.s32.totalorder %s37, 0
      %p80 = por %p78, %p79
      %s82 = sadd.s32 %s81, 1
      %p85 = scmp.eq.s32.totalorder %s31, 1
      %p86 = scmp.ne.s32.totalorder %s81, %s83
      %p87 = scmp.eq.s32.totalorder %s31, 0
      %p88 = por %p86, %p87
      %p89 = scmp.ne.s32.totalorder %s81, %s83
      %p90 = scmp.eq.s32.totalorder %s36, 1
      %p91 = por %p89, %p90
      %p92 = scmp.ne.s32.totalorder %s83, %s84
      %p93 = scmp.eq.s32.totalorder %s36, 0
      %p94 = por %p92, %p93
      %p95 = scmp.ne.s32.totalorder %s83, %s84
      %p96 = scmp.eq.s32.totalorder %s37, 1
      %p97 = por %p95, %p96
      %p99 = scmp.ne.s32.totalorder %s84, %s98
      %p100 = scmp.eq.s32.totalorder %s37, 0
      %p101 = por %p99, %p100
      %s103 = sadd.s32 %s102, 1
      %p106 = scmp.eq.s32.totalorder %s31, 1
      %p107 = scmp.ne.s32.totalorder %s102, %s104
      %p108 = scmp.eq.s32.totalorder %s31, 0
      %p109 = por %p107, %p108
      %p110 = scmp.ne.s32.totalorder %s102, %s104
      %p111 = scmp.eq.s32.totalorder %s36, 1
      %p112 = por %p110, %p111
      %p113 = scmp.ne.s32.totalorder %s104, %s105
      %p114 = scmp.eq.s32.totalorder %s36, 0
      %p115 = por %p113, %p114
      %p116 = scmp.ne.s32.totalorder %s104, %s105
      %p117 = scmp.eq.s32.totalorder %s37, 1
      %p118 = por %p116, %p117
      %p120 = scmp.ne.s32.totalorder %s105, %s119
      %p121 = scmp.eq.s32.totalorder %s37, 0
      %p122 = por %p120, %p121
      %s123 = ssub.s32 %s31, %s38
      %p124 = scmp.eq.s32.totalorder %s123, 0
      %s126 = sadd.s32 %s125, 1
      %s127 = scalar_select %p124, %s125, %s126
      %p130 = pneg %p124
      %p131 = scmp.eq.s32.totalorder %s31, 1
      %p132 = por %p130, %p131
      %p133 = scmp.ne.s32.totalorder %s125, %s128
      %p134 = scmp.eq.s32.totalorder %s31, 0
      %p135 = por %p133, %p134
      %p136 = scmp.ne.s32.totalorder %s125, %s128
      %p137 = scmp.eq.s32.totalorder %s36, 1
      %p138 = por %p136, %p137
      %p139 = scmp.ne.s32.totalorder %s128, %s129
      %p140 = scmp.eq.s32.totalorder %s36, 0
      %p141 = por %p139, %p140
      %p142 = scmp.ne.s32.totalorder %s128, %s129
      %p143 = scmp.eq.s32.totalorder %s37, 1
      %p144 = por %p142, %p143
      %p146 = scmp.ne.s32.totalorder %s129, %s145
      %p147 = scmp.eq.s32.totalorder %s37, 0
      %p148 = por %p146, %p147
      %s149 = ssub.s32 %s31, %s38
      %p150 = scmp.eq.s32.totalorder %s149, 0
      %s152 = sadd.s32 %s151, 1
      %s153 = scalar_select %p150, %s151, %s152
      %p156 = pneg %p150
      %p157 = scmp.eq.s32.totalorder %s31, 1
      %p158 = por %p156, %p157
      %p159 = scmp.ne.s32.totalorder %s151, %s154
      %p160 = scmp.eq.s32.totalorder %s31, 0
      %p161 = por %p159, %p160
      %p162 = scmp.ne.s32.totalorder %s151, %s154
      %p163 = scmp.eq.s32.totalorder %s36, 1
      %p164 = por %p162, %p163
      %p165 = scmp.ne.s32.totalorder %s154, %s155
      %p166 = scmp.eq.s32.totalorder %s36, 0
      %p167 = por %p165, %p166
      %p168 = scmp.ne.s32.totalorder %s154, %s155
      %p169 = scmp.eq.s32.totalorder %s37, 1
      %p170 = por %p168, %p169
      %p172 = scmp.ne.s32.totalorder %s155, %s171
      %p173 = scmp.eq.s32.totalorder %s37, 0
      %p174 = por %p172, %p173
      %s175 = ssub.s32 %s31, %s38
      %p176 = scmp.eq.s32.totalorder %s175, 0
      %s178 = sadd.s32 %s177, 1
      %s179 = scalar_select %p176, %s177, %s178
      %p182 = pneg %p176
      %p183 = scmp.eq.s32.totalorder %s31, 1
      %p184 = por %p182, %p183
      %p185 = scmp.ne.s32.totalorder %s177, %s180
      %p186 = scmp.eq.s32.totalorder %s31, 0
      %p187 = por %p185, %p186
      %p188 = scmp.ne.s32.totalorder %s177, %s180
      %p189 = scmp.eq.s32.totalorder %s36, 1
      %p190 = por %p188, %p189
      %p191 = scmp.ne.s32.totalorder %s180, %s181
      %p192 = scmp.eq.s32.totalorder %s36, 0
      %p193 = por %p191, %p192
      %p194 = scmp.ne.s32.totalorder %s180, %s181
      %p195 = scmp.eq.s32.totalorder %s37, 1
      %p196 = por %p194, %p195
      %p198 = scmp.ne.s32.totalorder %s181, %s197
      %p199 = scmp.eq.s32.totalorder %s37, 0
      %p200 = por %p198, %p199
      %s201 = ssub.s32 %s31, %s38
      %p202 = scmp.eq.s32.totalorder %s201, 0
      %s204 = sadd.s32 %s203, 1
      %s205 = scalar_select %p202, %s203, %s204
      %p208 = pneg %p202
      %p209 = scmp.eq.s32.totalorder %s31, 1
      %p210 = por %p208, %p209
      %p211 = scmp.ne.s32.totalorder %s203, %s206
      %p212 = scmp.eq.s32.totalorder %s31, 0
      %p213 = por %p211, %p212
      %p214 = scmp.ne.s32.totalorder %s203, %s206
      %p215 = scmp.eq.s32.totalorder %s36, 1
      %p216 = por %p214, %p215
      %p217 = scmp.ne.s32.totalorder %s206, %s207
      %p218 = scmp.eq.s32.totalorder %s36, 0
      %p219 = por %p217, %p218
      %p220 = scmp.ne.s32.totalorder %s206, %s207
      %p221 = scmp.eq.s32.totalorder %s37, 1
      %p222 = por %p220, %p221
      %p224 = scmp.ne.s32.totalorder %s207, %s223
      %p225 = scmp.eq.s32.totalorder %s37, 0
      %p226 = por %p224, %p225
      %s227 = ssub.s32 %s31, %s38
      %p228 = scmp.eq.s32.totalorder %s227, 0
      %s230 = sadd.s32 %s229, 1
      %s231 = scalar_select %p228, %s229, %s230
      %p234 = pneg %p228
      %p235 = scmp.eq.s32.totalorder %s31, 1
      %p236 = por %p234, %p235
      %p237 = scmp.ne.s32.totalorder %s229, %s232
      %p238 = scmp.eq.s32.totalorder %s31, 0
      %p239 = por %p237, %p238
      %p240 = scmp.ne.s32.totalorder %s229, %s232
      %p241 = scmp.eq.s32.totalorder %s36, 1
      %p242 = por %p240, %p241
      %p243 = scmp.ne.s32.totalorder %s232, %s233
      %p244 = scmp.eq.s32.totalorder %s36, 0
      %p245 = por %p243, %p244
      %p246 = scmp.ne.s32.totalorder %s232, %s233
      %p247 = scmp.eq.s32.totalorder %s37, 1
      %p248 = por %p246, %p247
      %p250 = scmp.ne.s32.totalorder %s233, %s249
      %p251 = scmp.eq.s32.totalorder %s37, 0
      %p252 = por %p250, %p251
      %s253 = ssub.s32 %s31, %s38
      %p254 = scmp.eq.s32.totalorder %s253, 0
      %s256 = sadd.s32 %s255, 1
      %s257 = scalar_select %p254, %s255, %s256
      %p260 = pneg %p254
      %p261 = scmp.eq.s32.totalorder %s31, 1
      %p262 = por %p260, %p261
      %p263 = scmp.ne.s32.totalorder %s255, %s258
      %p264 = scmp.eq.s32.totalorder %s31, 0
      %p265 = por %p263, %p264
      %p266 = scmp.ne.s32.totalorder %s255, %s258
      %p267 = scmp.eq.s32.totalorder %s36, 1
      %p268 = por %p266, %p267
      %p269 = scmp.ne.s32.totalorder %s258, %s259
      %p270 = scmp.eq.s32.totalorder %s36, 0
      %p271 = por %p269, %p270
      %p272 = scmp.ne.s32.totalorder %s258, %s259
      %p273 = scmp.eq.s32.totalorder %s37, 1
      %p274 = por %p272, %p273
      %p276 = scmp.ne.s32.totalorder %s259, %s275
      %p277 = scmp.eq.s32.totalorder %s37, 0
      %p278 = por %p276, %p277
      %s279 = ssub.s32 %s31, %s38
      %p280 = scmp.eq.s32.totalorder %s279, 0
      %s282 = sadd.s32 %s281, 1
      %s283 = scalar_select %p280, %s281, %s282
      %p286 = pneg %p280
      %p287 = scmp.eq.s32.totalorder %s31, 1
      %p288 = por %p286, %p287
      %p289 = scmp.ne.s32.totalorder %s281, %s284
      %p290 = scmp.eq.s32.totalorder %s31, 0
      %p291 = por %p289, %p290
      %p292 = scmp.ne.s32.totalorder %s281, %s284
      %p293 = scmp.eq.s32.totalorder %s36, 1
      %p294 = por %p292, %p293
      %p295 = scmp.ne.s32.totalorder %s284, %s285
      %p296 = scmp.eq.s32.totalorder %s36, 0
      %p297 = por %p295, %p296
      %p298 = scmp.ne.s32.totalorder %s284, %s285
      %p299 = scmp.eq.s32.totalorder %s37, 1
      %p300 = por %p298, %p299
      %p302 = scmp.ne.s32.totalorder %s285, %s301
      %p303 = scmp.eq.s32.totalorder %s37, 0
      %p304 = por %p302, %p303
      %s305 = ssub.s32 %s31, %s38
      %p306 = scmp.eq.s32.totalorder %s305, 0
      %s308 = sadd.s32 %s307, 1
      %s309 = scalar_select %p306, %s307, %s308
      %p312 = pneg %p306
      %p313 = scmp.eq.s32.totalorder %s31, 1
      %p314 = por %p312, %p313
      %p315 = scmp.ne.s32.totalorder %s307, %s310
      %p316 = scmp.eq.s32.totalorder %s31, 0
      %p317 = por %p315, %p316
      %p318 = scmp.ne.s32.totalorder %s307, %s310
      %p319 = scmp.eq.s32.totalorder %s36, 1
      %p320 = por %p318, %p319
      %p321 = scmp.ne.s32.totalorder %s310, %s311
      %p322 = scmp.eq.s32.totalorder %s36, 0
      %p323 = por %p321, %p322
      %p324 = scmp.ne.s32.totalorder %s310, %s311
      %p325 = scmp.eq.s32.totalorder %s37, 1
      %p326 = por %p324, %p325
      %p328 = scmp.ne.s32.totalorder %s311, %s327
      %p329 = scmp.eq.s32.totalorder %s37, 0
      %p330 = por %p328, %p329
      %s331 = ssub.s32 %s31, %s38
      %p332 = scmp.eq.s32.totalorder %s331, 0
      %s334 = sadd.s32 %s333, 1
      %s335 = scalar_select %p332, %s333, %s334
      %p338 = pneg %p332
      %p339 = scmp.eq.s32.totalorder %s31, 1
      %p340 = por %p338, %p339
      %p341 = scmp.ne.s32.totalorder %s333, %s336
      %p342 = scmp.eq.s32.totalorder %s31, 0
      %p343 = por %p341, %p342
      %p344 = scmp.ne.s32.totalorder %s333, %s336
      %p345 = scmp.eq.s32.totalorder %s36, 1
      %p346 = por %p344, %p345
      %p347 = scmp.ne.s32.totalorder %s336, %s337
      %p348 = scmp.eq.s32.totalorder %s36, 0
      %p349 = por %p347, %p348
      %p350 = scmp.ne.s32.totalorder %s336, %s337
      %p351 = scmp.eq.s32.totalorder %s37, 1
      %p352 = por %p350, %p351
      %p354 = scmp.ne.s32.totalorder %s337, %s353
      %p355 = scmp.eq.s32.totalorder %s37, 0
      %p356 = por %p354, %p355
      %s357 = ssub.s32 %s31, %s38
      %p358 = scmp.eq.s32.totalorder %s357, 0
      %s360 = sadd.s32 %s359, 1
      %s361 = scalar_select %p358, %s359, %s360
      %p364 = pneg %p358
      %p365 = scmp.eq.s32.totalorder %s31, 1
      %p366 = por %p364, %p365
      %p367 = scmp.ne.s32.totalorder %s359, %s362
      %p368 = scmp.eq.s32.totalorder %s31, 0
      %p369 = por %p367, %p368
      %p370 = scmp.ne.s32.totalorder %s359, %s362
      %p371 = scmp.eq.s32.totalorder %s36, 1
      %p372 = por %p370, %p371
      %p373 = scmp.ne.s32.totalorder %s362, %s363
      %p374 = scmp.eq.s32.totalorder %s36, 0
      %p375 = por %p373, %p374
      %p376 = scmp.ne.s32.totalorder %s362, %s363
      %p377 = scmp.eq.s32.totalorder %s37, 1
      %p378 = por %p376, %p377
      %p380 = scmp.ne.s32.totalorder %s363, %s379
      %p381 = scmp.eq.s32.totalorder %s37, 0
      %p382 = por %p380, %p381
      %s383 = ssub.s32 %s31, %s38
      %p384 = scmp.eq.s32.totalorder %s383, 0
      %s386 = sadd.s32 %s385, 1
      %s387 = scalar_select %p384, %s385, %s386
      %p390 = pneg %p384
      %p391 = scmp.eq.s32.totalorder %s31, 1
      %p392 = por %p390, %p391
      %p393 = scmp.ne.s32.totalorder %s385, %s388
      %p394 = scmp.eq.s32.totalorder %s31, 0
      %p395 = por %p393, %p394
      %p396 = scmp.ne.s32.totalorder %s385, %s388
      %p397 = scmp.eq.s32.totalorder %s36, 1
      %p398 = por %p396, %p397
      %p399 = scmp.ne.s32.totalorder %s388, %s389
      %p400 = scmp.eq.s32.totalorder %s36, 0
      %p401 = por %p399, %p400
      %p402 = scmp.ne.s32.totalorder %s388, %s389
      %p403 = scmp.eq.s32.totalorder %s37, 1
      %p404 = por %p402, %p403
      %p406 = scmp.ne.s32.totalorder %s389, %s405
      %p407 = scmp.eq.s32.totalorder %s37, 0
      %p408 = por %p406, %p407
      %s409 = ssub.s32 %s31, %s38
      %p410 = scmp.eq.s32.totalorder %s409, 0
      %s412 = sadd.s32 %s411, 1
      %s413 = scalar_select %p410, %s411, %s412
      %p416 = pneg %p410
      %p417 = scmp.eq.s32.totalorder %s31, 1
      %p418 = por %p416, %p417
      %p419 = scmp.ne.s32.totalorder %s411, %s414
      %p420 = scmp.eq.s32.totalorder %s31, 0
      %p421 = por %p419, %p420
      %p422 = scmp.ne.s32.totalorder %s411, %s414
      %p423 = scmp.eq.s32.totalorder %s36, 1
      %p424 = por %p422, %p423
      %p425 = scmp.ne.s32.totalorder %s414, %s415
      %p426 = scmp.eq.s32.totalorder %s36, 0
      %p427 = por %p425, %p426
      %p428 = scmp.ne.s32.totalorder %s414, %s415
      %p429 = scmp.eq.s32.totalorder %s37, 1
      %p430 = por %p428, %p429
      %p432 = scmp.ne.s32.totalorder %s415, %s431
      %p433 = scmp.eq.s32.totalorder %s37, 0
      %p434 = por %p432, %p433
      %s435 = ssub.s32 %s31, %s38
      %p436 = scmp.eq.s32.totalorder %s435, 0
      %s438 = sadd.s32 %s437, 1
      %s439 = scalar_select %p436, %s437, %s438
      %p442 = pneg %p436
      %p443 = scmp.eq.s32.totalorder %s31, 1
      %p444 = por %p442, %p443
      %p445 = scmp.ne.s32.totalorder %s437, %s440
      %p446 = scmp.eq.s32.totalorder %s31, 0
      %p447 = por %p445, %p446
      %p448 = scmp.ne.s32.totalorder %s437, %s440
      %p449 = scmp.eq.s32.totalorder %s36, 1
      %p450 = por %p448, %p449
      %p451 = scmp.ne.s32.totalorder %s440, %s441
      %p452 = scmp.eq.s32.totalorder %s36, 0
      %p453 = por %p451, %p452
      %p454 = scmp.ne.s32.totalorder %s440, %s441
      %p455 = scmp.eq.s32.totalorder %s37, 1
      %p456 = por %p454, %p455
      %p458 = scmp.ne.s32.totalorder %s441, %s457
      %p459 = scmp.eq.s32.totalorder %s37, 0
      %p460 = por %p458, %p459
      %s461 = ssub.s32 %s31, %s38
      %p462 = scmp.eq.s32.totalorder %s461, 0
      %s464 = sadd.s32 %s463, 1
      %s465 = scalar_select %p462, %s463, %s464
      %p468 = pneg %p462
      %p469 = scmp.eq.s32.totalorder %s31, 1
      %p470 = por %p468, %p469
      %p471 = scmp.ne.s32.totalorder %s463, %s466
      %p472 = scmp.eq.s32.totalorder %s31, 0
      %p473 = por %p471, %p472
      %p474 = scmp.ne.s32.totalorder %s463, %s466
      %p475 = scmp.eq.s32.totalorder %s36, 1
      %p476 = por %p474, %p475
      %p477 = scmp.ne.s32.totalorder %s466, %s467
      %p478 = scmp.eq.s32.totalorder %s36, 0
      %p479 = por %p477, %p478
      %p480 = scmp.ne.s32.totalorder %s466, %s467
      %p481 = scmp.eq.s32.totalorder %s37, 1
      %p482 = por %p480, %p481
      %p484 = scmp.ne.s32.totalorder %s467, %s483
      %p485 = scmp.eq.s32.totalorder %s37, 0
      %p486 = por %p484, %p485
      %s487 = ssub.s32 %s31, %s38
      %p488 = scmp.eq.s32.totalorder %s487, 0
      %s490 = sadd.s32 %s489, 1
      %s491 = scalar_select %p488, %s489, %s490
      %p494 = pneg %p488
      %p495 = scmp.eq.s32.totalorder %s31, 1
      %p496 = por %p494, %p495
      %p497 = scmp.ne.s32.totalorder %s489, %s492
      %p498 = scmp.eq.s32.totalorder %s31, 0
      %p499 = por %p497, %p498
      %p500 = scmp.ne.s32.totalorder %s489, %s492
      %p501 = scmp.eq.s32.totalorder %s36, 1
      %p502 = por %p500, %p501
      %p503 = scmp.ne.s32.totalorder %s492, %s493
      %p504 = scmp.eq.s32.totalorder %s36, 0
      %p505 = por %p503, %p504
      %p506 = scmp.ne.s32.totalorder %s492, %s493
      %p507 = scmp.eq.s32.totalorder %s37, 1
      %p508 = por %p506, %p507
      %p510 = scmp.ne.s32.totalorder %s493, %s509
      %p511 = scmp.eq.s32.totalorder %s37, 0
      %p512 = por %p510, %p511
      %s513 = ssub.s32 %s31, %s38
      %p514 = scmp.eq.s32.totalorder %s513, 0
      %s516 = sadd.s32 %s515, 1
      %s517 = scalar_select %p514, %s515, %s516
      %p520 = pneg %p514
      %p521 = scmp.eq.s32.totalorder %s31, 1
      %p522 = por %p520, %p521
      %p523 = scmp.ne.s32.totalorder %s515, %s518
      %p524 = scmp.eq.s32.totalorder %s31, 0
      %p525 = por %p523, %p524
      %p526 = scmp.ne.s32.totalorder %s515, %s518
      %p527 = scmp.eq.s32.totalorder %s36, 1
      %p528 = por %p526, %p527
      %p529 = scmp.ne.s32.totalorder %s518, %s519
      %p530 = scmp.eq.s32.totalorder %s36, 0
      %p531 = por %p529, %p530
      %p532 = scmp.ne.s32.totalorder %s518, %s519
      %p533 = scmp.eq.s32.totalorder %s37, 1
      %p534 = por %p532, %p533
      %p536 = scmp.ne.s32.totalorder %s519, %s535
      %p537 = scmp.eq.s32.totalorder %s37, 0
      %p538 = por %p536, %p537
      %s540 = sadd.s32 %s539, 1
      %p543 = scmp.eq.s32.totalorder %s31, 1
      %p544 = scmp.ne.s32.totalorder %s539, %s541
      %p545 = scmp.eq.s32.totalorder %s31, 0
      %p546 = por %p544, %p545
      %p547 = scmp.ne.s32.totalorder %s539, %s541
      %p548 = scmp.eq.s32.totalorder %s36, 1
      %p549 = por %p547, %p548
      %p550 = scmp.ne.s32.totalorder %s541, %s542
      %p551 = scmp.eq.s32.totalorder %s36, 0
      %p552 = por %p550, %p551
      %p553 = scmp.ne.s32.totalorder %s541, %s542
      %p554 = scmp.eq.s32.totalorder %s37, 1
      %p555 = por %p553, %p554
      %p557 = scmp.ne.s32.totalorder %s542, %s556
      %p558 = scmp.eq.s32.totalorder %s37, 0
      %p559 = por %p557, %p558
      %s561 = sadd.s32 %s560, 1
      %p564 = scmp.eq.s32.totalorder %s31, 1
      %p565 = scmp.ne.s32.totalorder %s560, %s562
      %p566 = scmp.eq.s32.totalorder %s31, 0
      %p567 = por %p565, %p566
      %p568 = scmp.ne.s32.totalorder %s560, %s562
      %p569 = scmp.eq.s32.totalorder %s36, 1
      %p570 = por %p568, %p569
      %p571 = scmp.ne.s32.totalorder %s562, %s563
      %p572 = scmp.eq.s32.totalorder %s36, 0
      %p573 = por %p571, %p572
      %p574 = scmp.ne.s32.totalorder %s562, %s563
      %p575 = scmp.eq.s32.totalorder %s37, 1
      %p576 = por %p574, %p575
      %p578 = scmp.ne.s32.totalorder %s563, %s577
      %p579 = scmp.eq.s32.totalorder %s37, 0
      %p580 = por %p578, %p579
      %s582 = sadd.s32 %s581, 1
      %p585 = scmp.eq.s32.totalorder %s31, 1
      %p586 = scmp.ne.s32.totalorder %s581, %s583
      %p587 = scmp.eq.s32.totalorder %s31, 0
      %p588 = por %p586, %p587
      %p589 = scmp.ne.s32.totalorder %s581, %s583
      %p590 = scmp.eq.s32.totalorder %s36, 1
      %p591 = por %p589, %p590
      %p592 = scmp.ne.s32.totalorder %s583, %s584
      %p593 = scmp.eq.s32.totalorder %s36, 0
      %p594 = por %p592, %p593
      %p595 = scmp.ne.s32.totalorder %s583, %s584
      %p596 = scmp.eq.s32.totalorder %s37, 1
      %p597 = por %p595, %p596
      %p599 = scmp.ne.s32.totalorder %s584, %s598
      %p600 = scmp.eq.s32.totalorder %s37, 0
      %p601 = por %p599, %p600
      %s603 = sadd.s32 %s602, 1
      %p606 = scmp.eq.s32.totalorder %s31, 1
      %p607 = scmp.ne.s32.totalorder %s602, %s604
      %p608 = scmp.eq.s32.totalorder %s31, 0
      %p609 = por %p607, %p608
      %p610 = scmp.ne.s32.totalorder %s602, %s604
      %p611 = scmp.eq.s32.totalorder %s36, 1
      %p612 = por %p610, %p611
      %p613 = scmp.ne.s32.totalorder %s604, %s605
      %p614 = scmp.eq.s32.totalorder %s36, 0
      %p615 = por %p613, %p614
      %p616 = scmp.ne.s32.totalorder %s604, %s605
      %p617 = scmp.eq.s32.totalorder %s37, 1
      %p618 = por %p616, %p617
      %p620 = scmp.ne.s32.totalorder %s605, %s619
      %p621 = scmp.eq.s32.totalorder %s37, 0
      %p622 = por %p620, %p621
      %s624 = sadd.s32 %s623, 1
      %p627 = scmp.eq.s32.totalorder %s31, 1
      %p628 = scmp.ne.s32.totalorder %s623, %s625
      %p629 = scmp.eq.s32.totalorder %s31, 0
      %p630 = por %p628, %p629
      %p631 = scmp.ne.s32.totalorder %s623, %s625
      %p632 = scmp.eq.s32.totalorder %s36, 1
      %p633 = por %p631, %p632
      %p634 = scmp.ne.s32.totalorder %s625, %s626
      %p635 = scmp.eq.s32.totalorder %s36, 0
      %p636 = por %p634, %p635
      %p637 = scmp.ne.s32.totalorder %s625, %s626
      %p638 = scmp.eq.s32.totalorder %s37, 1
      %p639 = por %p637, %p638
      %p641 = scmp.ne.s32.totalorder %s626, %s640
      %p642 = scmp.eq.s32.totalorder %s37, 0
      %p643 = por %p641, %p642
      %p644 = scmp.le.s32.totalorder 1, %s31
      %p645 = scmp.lt.s32.totalorder %s31, 3
      %p646 = pnand %p644, %p645
      %p647 = pneg %p646
      // Predicated region
      $region9: #{bert_classifier_forward.1} parent=5 // pred_check
        _
      $region10: #{bert_classifier_forward.1} parent=5 // pred_check_branch
        %649 = sbr.rel (%p646) target = $region12
      $region11: #{bert_classifier_forward.1} parent=5 // pred_region
        %s650 = ssub.s32 %s31, 1
        // Predicated region
        $region13: #{bert_classifier_forward.1} parent=11 // pred_check
          %p651 = pneg %p52
        $region14: #{bert_classifier_forward.1} parent=11 // pred_check_branch
          %653 = sbr.rel (%p651) target = $region16
        $region15: #{bert_classifier_forward.1} parent=11 // pred_region
          _
        $region16: #{bert_classifier_forward.1} parent=11 // pred_fallthru
          _
        // Predicated region
        $region17: #{bert_classifier_forward.1} parent=11 // pred_check
          %p654 = pneg %p73
        $region18: #{bert_classifier_forward.1} parent=11 // pred_check_branch
          %656 = sbr.rel (%p654) target = $region20
        $region19: #{bert_classifier_forward.1} parent=11 // pred_region
          _
        $region20: #{bert_classifier_forward.1} parent=11 // pred_fallthru
          _
        // Predicated region
        $region21: #{bert_classifier_forward.1} parent=11 // pred_check
          %p657 = pneg %p94
        $region22: #{bert_classifier_forward.1} parent=11 // pred_check_branch
          %659 = sbr.rel (%p657) target = $region24
        $region23: #{bert_classifier_forward.1} parent=11 // pred_region
          _
        $region24: #{bert_classifier_forward.1} parent=11 // pred_fallthru
          _
        // Predicated region
        $region25: #{bert_classifier_forward.1} parent=11 // pred_check
          %p660 = pneg %p115
        $region26: #{bert_classifier_forward.1} parent=11 // pred_check_branch
          %662 = sbr.rel (%p660) target = $region28
        $region27: #{bert_classifier_forward.1} parent=11 // pred_region
          _
        $region28: #{bert_classifier_forward.1} parent=11 // pred_fallthru
          _
        // Predicated region
        $region29: #{bert_classifier_forward.1} parent=11 // pred_check
          %p663 = pneg %p552
        $region30: #{bert_classifier_forward.1} parent=11 // pred_check_branch
          %665 = sbr.rel (%p663) target = $region32
        $region31: #{bert_classifier_forward.1} parent=11 // pred_region
          _
        $region32: #{bert_classifier_forward.1} parent=11 // pred_fallthru
          _
        // Predicated region
        $region33: #{bert_classifier_forward.1} parent=11 // pred_check
          %p666 = pneg %p573
        $region34: #{bert_classifier_forward.1} parent=11 // pred_check_branch
          %668 = sbr.rel (%p666) target = $region36
        $region35: #{bert_classifier_forward.1} parent=11 // pred_region
          _
        $region36: #{bert_classifier_forward.1} parent=11 // pred_fallthru
          _
        // Predicated region
        $region37: #{bert_classifier_forward.1} parent=11 // pred_check
          %p669 = pneg %p594
        $region38: #{bert_classifier_forward.1} parent=11 // pred_check_branch
          %671 = sbr.rel (%p669) target = $region40
        $region39: #{bert_classifier_forward.1} parent=11 // pred_region
          _
        $region40: #{bert_classifier_forward.1} parent=11 // pred_fallthru
          _
        // Predicated region
        $region41: #{bert_classifier_forward.1} parent=11 // pred_check
          %p672 = pneg %p615
        $region42: #{bert_classifier_forward.1} parent=11 // pred_check_branch
          %674 = sbr.rel (%p672) target = $region44
        $region43: #{bert_classifier_forward.1} parent=11 // pred_region
          _
        $region44: #{bert_classifier_forward.1} parent=11 // pred_fallthru
          _
      $region12: #{bert_classifier_forward.1} parent=5 // pred_fallthru
        _
      %p675 = scmp.lt.s32.totalorder %s31, 2
      // Predicated region
      $region45: #{bert_classifier_forward.1} parent=5 // pred_check
        %p676 = pneg %p675
      $region46: #{bert_classifier_forward.1} parent=5 // pred_check_branch
        %678 = sbr.rel (%p676) target = $region48
      $region47: #{bert_classifier_forward.1} parent=5 // pred_region
        // Predicated region
        $region49: #{bert_classifier_forward.1} parent=47 // pred_check
          %p679 = pneg %p135
        $region50: #{bert_classifier_forward.1} parent=47 // pred_check_branch
          %681 = sbr.rel (%p679) target = $region52
        $region51: #{bert_classifier_forward.1} parent=47 // pred_region
          %p682 = scmp.lt.s32.totalorder %s31, 1
          %s683 = scalar_select %p682, %s31, 1
          %s684 = smul.addr %s683, 64
          %s685 = smul.addr %s684, 4
          %s686 = scalar_lea.vmem %s4, %s685
        $region52: #{bert_classifier_forward.1} parent=47 // pred_fallthru
          _
        // Predicated region
        $region53: #{bert_classifier_forward.1} parent=47 // pred_check
          %p687 = pneg %p161
        $region54: #{bert_classifier_forward.1} parent=47 // pred_check_branch
          %689 = sbr.rel (%p687) target = $region56
        $region55: #{bert_classifier_forward.1} parent=47 // pred_region
          %p690 = scmp.lt.s32.totalorder %s31, 1
          %s691 = scalar_select %p690, %s31, 1
          %s692 = smul.addr %s691, 4
          %s693 = scalar_lea.vmem %s5, %s692
        $region56: #{bert_classifier_forward.1} parent=47 // pred_fallthru
          _
        // Predicated region
        $region57: #{bert_classifier_forward.1} parent=47 // pred_check
          %p694 = pneg %p187
        $region58: #{bert_classifier_forward.1} parent=47 // pred_check_branch
          %696 = sbr.rel (%p694) target = $region60
        $region59: #{bert_classifier_forward.1} parent=47 // pred_region
          %p697 = scmp.lt.s32.totalorder %s31, 1
          %s698 = scalar_select %p697, %s31, 1
          %s699 = smul.addr %s698, 64
          %s700 = smul.addr %s699, 4
          %s701 = scalar_lea.vmem %s6, %s700
        $region60: #{bert_classifier_forward.1} parent=47 // pred_fallthru
          _
        // Predicated region
        $region61: #{bert_classifier_forward.1} parent=47 // pred_check
          %p702 = pneg %p213
        $region62: #{bert_classifier_forward.1} parent=47 // pred_check_branch
          %704 = sbr.rel (%p702) target = $region64
        $region63: #{bert_classifier_forward.1} parent=47 // pred_region
          %p705 = scmp.lt.s32.totalorder %s31, 1
          %s706 = scalar_select %p705, %s31, 1
          %s707 = smul.addr %s706, 4
          %s708 = scalar_lea.vmem %s7, %s707
        $region64: #{bert_classifier_forward.1} parent=47 // pred_fallthru
          _
        // Predicated region
        $region65: #{bert_classifier_forward.1} parent=47 // pred_check
          %p709 = pneg %p239
        $region66: #{bert_classifier_forward.1} parent=47 // pred_check_branch
          %711 = sbr.rel (%p709) target = $region68
        $region67: #{bert_classifier_forward.1} parent=47 // pred_region
          %p712 = scmp.lt.s32.totalorder %s31, 1
          %s713 = scalar_select %p712, %s31, 1
          %s714 = smul.addr %s713, 64
          %s715 = smul.addr %s714, 4
          %s716 = scalar_lea.vmem %s8, %s715
        $region68: #{bert_classifier_forward.1} parent=47 // pred_fallthru
          _
        // Predicated region
        $region69: #{bert_classifier_forward.1} parent=47 // pred_check
          %p717 = pneg %p265
        $region70: #{bert_classifier_forward.1} parent=47 // pred_check_branch
          %719 = sbr.rel (%p717) target = $region72
        $region71: #{bert_classifier_forward.1} parent=47 // pred_region
          %p720 = scmp.lt.s32.totalorder %s31, 1
          %s721 = scalar_select %p720, %s31, 1
          %s722 = smul.addr %s721, 4
          %s723 = scalar_lea.vmem %s9, %s722
        $region72: #{bert_classifier_forward.1} parent=47 // pred_fallthru
          _
        // Predicated region
        $region73: #{bert_classifier_forward.1} parent=47 // pred_check
          %p724 = pneg %p291
        $region74: #{bert_classifier_forward.1} parent=47 // pred_check_branch
          %726 = sbr.rel (%p724) target = $region76
        $region75: #{bert_classifier_forward.1} parent=47 // pred_region
          %p727 = scmp.lt.s32.totalorder %s31, 1
          %s728 = scalar_select %p727, %s31, 1
          %s729 = smul.addr %s728, 16
          %s730 = smul.addr %s729, 4
          %s731 = scalar_lea.vmem %s10, %s730
        $region76: #{bert_classifier_forward.1} parent=47 // pred_fallthru
          _
        // Predicated region
        $region77: #{bert_classifier_forward.1} parent=47 // pred_check
          %p732 = pneg %p317
        $region78: #{bert_classifier_forward.1} parent=47 // pred_check_branch
          %734 = sbr.rel (%p732) target = $region80
        $region79: #{bert_classifier_forward.1} parent=47 // pred_region
          %p735 = scmp.lt.s32.totalorder %s31, 1
          %s736 = scalar_select %p735, %s31, 1
          %s737 = scalar_lea.vmem %s11, %s736
        $region80: #{bert_classifier_forward.1} parent=47 // pred_fallthru
          _
        // Predicated region
        $region81: #{bert_classifier_forward.1} parent=47 // pred_check
          %p738 = pneg %p343
        $region82: #{bert_classifier_forward.1} parent=47 // pred_check_branch
          %740 = sbr.rel (%p738) target = $region84
        $region83: #{bert_classifier_forward.1} parent=47 // pred_region
          %p741 = scmp.lt.s32.totalorder %s31, 1
          %s742 = scalar_select %p741, %s31, 1
          %s743 = scalar_lea.vmem %s12, %s742
        $region84: #{bert_classifier_forward.1} parent=47 // pred_fallthru
          _
        // Predicated region
        $region85: #{bert_classifier_forward.1} parent=47 // pred_check
          %p744 = pneg %p369
        $region86: #{bert_classifier_forward.1} parent=47 // pred_check_branch
          %746 = sbr.rel (%p744) target = $region88
        $region87: #{bert_classifier_forward.1} parent=47 // pred_region
          %p747 = scmp.lt.s32.totalorder %s31, 1
          %s748 = scalar_select %p747, %s31, 1
          %s749 = scalar_lea.vmem %s13, %s748
        $region88: #{bert_classifier_forward.1} parent=47 // pred_fallthru
          _
        // Predicated region
        $region89: #{bert_classifier_forward.1} parent=47 // pred_check
          %p750 = pneg %p395
        $region90: #{bert_classifier_forward.1} parent=47 // pred_check_branch
          %752 = sbr.rel (%p750) target = $region92
        $region91: #{bert_classifier_forward.1} parent=47 // pred_region
          %p753 = scmp.lt.s32.totalorder %s31, 1
          %s754 = scalar_select %p753, %s31, 1
          %s755 = smul.addr %s754, 64
          %s756 = smul.addr %s755, 4
          %s757 = scalar_lea.vmem %s14, %s756
        $region92: #{bert_classifier_forward.1} parent=47 // pred_fallthru
          _
        // Predicated region
        $region93: #{bert_classifier_forward.1} parent=47 // pred_check
          %p758 = pneg %p421
        $region94: #{bert_classifier_forward.1} parent=47 // pred_check_branch
          %760 = sbr.rel (%p758) target = $region96
        $region95: #{bert_classifier_forward.1} parent=47 // pred_region
          %p761 = scmp.lt.s32.totalorder %s31, 1
          %s762 = scalar_select %p761, %s31, 1
          %s763 = smul.addr %s762, 4
          %s764 = scalar_lea.vmem %s15, %s763
        $region96: #{bert_classifier_forward.1} parent=47 // pred_fallthru
          _
        // Predicated region
        $region97: #{bert_classifier_forward.1} parent=47 // pred_check
          %p765 = pneg %p447
        $region98: #{bert_classifier_forward.1} parent=47 // pred_check_branch
          %767 = sbr.rel (%p765) target = $region100
        $region99: #{bert_classifier_forward.1} parent=47 // pred_region
          %p768 = scmp.lt.s32.totalorder %s31, 1
          %s769 = scalar_select %p768, %s31, 1
          %s770 = smul.addr %s769, 64
          %s771 = smul.addr %s770, 4
          %s772 = scalar_lea.vmem %s16, %s771
        $region100: #{bert_classifier_forward.1} parent=47 // pred_fallthru
          _
        // Predicated region
        $region101: #{bert_classifier_forward.1} parent=47 // pred_check
          %p773 = pneg %p473
        $region102: #{bert_classifier_forward.1} parent=47 // pred_check_branch
          %775 = sbr.rel (%p773) target = $region104
        $region103: #{bert_classifier_forward.1} parent=47 // pred_region
          %p776 = scmp.lt.s32.totalorder %s31, 1
          %s777 = scalar_select %p776, %s31, 1
          %s778 = scalar_lea.vmem %s17, %s777
        $region104: #{bert_classifier_forward.1} parent=47 // pred_fallthru
          _
        // Predicated region
        $region105: #{bert_classifier_forward.1} parent=47 // pred_check
          %p779 = pneg %p499
        $region106: #{bert_classifier_forward.1} parent=47 // pred_check_branch
          %781 = sbr.rel (%p779) target = $region108
        $region107: #{bert_classifier_forward.1} parent=47 // pred_region
          %p782 = scmp.lt.s32.totalorder %s31, 1
          %s783 = scalar_select %p782, %s31, 1
          %s784 = scalar_lea.vmem %s18, %s783
        $region108: #{bert_classifier_forward.1} parent=47 // pred_fallthru
          _
        // Predicated region
        $region109: #{bert_classifier_forward.1} parent=47 // pred_check
          %p785 = pneg %p525
        $region110: #{bert_classifier_forward.1} parent=47 // pred_check_branch
          %787 = sbr.rel (%p785) target = $region112
        $region111: #{bert_classifier_forward.1} parent=47 // pred_region
          %p788 = scmp.lt.s32.totalorder %s31, 1
          %s789 = scalar_select %p788, %s31, 1
          %s790 = scalar_lea.vmem %s19, %s789
        $region112: #{bert_classifier_forward.1} parent=47 // pred_fallthru
          _
      $region48: #{bert_classifier_forward.1} parent=5 // pred_fallthru
        _
      %p791 = scmp.le.s32.totalorder 1, %s31
      %p792 = scmp.lt.s32.totalorder %s31, 3
      %p793 = pnand %p791, %p792
      %p794 = pneg %p793
      // Predicated region
      $region113: #{bert_classifier_forward.1} parent=5 // pred_check
        _
      $region114: #{bert_classifier_forward.1} parent=5 // pred_check_branch
        %796 = sbr.rel (%p793) target = $region116
      $region115: #{bert_classifier_forward.1} parent=5 // pred_region
        %s797 = ssub.s32 %s31, 1
        %p798 = pneg %p52
        %p799 = pneg %p49
        %p800 = pneg %p73
        %p801 = pneg %p70
        %p802 = pneg %p94
        %p803 = pneg %p91
        %p804 = pneg %p115
        %p805 = pneg %p112
        %p806 = scmp.lt.s32.totalorder %s36, 1
        %s807 = scalar_select %p806, %s36, 1
        %s808 = smul.addr %s807, 64
        %s809 = smul.addr %s808, 4
        %s810 = scalar_lea.vmem %s4, %s809
        %p811 = pneg %p141
        %p812 = pneg %p138
        %p813 = scmp.lt.s32.totalorder %s36, 1
        %s814 = scalar_select %p813, %s36, 1
        %s815 = smul.addr %s814, 4
        %s816 = scalar_lea.vmem %s5, %s815
        %p817 = pneg %p167
        %p818 = pneg %p164
        %p819 = scmp.lt.s32.totalorder %s36, 1
        %s820 = scalar_select %p819, %s36, 1
        %s821 = smul.addr %s820, 64
        %s822 = smul.addr %s821, 4
        %s823 = scalar_lea.vmem %s6, %s822
        %p824 = pneg %p193
        %p825 = pneg %p190
        %p826 = scmp.lt.s32.totalorder %s36, 1
        %s827 = scalar_select %p826, %s36, 1
        %s828 = smul.addr %s827, 4
        %s829 = scalar_lea.vmem %s7, %s828
        %p830 = pneg %p219
        %p831 = pneg %p216
        %p832 = scmp.lt.s32.totalorder %s36, 1
        %s833 = scalar_select %p832, %s36, 1
        %s834 = smul.addr %s833, 64
        %s835 = smul.addr %s834, 4
        %s836 = scalar_lea.vmem %s8, %s835
        %p837 = pneg %p245
        %p838 = pneg %p242
        %p839 = scmp.lt.s32.totalorder %s36, 1
        %s840 = scalar_select %p839, %s36, 1
        %s841 = smul.addr %s840, 4
        %s842 = scalar_lea.vmem %s9, %s841
        %p843 = pneg %p271
        %p844 = pneg %p268
        %p845 = scmp.lt.s32.totalorder %s36, 1
        %s846 = scalar_select %p845, %s36, 1
        %s847 = smul.addr %s846, 16
        %s848 = smul.addr %s847, 4
        %s849 = scalar_lea.vmem %s10, %s848
        %p850 = pneg %p297
        %p851 = pneg %p294
        %p852 = scmp.lt.s32.totalorder %s36, 1
        %s853 = scalar_select %p852, %s36, 1
        %s854 = scalar_lea.vmem %s11, %s853
        %p855 = pneg %p323
        %p856 = pneg %p320
        %p857 = scmp.lt.s32.totalorder %s36, 1
        %s858 = scalar_select %p857, %s36, 1
        %s859 = scalar_lea.vmem %s12, %s858
        %p860 = pneg %p349
        %p861 = pneg %p346
        %p862 = scmp.lt.s32.totalorder %s36, 1
        %s863 = scalar_select %p862, %s36, 1
        %s864 = scalar_lea.vmem %s13, %s863
        %p865 = pneg %p375
        %p866 = pneg %p372
        %p867 = scmp.lt.s32.totalorder %s36, 1
        %s868 = scalar_select %p867, %s36, 1
        %s869 = smul.addr %s868, 64
        %s870 = smul.addr %s869, 4
        %s871 = scalar_lea.vmem %s14, %s870
        %p872 = pneg %p401
        %p873 = pneg %p398
        %p874 = scmp.lt.s32.totalorder %s36, 1
        %s875 = scalar_select %p874, %s36, 1
        %s876 = smul.addr %s875, 4
        %s877 = scalar_lea.vmem %s15, %s876
        %p878 = pneg %p427
        %p879 = pneg %p424
        %p880 = scmp.lt.s32.totalorder %s36, 1
        %s881 = scalar_select %p880, %s36, 1
        %s882 = smul.addr %s881, 64
        %s883 = smul.addr %s882, 4
        %s884 = scalar_lea.vmem %s16, %s883
        %p885 = pneg %p453
        %p886 = pneg %p450
        %p887 = scmp.lt.s32.totalorder %s36, 1
        %s888 = scalar_select %p887, %s36, 1
        %s889 = scalar_lea.vmem %s17, %s888
        %p890 = pneg %p479
        %p891 = pneg %p476
        %p892 = scmp.lt.s32.totalorder %s36, 1
        %s893 = scalar_select %p892, %s36, 1
        %s894 = scalar_lea.vmem %s18, %s893
        %p895 = pneg %p505
        %p896 = pneg %p502
        %p897 = scmp.lt.s32.totalorder %s36, 1
        %s898 = scalar_select %p897, %s36, 1
        %s899 = scalar_lea.vmem %s19, %s898
        %p900 = pneg %p531
        %p901 = pneg %p528
        %p902 = pneg %p552
        %p903 = pneg %p549
        %p904 = pneg %p573
        %p905 = pneg %p570
        %p906 = pneg %p594
        %p907 = pneg %p591
        %p908 = pneg %p615
        %p909 = pneg %p612
        %p910 = pneg %p636
        %p911 = pneg %p633
        %p912 = scmp.lt.s32.totalorder %s36, 1
        %s913 = scalar_select %p912, %s36, 1
        %s914 = smul.addr %s913, 64
        %s915 = smul.addr %s914, 4
        %s916 = scalar_lea.vmem %s4, %s915
        %p917 = scmp.lt.s32.totalorder %s36, 1
        %s918 = scalar_select %p917, %s36, 1
        %s919 = smul.addr %s918, 4
        %s920 = scalar_lea.vmem %s5, %s919
        %p921 = scmp.lt.s32.totalorder %s36, 1
        %s922 = scalar_select %p921, %s36, 1
        %s923 = smul.addr %s922, 64
        %s924 = smul.addr %s923, 4
        %s925 = scalar_lea.vmem %s6, %s924
        %p926 = scmp.lt.s32.totalorder %s36, 1
        %s927 = scalar_select %p926, %s36, 1
        %s928 = smul.addr %s927, 4
        %s929 = scalar_lea.vmem %s7, %s928
        %p930 = scmp.lt.s32.totalorder %s36, 1
        %s931 = scalar_select %p930, %s36, 1
        %s932 = smul.addr %s931, 64
        %s933 = smul.addr %s932, 4
        %s934 = scalar_lea.vmem %s8, %s933
        %p935 = scmp.lt.s32.totalorder %s36, 1
        %s936 = scalar_select %p935, %s36, 1
        %s937 = smul.addr %s936, 4
        %s938 = scalar_lea.vmem %s9, %s937
        %p939 = scmp.lt.s32.totalorder %s36, 1
        %s940 = scalar_select %p939, %s36, 1
        %s941 = smul.addr %s940, 16
        %s942 = smul.addr %s941, 4
        %s943 = scalar_lea.vmem %s10, %s942
        %p944 = scmp.lt.s32.totalorder %s36, 1
        %s945 = scalar_select %p944, %s36, 1
        %s946 = scalar_lea.vmem %s11, %s945
        %p947 = scmp.lt.s32.totalorder %s36, 1
        %s948 = scalar_select %p947, %s36, 1
        %s949 = scalar_lea.vmem %s12, %s948
        %p950 = scmp.lt.s32.totalorder %s36, 1
        %s951 = scalar_select %p950, %s36, 1
        %s952 = scalar_lea.vmem %s13, %s951
        %p953 = scmp.lt.s32.totalorder %s36, 1
        %s954 = scalar_select %p953, %s36, 1
        %s955 = smul.addr %s954, 64
        %s956 = smul.addr %s955, 4
        %s957 = scalar_lea.vmem %s14, %s956
        %p958 = scmp.lt.s32.totalorder %s36, 1
        %s959 = scalar_select %p958, %s36, 1
        %s960 = smul.addr %s959, 4
        %s961 = scalar_lea.vmem %s15, %s960
        %p962 = scmp.lt.s32.totalorder %s36, 1
        %s963 = scalar_select %p962, %s36, 1
        %s964 = smul.addr %s963, 64
        %s965 = smul.addr %s964, 4
        %s966 = scalar_lea.vmem %s16, %s965
        %p967 = scmp.lt.s32.totalorder %s36, 1
        %s968 = scalar_select %p967, %s36, 1
        %s969 = scalar_lea.vmem %s17, %s968
        %p970 = scmp.lt.s32.totalorder %s36, 1
        %s971 = scalar_select %p970, %s36, 1
        %s972 = scalar_lea.vmem %s18, %s971
        %p973 = scmp.lt.s32.totalorder %s36, 1
        %s974 = scalar_select %p973, %s36, 1
        %s975 = scalar_lea.vmem %s19, %s974
        %p977 = scmp.eq.s32.totalorder %s36, 0
        // Predicated region
        $region117: #{bert_classifier_forward.1} parent=115 // pred_check
          %p978 = pneg %p977
        $region118: #{bert_classifier_forward.1} parent=115 // pred_check_branch
          %980 = sbr.rel (%p978) target = $region120
        $region119: #{bert_classifier_forward.1} parent=115 // pred_region
          %v981 = vld [vmem:[%s0] sm:$0xff]
          %v982 = vld [vmem:[%s0 + $0x8] sm:$0xff]
          %v983 = vld [vmem:[%s2] sm:$0x1]
          %v984 = vld [vmem:[%s3] sm:$0x1]
          %985 = vadd.xlane.f32.xlu0 %v981
          %v986 = vpop.xlane.xlu0 %985
          %987 = vadd.xlane.f32.xlu0 %v982
          %v988 = vpop.xlane.xlu0 %987
          %v989 = vrcp.pop 128.0
          %v990 = vmul.f32 %v986, %v989
          %v991 = vmul.f32 %v988, %v989
          %v992 = vsub.f32 %v981, %v990
          %v993 = vsub.f32 %v982, %v991
          %v994 = vmul.f32 %v992, %v992
          %v995 = vmul.f32 %v993, %v993
          %996 = vadd.xlane.f32.xlu0 %v994
          %v997 = vpop.xlane.xlu0 %996
          %998 = vadd.xlane.f32.xlu0 %v995
          %v999 = vpop.xlane.xlu0 %998
          %v1000 = vmul.f32 %v997, %v989
          %v1001 = vmul.f32 %v999, %v989
          %v1002 = vadd.f32 %v1000, 1e-12
          %v1003 = vadd.f32 %v1001, 1e-12
          %v1004 = vrsqrt.pop %v1002
          %v1005 = vrsqrt.pop %v1003
          %v1006 = vmul.f32 %v992, %v1004
          %v1007 = vmul.f32 %v993, %v1005
          %v1009 = vlaneseq
          %v1010 = vshrl.u32 %v1009, 7
          %v1011 = vsub.s32 0, %v1010
          %v1012 = vrot.slane %v983, %v1011
          %v1014 = vmul.f32 %v1006, %v1012
          %v1015 = vmul.f32 %v1007, %v1012
          %v1017 = vlaneseq
          %v1018 = vshrl.u32 %v1017, 7
          %v1019 = vsub.s32 0, %v1018
          %v1020 = vrot.slane %v984, %v1019
          %v1022 = vadd.f32 %v1014, %v1020
          %v1023 = vadd.f32 %v1015, %v1020
          %1024 = vst [vmem:[#allocation2] sm:$0xff] %v1022
          %1025 = vst [vmem:[#allocation2 + $0x8] sm:$0xff] %v1023
        $region120: #{bert_classifier_forward.1} parent=115 // pred_fallthru
          _
        %v1026 = vld [vmem:[#allocation2] sm:$0xff]
        %v1027 = vld [vmem:[#allocation2 + $0x8] sm:$0xff]
        %v1028 = vld [vmem:[%s916] sm:$0xf]
        %v1029 = vld [vmem:[%s916 + $0x4] sm:$0xf]
        %v1030 = vld [vmem:[%s916 + $0x8] sm:$0xf]
        %v1031 = vld [vmem:[%s916 + $0xc] sm:$0xf]
        %v1032 = vld [vmem:[%s916 + $0x10] sm:$0xf]
        %v1033 = vld [vmem:[%s916 + $0x14] sm:$0xf]
        %v1034 = vld [vmem:[%s916 + $0x18] sm:$0xf]
        %v1035 = vld [vmem:[%s916 + $0x1c] sm:$0xf]
        %v1036 = vld [vmem:[%s916 + $0x20] sm:$0xf]
        %v1037 = vld [vmem:[%s916 + $0x24] sm:$0xf]
        %v1038 = vld [vmem:[%s916 + $0x28] sm:$0xf]
        %v1039 = vld [vmem:[%s916 + $0x2c] sm:$0xf]
        %v1040 = vld [vmem:[%s916 + $0x30] sm:$0xf]
        %v1041 = vld [vmem:[%s916 + $0x34] sm:$0xf]
        %v1042 = vld [vmem:[%s916 + $0x38] sm:$0xf]
        %v1043 = vld [vmem:[%s916 + $0x3c] sm:$0xf]
        %v1044 = vld [vmem:[%s916 + $0x40] sm:$0xf]
        %v1045 = vld [vmem:[%s916 + $0x44] sm:$0xf]
        %v1046 = vld [vmem:[%s916 + $0x48] sm:$0xf]
        %v1047 = vld [vmem:[%s916 + $0x4c] sm:$0xf]
        %v1048 = vld [vmem:[%s916 + $0x50] sm:$0xf]
        %v1049 = vld [vmem:[%s916 + $0x54] sm:$0xf]
        %v1050 = vld [vmem:[%s916 + $0x58] sm:$0xf]
        %v1051 = vld [vmem:[%s916 + $0x5c] sm:$0xf]
        %v1052 = vld [vmem:[%s916 + $0x60] sm:$0xf]
        %v1053 = vld [vmem:[%s916 + $0x64] sm:$0xf]
        %v1054 = vld [vmem:[%s916 + $0x68] sm:$0xf]
        %v1055 = vld [vmem:[%s916 + $0x6c] sm:$0xf]
        %v1056 = vld [vmem:[%s916 + $0x70] sm:$0xf]
        %v1057 = vld [vmem:[%s916 + $0x74] sm:$0xf]
        %v1058 = vld [vmem:[%s916 + $0x78] sm:$0xf]
        %v1059 = vld [vmem:[%s916 + $0x7c] sm:$0xf]
        %v1060 = vld [vmem:[%s916 + $0x80] sm:$0xf]
        %v1061 = vld [vmem:[%s916 + $0x84] sm:$0xf]
        %v1062 = vld [vmem:[%s916 + $0x88] sm:$0xf]
        %v1063 = vld [vmem:[%s916 + $0x8c] sm:$0xf]
        %v1064 = vld [vmem:[%s916 + $0x90] sm:$0xf]
        %v1065 = vld [vmem:[%s916 + $0x94] sm:$0xf]
        %v1066 = vld [vmem:[%s916 + $0x98] sm:$0xf]
        %v1067 = vld [vmem:[%s916 + $0x9c] sm:$0xf]
        %v1068 = vld [vmem:[%s916 + $0xa0] sm:$0xf]
        %v1069 = vld [vmem:[%s916 + $0xa4] sm:$0xf]
        %v1070 = vld [vmem:[%s916 + $0xa8] sm:$0xf]
        %v1071 = vld [vmem:[%s916 + $0xac] sm:$0xf]
        %v1072 = vld [vmem:[%s916 + $0xb0] sm:$0xf]
        %v1073 = vld [vmem:[%s916 + $0xb4] sm:$0xf]
        %v1074 = vld [vmem:[%s916 + $0xb8] sm:$0xf]
        %v1075 = vld [vmem:[%s916 + $0xbc] sm:$0xf]
        %v1076 = vld [vmem:[%s916 + $0xc0] sm:$0xf]
        %v1077 = vld [vmem:[%s916 + $0xc4] sm:$0xf]
        %v1078 = vld [vmem:[%s916 + $0xc8] sm:$0xf]
        %v1079 = vld [vmem:[%s916 + $0xcc] sm:$0xf]
        %v1080 = vld [vmem:[%s916 + $0xd0] sm:$0xf]
        %v1081 = vld [vmem:[%s916 + $0xd4] sm:$0xf]
        %v1082 = vld [vmem:[%s916 + $0xd8] sm:$0xf]
        %v1083 = vld [vmem:[%s916 + $0xdc] sm:$0xf]
        %v1084 = vld [vmem:[%s916 + $0xe0] sm:$0xf]
        %v1085 = vld [vmem:[%s916 + $0xe4] sm:$0xf]
        %v1086 = vld [vmem:[%s916 + $0xe8] sm:$0xf]
        %v1087 = vld [vmem:[%s916 + $0xec] sm:$0xf]
        %v1088 = vld [vmem:[%s916 + $0xf0] sm:$0xf]
        %v1089 = vld [vmem:[%s916 + $0xf4] sm:$0xf]
        %v1090 = vld [vmem:[%s916 + $0xf8] sm:$0xf]
        %v1091 = vld [vmem:[%s916 + $0xfc] sm:$0xf]
        %v1092 = vld [vmem:[%s925] sm:$0xf]
        %v1093 = vld [vmem:[%s925 + $0x4] sm:$0xf]
        %v1094 = vld [vmem:[%s925 + $0x8] sm:$0xf]
        %v1095 = vld [vmem:[%s925 + $0xc] sm:$0xf]
        %v1096 = vld [vmem:[%s925 + $0x10] sm:$0xf]
        %v1097 = vld [vmem:[%s925 + $0x14] sm:$0xf]
        %v1098 = vld [vmem:[%s925 + $0x18] sm:$0xf]
        %v1099 = vld [vmem:[%s925 + $0x1c] sm:$0xf]
        %v1100 = vld [vmem:[%s925 + $0x20] sm:$0xf]
        %v1101 = vld [vmem:[%s925 + $0x24] sm:$0xf]
        %v1102 = vld [vmem:[%s925 + $0x28] sm:$0xf]
        %v1103 = vld [vmem:[%s925 + $0x2c] sm:$0xf]
        %v1104 = vld [vmem:[%s925 + $0x30] sm:$0xf]
        %v1105 = vld [vmem:[%s925 + $0x34] sm:$0xf]
        %v1106 = vld [vmem:[%s925 + $0x38] sm:$0xf]
        %v1107 = vld [vmem:[%s925 + $0x3c] sm:$0xf]
        %v1108 = vld [vmem:[%s925 + $0x40] sm:$0xf]
        %v1109 = vld [vmem:[%s925 + $0x44] sm:$0xf]
        %v1110 = vld [vmem:[%s925 + $0x48] sm:$0xf]
        %v1111 = vld [vmem:[%s925 + $0x4c] sm:$0xf]
        %v1112 = vld [vmem:[%s925 + $0x50] sm:$0xf]
        %v1113 = vld [vmem:[%s925 + $0x54] sm:$0xf]
        %v1114 = vld [vmem:[%s925 + $0x58] sm:$0xf]
        %v1115 = vld [vmem:[%s925 + $0x5c] sm:$0xf]
        %v1116 = vld [vmem:[%s925 + $0x60] sm:$0xf]
        %v1117 = vld [vmem:[%s925 + $0x64] sm:$0xf]
        %v1118 = vld [vmem:[%s925 + $0x68] sm:$0xf]
        %v1119 = vld [vmem:[%s925 + $0x6c] sm:$0xf]
        %v1120 = vld [vmem:[%s925 + $0x70] sm:$0xf]
        %v1121 = vld [vmem:[%s925 + $0x74] sm:$0xf]
        %v1122 = vld [vmem:[%s925 + $0x78] sm:$0xf]
        %v1123 = vld [vmem:[%s925 + $0x7c] sm:$0xf]
        %v1124 = vld [vmem:[%s925 + $0x80] sm:$0xf]
        %v1125 = vld [vmem:[%s925 + $0x84] sm:$0xf]
        %v1126 = vld [vmem:[%s925 + $0x88] sm:$0xf]
        %v1127 = vld [vmem:[%s925 + $0x8c] sm:$0xf]
        %v1128 = vld [vmem:[%s925 + $0x90] sm:$0xf]
        %v1129 = vld [vmem:[%s925 + $0x94] sm:$0xf]
        %v1130 = vld [vmem:[%s925 + $0x98] sm:$0xf]
        %v1131 = vld [vmem:[%s925 + $0x9c] sm:$0xf]
        %v1132 = vld [vmem:[%s925 + $0xa0] sm:$0xf]
        %v1133 = vld [vmem:[%s925 + $0xa4] sm:$0xf]
        %v1134 = vld [vmem:[%s925 + $0xa8] sm:$0xf]
        %v1135 = vld [vmem:[%s925 + $0xac] sm:$0xf]
        %v1136 = vld [vmem:[%s925 + $0xb0] sm:$0xf]
        %v1137 = vld [vmem:[%s925 + $0xb4] sm:$0xf]
        %v1138 = vld [vmem:[%s925 + $0xb8] sm:$0xf]
        %v1139 = vld [vmem:[%s925 + $0xbc] sm:$0xf]
        %v1140 = vld [vmem:[%s925 + $0xc0] sm:$0xf]
        %v1141 = vld [vmem:[%s925 + $0xc4] sm:$0xf]
        %v1142 = vld [vmem:[%s925 + $0xc8] sm:$0xf]
        %v1143 = vld [vmem:[%s925 + $0xcc] sm:$0xf]
        %v1144 = vld [vmem:[%s925 + $0xd0] sm:$0xf]
        %v1145 = vld [vmem:[%s925 + $0xd4] sm:$0xf]
        %v1146 = vld [vmem:[%s925 + $0xd8] sm:$0xf]
        %v1147 = vld [vmem:[%s925 + $0xdc] sm:$0xf]
        %v1148 = vld [vmem:[%s925 + $0xe0] sm:$0xf]
        %v1149 = vld [vmem:[%s925 + $0xe4] sm:$0xf]
        %v1150 = vld [vmem:[%s925 + $0xe8] sm:$0xf]
        %v1151 = vld [vmem:[%s925 + $0xec] sm:$0xf]
        %v1152 = vld [vmem:[%s925 + $0xf0] sm:$0xf]
        %v1153 = vld [vmem:[%s925 + $0xf4] sm:$0xf]
        %v1154 = vld [vmem:[%s925 + $0xf8] sm:$0xf]
        %v1155 = vld [vmem:[%s925 + $0xfc] sm:$0xf]
        %v1156 = vld [vmem:[%s934] sm:$0xf]
        %v1157 = vld [vmem:[%s934 + $0x4] sm:$0xf]
        %v1158 = vld [vmem:[%s934 + $0x8] sm:$0xf]
        %v1159 = vld [vmem:[%s934 + $0xc] sm:$0xf]
        %v1160 = vld [vmem:[%s934 + $0x10] sm:$0xf]
        %v1161 = vld [vmem:[%s934 + $0x14] sm:$0xf]
        %v1162 = vld [vmem:[%s934 + $0x18] sm:$0xf]
        %v1163 = vld [vmem:[%s934 + $0x1c] sm:$0xf]
        %v1164 = vld [vmem:[%s934 + $0x20] sm:$0xf]
        %v1165 = vld [vmem:[%s934 + $0x24] sm:$0xf]
        %v1166 = vld [vmem:[%s934 + $0x28] sm:$0xf]
        %v1167 = vld [vmem:[%s934 + $0x2c] sm:$0xf]
        %v1168 = vld [vmem:[%s934 + $0x30] sm:$0xf]
        %v1169 = vld [vmem:[%s934 + $0x34] sm:$0xf]
        %v1170 = vld [vmem:[%s934 + $0x38] sm:$0xf]
        %v1171 = vld [vmem:[%s934 + $0x3c] sm:$0xf]
        %v1172 = vld [vmem:[%s934 + $0x40] sm:$0xf]
        %v1173 = vld [vmem:[%s934 + $0x44] sm:$0xf]
        %v1174 = vld [vmem:[%s934 + $0x48] sm:$0xf]
        %v1175 = vld [vmem:[%s934 + $0x4c] sm:$0xf]
        %v1176 = vld [vmem:[%s934 + $0x50] sm:$0xf]
        %v1177 = vld [vmem:[%s934 + $0x54] sm:$0xf]
        %v1178 = vld [vmem:[%s934 + $0x58] sm:$0xf]
        %v1179 = vld [vmem:[%s934 + $0x5c] sm:$0xf]
        %v1180 = vld [vmem:[%s934 + $0x60] sm:$0xf]
        %v1181 = vld [vmem:[%s934 + $0x64] sm:$0xf]
        %v1182 = vld [vmem:[%s934 + $0x68] sm:$0xf]
        %v1183 = vld [vmem:[%s934 + $0x6c] sm:$0xf]
        %v1184 = vld [vmem:[%s934 + $0x70] sm:$0xf]
        %v1185 = vld [vmem:[%s934 + $0x74] sm:$0xf]
        %v1186 = vld [vmem:[%s934 + $0x78] sm:$0xf]
        %v1187 = vld [vmem:[%s934 + $0x7c] sm:$0xf]
        %v1188 = vld [vmem:[%s934 + $0x80] sm:$0xf]
        %v1189 = vld [vmem:[%s934 + $0x84] sm:$0xf]
        %v1190 = vld [vmem:[%s934 + $0x88] sm:$0xf]
        %v1191 = vld [vmem:[%s934 + $0x8c] sm:$0xf]
        %v1192 = vld [vmem:[%s934 + $0x90] sm:$0xf]
        %v1193 = vld [vmem:[%s934 + $0x94] sm:$0xf]
        %v1194 = vld [vmem:[%s934 + $0x98] sm:$0xf]
        %v1195 = vld [vmem:[%s934 + $0x9c] sm:$0xf]
        %v1196 = vld [vmem:[%s934 + $0xa0] sm:$0xf]
        %v1197 = vld [vmem:[%s934 + $0xa4] sm:$0xf]
        %v1198 = vld [vmem:[%s934 + $0xa8] sm:$0xf]
        %v1199 = vld [vmem:[%s934 + $0xac] sm:$0xf]
        %v1200 = vld [vmem:[%s934 + $0xb0] sm:$0xf]
        %v1201 = vld [vmem:[%s934 + $0xb4] sm:$0xf]
        %v1202 = vld [vmem:[%s934 + $0xb8] sm:$0xf]
        %v1203 = vld [vmem:[%s934 + $0xbc] sm:$0xf]
        %v1204 = vld [vmem:[%s934 + $0xc0] sm:$0xf]
        %v1205 = vld [vmem:[%s934 + $0xc4] sm:$0xf]
        %v1206 = vld [vmem:[%s934 + $0xc8] sm:$0xf]
        %v1207 = vld [vmem:[%s934 + $0xcc] sm:$0xf]
        %v1208 = vld [vmem:[%s934 + $0xd0] sm:$0xf]
        %v1209 = vld [vmem:[%s934 + $0xd4] sm:$0xf]
        %v1210 = vld [vmem:[%s934 + $0xd8] sm:$0xf]
        %v1211 = vld [vmem:[%s934 + $0xdc] sm:$0xf]
        %v1212 = vld [vmem:[%s934 + $0xe0] sm:$0xf]
        %v1213 = vld [vmem:[%s934 + $0xe4] sm:$0xf]
        %v1214 = vld [vmem:[%s934 + $0xe8] sm:$0xf]
        %v1215 = vld [vmem:[%s934 + $0xec] sm:$0xf]
        %v1216 = vld [vmem:[%s934 + $0xf0] sm:$0xf]
        %v1217 = vld [vmem:[%s934 + $0xf4] sm:$0xf]
        %v1218 = vld [vmem:[%s934 + $0xf8] sm:$0xf]
        %v1219 = vld [vmem:[%s934 + $0xfc] sm:$0xf]
        %v1220 = vld [vmem:[%s920] sm:$0x1]
        %v1221 = vld [vmem:[%s920 + $0x1] sm:$0x1]
        %v1222 = vld [vmem:[%s920 + $0x2] sm:$0x1]
        %v1223 = vld [vmem:[%s920 + $0x3] sm:$0x1]
        %v1224 = vld [vmem:[%s929] sm:$0x1]
        %v1225 = vld [vmem:[%s929 + $0x1] sm:$0x1]
        %v1226 = vld [vmem:[%s929 + $0x2] sm:$0x1]
        %v1227 = vld [vmem:[%s929 + $0x3] sm:$0x1]
        %v1228 = vld [vmem:[%s938] sm:$0x1]
        %v1229 = vld [vmem:[%s938 + $0x1] sm:$0x1]
        %v1230 = vld [vmem:[%s938 + $0x2] sm:$0x1]
        %v1231 = vld [vmem:[%s938 + $0x3] sm:$0x1]
        %v1232 = vld [vmem:[%s943] sm:$0xf]
        %v1233 = vld [vmem:[%s943 + $0x4] sm:$0xf]
        %v1234 = vld [vmem:[%s943 + $0x8] sm:$0xf]
        %v1235 = vld [vmem:[%s943 + $0xc] sm:$0xf]
        %v1236 = vld [vmem:[%s943 + $0x10] sm:$0xf]
        %v1237 = vld [vmem:[%s943 + $0x14] sm:$0xf]
        %v1238 = vld [vmem:[%s943 + $0x18] sm:$0xf]
        %v1239 = vld [vmem:[%s943 + $0x1c] sm:$0xf]
        %v1240 = vld [vmem:[%s943 + $0x20] sm:$0xf]
        %v1241 = vld [vmem:[%s943 + $0x24] sm:$0xf]
        %v1242 = vld [vmem:[%s943 + $0x28] sm:$0xf]
        %v1243 = vld [vmem:[%s943 + $0x2c] sm:$0xf]
        %v1244 = vld [vmem:[%s943 + $0x30] sm:$0xf]
        %v1245 = vld [vmem:[%s943 + $0x34] sm:$0xf]
        %v1246 = vld [vmem:[%s943 + $0x38] sm:$0xf]
        %v1247 = vld [vmem:[%s943 + $0x3c] sm:$0xf]
        %v1248 = vpack.c.bf16 %v1026, %v1026
        %v1253 = vlaneseq
        %v1254 = vshrl.u32 %v1253, 7
        %v1255 = vsub.s32 0, %v1254
        %v1256 = vrot.slane %v1220, %v1255
        %v1257 = vlaneseq
        %v1258 = vshrl.u32 %v1257, 7
        %v1259 = vsub.s32 0, %v1258
        %v1260 = vrot.slane %v1221, %v1259
        %v1261 = vlaneseq
        %v1262 = vshrl.u32 %v1261, 7
        %v1263 = vsub.s32 0, %v1262
        %v1264 = vrot.slane %v1222, %v1263
        %v1265 = vlaneseq
        %v1266 = vshrl.u32 %v1265, 7
        %v1267 = vsub.s32 0, %v1266
        %v1268 = vrot.slane %v1223, %v1267
        %v1289 = vunpack.c.l.b16 %v1028
        %v1290 = vunpack.c.l.b16 %v1029
        %v1291 = vunpack.c.l.b16 %v1030
        %v1292 = vunpack.c.l.b16 %v1031
        %v1293 = vunpack.c.l.b16 %v1032
        %v1294 = vunpack.c.l.b16 %v1033
        %v1295 = vunpack.c.l.b16 %v1034
        %v1296 = vunpack.c.l.b16 %v1035
        %v1297 = vunpack.c.l.b16 %v1036
        %v1298 = vunpack.c.l.b16 %v1037
        %v1299 = vunpack.c.l.b16 %v1038
        %v1300 = vunpack.c.l.b16 %v1039
        %v1301 = vunpack.c.l.b16 %v1040
        %v1302 = vunpack.c.l.b16 %v1041
        %v1303 = vunpack.c.l.b16 %v1042
        %v1304 = vunpack.c.l.b16 %v1043
        %v1305 = vpack.c.b16 %v1290, %v1289
        %v1306 = vpack.c.b16 %v1292, %v1291
        %v1307 = vpack.c.b16 %v1294, %v1293
        %v1308 = vpack.c.b16 %v1296, %v1295
        %v1309 = vpack.c.b16 %v1298, %v1297
        %v1310 = vpack.c.b16 %v1300, %v1299
        %v1311 = vpack.c.b16 %v1302, %v1301
        %v1312 = vpack.c.b16 %v1304, %v1303
        %1321 = vmatprep.subr.bf16.mxu0 0
        %1322 = vmatpush1.bf16.msra.mxu0 %v1305
        %1323 = vmatprep.subr.bf16.mxu0 0
        %1324 = vmatpush1.bf16.msra.mxu0 %v1306
        %1325 = vmatprep.subr.bf16.mxu0 0
        %1326 = vmatpush1.bf16.msra.mxu0 %v1307
        %1327 = vmatprep.subr.bf16.mxu0 0
        %1328 = vmatpush1.bf16.msra.mxu0 %v1308
        %1329 = vmatprep.subr.bf16.mxu0 0
        %1330 = vmatpush1.bf16.msra.mxu0 %v1309
        %1331 = vmatprep.subr.bf16.mxu0 0
        %1332 = vmatpush1.bf16.msra.mxu0 %v1310
        %1333 = vmatprep.subr.bf16.mxu0 0
        %1334 = vmatpush1.bf16.msra.mxu0 %v1311
        %1335 = vmatprep.subr.bf16.mxu0 0
        %1336 = vmatpush1.bf16.msra.mxu0 %v1312
        %1337 = vmatprep.subr.bf16.mxu0 0
        %1338 = vmatpush1.bf16.msra.mxu0 0
        %1339 = vmatprep.subr.bf16.mxu0 0
        %1340 = vmatpush1.bf16.msra.mxu0 0
        %1341 = vmatprep.subr.bf16.mxu0 0
        %1342 = vmatpush1.bf16.msra.mxu0 0
        %1343 = vmatprep.subr.bf16.mxu0 0
        %1344 = vmatpush1.bf16.msra.mxu0 0
        %1345 = vmatprep.subr.bf16.mxu0 0
        %1346 = vmatpush1.bf16.msra.mxu0 0
        %1347 = vmatprep.subr.bf16.mxu0 0
        %1348 = vmatpush1.bf16.msra.mxu0 0
        %1349 = vmatprep.subr.bf16.mxu0 0
        %1350 = vmatpush1.bf16.msra.mxu0 0
        %1351 = vmatprep.subr.bf16.mxu0 0
        %1352 = vmatpush1.bf16.msra.mxu0 0
        %1353 = vmatprep.mubr.bf16.mxu0 0
        %1354 = vmatmul.mubr.bf16.gmra.mrb[0].mxu0 %v1248
        %v1355 = vpop.f32.mrb[0].mxu0
        %v1356 = vadd.f32 %v1256, %v1355
        %v1357 = vpop.f32.mrb[0].mxu0
        %v1358 = vpop.f32.mrb[0].mxu0
        %v1359 = vpop.f32.mrb[0].mxu0
        %1360 = vdwg.mxu0
        %v1377 = vunpack.c.l.b16 %v1044
        %v1378 = vunpack.c.l.b16 %v1045
        %v1379 = vunpack.c.l.b16 %v1046
        %v1380 = vunpack.c.l.b16 %v1047
        %v1381 = vunpack.c.l.b16 %v1048
        %v1382 = vunpack.c.l.b16 %v1049
        %v1383 = vunpack.c.l.b16 %v1050
        %v1384 = vunpack.c.l.b16 %v1051
        %v1385 = vunpack.c.l.b16 %v1052
        %v1386 = vunpack.c.l.b16 %v1053
        %v1387 = vunpack.c.l.b16 %v1054
        %v1388 = vunpack.c.l.b16 %v1055
        %v1389 = vunpack.c.l.b16 %v1056
        %v1390 = vunpack.c.l.b16 %v1057
        %v1391 = vunpack.c.l.b16 %v1058
        %v1392 = vunpack.c.l.b16 %v1059
        %v1393 = vpack.c.b16 %v1378, %v1377
        %v1394 = vpack.c.b16 %v1380, %v1379
        %v1395 = vpack.c.b16 %v1382, %v1381
        %v1396 = vpack.c.b16 %v1384, %v1383
        %v1397 = vpack.c.b16 %v1386, %v1385
        %v1398 = vpack.c.b16 %v1388, %v1387
        %v1399 = vpack.c.b16 %v1390, %v1389
        %v1400 = vpack.c.b16 %v1392, %v1391
        %1409 = vmatprep.subr.bf16.mxu0 0
        %1410 = vmatpush1.bf16.msra.mxu0 %v1393
        %1411 = vmatprep.subr.bf16.mxu0 0
        %1412 = vmatpush1.bf16.msra.mxu0 %v1394
        %1413 = vmatprep.subr.bf16.mxu0 0
        %1414 = vmatpush1.bf16.msra.mxu0 %v1395
        %1415 = vmatprep.subr.bf16.mxu0 0
        %1416 = vmatpush1.bf16.msra.mxu0 %v1396
        %1417 = vmatprep.subr.bf16.mxu0 0
        %1418 = vmatpush1.bf16.msra.mxu0 %v1397
        %1419 = vmatprep.subr.bf16.mxu0 0
        %1420 = vmatpush1.bf16.msra.mxu0 %v1398
        %1421 = vmatprep.subr.bf16.mxu0 0
        %1422 = vmatpush1.bf16.msra.mxu0 %v1399
        %1423 = vmatprep.subr.bf16.mxu0 0
        %1424 = vmatpush1.bf16.msra.mxu0 %v1400
        %1425 = vmatprep.subr.bf16.mxu0 0
        %1426 = vmatpush1.bf16.msra.mxu0 0
        %1427 = vmatprep.subr.bf16.mxu0 0
        %1428 = vmatpush1.bf16.msra.mxu0 0
        %1429 = vmatprep.subr.bf16.mxu0 0
        %1430 = vmatpush1.bf16.msra.mxu0 0
        %1431 = vmatprep.subr.bf16.mxu0 0
        %1432 = vmatpush1.bf16.msra.mxu0 0
        %1433 = vmatprep.subr.bf16.mxu0 0
        %1434 = vmatpush1.bf16.msra.mxu0 0
        %1435 = vmatprep.subr.bf16.mxu0 0
        %1436 = vmatpush1.bf16.msra.mxu0 0
        %1437 = vmatprep.subr.bf16.mxu0 0
        %1438 = vmatpush1.bf16.msra.mxu0 0
        %1439 = vmatprep.subr.bf16.mxu0 0
        %1440 = vmatpush1.bf16.msra.mxu0 0
        %1441 = vmatprep.mubr.bf16.mxu0 0
        %1442 = vmatmul.mubr.bf16.gmra.mrb[0].mxu0 %v1248
        %v1443 = vpop.f32.mrb[0].mxu0
        %v1444 = vadd.f32 %v1260, %v1443
        %v1445 = vpop.f32.mrb[0].mxu0
        %v1446 = vpop.f32.mrb[0].mxu0
        %v1447 = vpop.f32.mrb[0].mxu0
        %1448 = vdwg.mxu0
        %v1465 = vunpack.c.l.b16 %v1060
        %v1466 = vunpack.c.l.b16 %v1061
        %v1467 = vunpack.c.l.b16 %v1062
        %v1468 = vunpack.c.l.b16 %v1063
        %v1469 = vunpack.c.l.b16 %v1064
        %v1470 = vunpack.c.l.b16 %v1065
        %v1471 = vunpack.c.l.b16 %v1066
        %v1472 = vunpack.c.l.b16 %v1067
        %v1473 = vunpack.c.l.b16 %v1068
        %v1474 = vunpack.c.l.b16 %v1069
        %v1475 = vunpack.c.l.b16 %v1070
        %v1476 = vunpack.c.l.b16 %v1071
        %v1477 = vunpack.c.l.b16 %v1072
        %v1478 = vunpack.c.l.b16 %v1073
        %v1479 = vunpack.c.l.b16 %v1074
        %v1480 = vunpack.c.l.b16 %v1075
        %v1481 = vpack.c.b16 %v1466, %v1465
        %v1482 = vpack.c.b16 %v1468, %v1467
        %v1483 = vpack.c.b16 %v1470, %v1469
        %v1484 = vpack.c.b16 %v1472, %v1471
        %v1485 = vpack.c.b16 %v1474, %v1473
        %v1486 = vpack.c.b16 %v1476, %v1475
        %v1487 = vpack.c.b16 %v1478, %v1477
        %v1488 = vpack.c.b16 %v1480, %v1479
        %1497 = vmatprep.subr.bf16.mxu0 0
        %1498 = vmatpush1.bf16.msra.mxu0 %v1481
        %1499 = vmatprep.subr.bf16.mxu0 0
        %1500 = vmatpush1.bf16.msra.mxu0 %v1482
        %1501 = vmatprep.subr.bf16.mxu0 0
        %1502 = vmatpush1.bf16.msra.mxu0 %v1483
        %1503 = vmatprep.subr.bf16.mxu0 0
        %1504 = vmatpush1.bf16.msra.mxu0 %v1484
        %1505 = vmatprep.subr.bf16.mxu0 0
        %1506 = vmatpush1.bf16.msra.mxu0 %v1485
        %1507 = vmatprep.subr.bf16.mxu0 0
        %1508 = vmatpush1.bf16.msra.mxu0 %v1486
        %1509 = vmatprep.subr.bf16.mxu0 0
        %1510 = vmatpush1.bf16.msra.mxu0 %v1487
        %1511 = vmatprep.subr.bf16.mxu0 0
        %1512 = vmatpush1.bf16.msra.mxu0 %v1488
        %1513 = vmatprep.subr.bf16.mxu0 0
        %1514 = vmatpush1.bf16.msra.mxu0 0
        %1515 = vmatprep.subr.bf16.mxu0 0
        %1516 = vmatpush1.bf16.msra.mxu0 0
        %1517 = vmatprep.subr.bf16.mxu0 0
        %1518 = vmatpush1.bf16.msra.mxu0 0
        %1519 = vmatprep.subr.bf16.mxu0 0
        %1520 = vmatpush1.bf16.msra.mxu0 0
        %1521 = vmatprep.subr.bf16.mxu0 0
        %1522 = vmatpush1.bf16.msra.mxu0 0
        %1523 = vmatprep.subr.bf16.mxu0 0
        %1524 = vmatpush1.bf16.msra.mxu0 0
        %1525 = vmatprep.subr.bf16.mxu0 0
        %1526 = vmatpush1.bf16.msra.mxu0 0
        %1527 = vmatprep.subr.bf16.mxu0 0
        %1528 = vmatpush1.bf16.msra.mxu0 0
        %1529 = vmatprep.mubr.bf16.mxu0 0
        %1530 = vmatmul.mubr.bf16.gmra.mrb[0].mxu0 %v1248
        %v1531 = vpop.f32.mrb[0].mxu0
        %v1532 = vadd.f32 %v1264, %v1531
        %v1533 = vpop.f32.mrb[0].mxu0
        %v1534 = vpop.f32.mrb[0].mxu0
        %v1535 = vpop.f32.mrb[0].mxu0
        %1536 = vdwg.mxu0
        %v1553 = vunpack.c.l.b16 %v1076
        %v1554 = vunpack.c.l.b16 %v1077
        %v1555 = vunpack.c.l.b16 %v1078
        %v1556 = vunpack.c.l.b16 %v1079
        %v1557 = vunpack.c.l.b16 %v1080
        %v1558 = vunpack.c.l.b16 %v1081
        %v1559 = vunpack.c.l.b16 %v1082
        %v1560 = vunpack.c.l.b16 %v1083
        %v1561 = vunpack.c.l.b16 %v1084
        %v1562 = vunpack.c.l.b16 %v1085
        %v1563 = vunpack.c.l.b16 %v1086
        %v1564 = vunpack.c.l.b16 %v1087
        %v1565 = vunpack.c.l.b16 %v1088
        %v1566 = vunpack.c.l.b16 %v1089
        %v1567 = vunpack.c.l.b16 %v1090
        %v1568 = vunpack.c.l.b16 %v1091
        %v1569 = vpack.c.b16 %v1554, %v1553
        %v1570 = vpack.c.b16 %v1556, %v1555
        %v1571 = vpack.c.b16 %v1558, %v1557
        %v1572 = vpack.c.b16 %v1560, %v1559
        %v1573 = vpack.c.b16 %v1562, %v1561
        %v1574 = vpack.c.b16 %v1564, %v1563
        %v1575 = vpack.c.b16 %v1566, %v1565
        %v1576 = vpack.c.b16 %v1568, %v1567
        %1585 = vmatprep.subr.bf16.mxu0 0
        %1586 = vmatpush1.bf16.msra.mxu0 %v1569
        %1587 = vmatprep.subr.bf16.mxu0 0
        %1588 = vmatpush1.bf16.msra.mxu0 %v1570
        %1589 = vmatprep.subr.bf16.mxu0 0
        %1590 = vmatpush1.bf16.msra.mxu0 %v1571
        %1591 = vmatprep.subr.bf16.mxu0 0
        %1592 = vmatpush1.bf16.msra.mxu0 %v1572
        %1593 = vmatprep.subr.bf16.mxu0 0
        %1594 = vmatpush1.bf16.msra.mxu0 %v1573
        %1595 = vmatprep.subr.bf16.mxu0 0
        %1596 = vmatpush1.bf16.msra.mxu0 %v1574
        %1597 = vmatprep.subr.bf16.mxu0 0
        %1598 = vmatpush1.bf16.msra.mxu0 %v1575
        %1599 = vmatprep.subr.bf16.mxu0 0
        %1600 = vmatpush1.bf16.msra.mxu0 %v1576
        %1601 = vmatprep.subr.bf16.mxu0 0
        %1602 = vmatpush1.bf16.msra.mxu0 0
        %1603 = vmatprep.subr.bf16.mxu0 0
        %1604 = vmatpush1.bf16.msra.mxu0 0
        %1605 = vmatprep.subr.bf16.mxu0 0
        %1606 = vmatpush1.bf16.msra.mxu0 0
        %1607 = vmatprep.subr.bf16.mxu0 0
        %1608 = vmatpush1.bf16.msra.mxu0 0
        %1609 = vmatprep.subr.bf16.mxu0 0
        %1610 = vmatpush1.bf16.msra.mxu0 0
        %1611 = vmatprep.subr.bf16.mxu0 0
        %1612 = vmatpush1.bf16.msra.mxu0 0
        %1613 = vmatprep.subr.bf16.mxu0 0
        %1614 = vmatpush1.bf16.msra.mxu0 0
        %1615 = vmatprep.subr.bf16.mxu0 0
        %1616 = vmatpush1.bf16.msra.mxu0 0
        %1617 = vmatprep.mubr.bf16.mxu0 0
        %1618 = vmatmul.mubr.bf16.gmra.mrb[0].mxu0 %v1248
        %v1619 = vpop.f32.mrb[0].mxu0
        %v1620 = vadd.f32 %v1268, %v1619
        %v1621 = vpop.f32.mrb[0].mxu0
        %v1622 = vpop.f32.mrb[0].mxu0
        %v1623 = vpop.f32.mrb[0].mxu0
        %1624 = vdwg.mxu0
        %v1629 = vlaneseq
        %v1630 = vshrl.u32 %v1629, 7
        %v1631 = vsub.s32 0, %v1630
        %v1632 = vrot.slane %v1224, %v1631
        %v1633 = vlaneseq
        %v1634 = vshrl.u32 %v1633, 7
        %v1635 = vsub.s32 0, %v1634
        %v1636 = vrot.slane %v1225, %v1635
        %v1637 = vlaneseq
        %v1638 = vshrl.u32 %v1637, 7
        %v1639 = vsub.s32 0, %v1638
        %v1640 = vrot.slane %v1226, %v1639
        %v1641 = vlaneseq
        %v1642 = vshrl.u32 %v1641, 7
        %v1643 = vsub.s32 0, %v1642
        %v1644 = vrot.slane %v1227, %v1643
        %v1665 = vunpack.c.l.b16 %v1092
        %v1666 = vunpack.c.l.b16 %v1093
        %v1667 = vunpack.c.l.b16 %v1094
        %v1668 = vunpack.c.l.b16 %v1095
        %v1669 = vunpack.c.l.b16 %v1096
        %v1670 = vunpack.c.l.b16 %v1097
        %v1671 = vunpack.c.l.b16 %v1098
        %v1672 = vunpack.c.l.b16 %v1099
        %v1673 = vunpack.c.l.b16 %v1100
        %v1674 = vunpack.c.l.b16 %v1101
        %v1675 = vunpack.c.l.b16 %v1102
        %v1676 = vunpack.c.l.b16 %v1103
        %v1677 = vunpack.c.l.b16 %v1104
        %v1678 = vunpack.c.l.b16 %v1105
        %v1679 = vunpack.c.l.b16 %v1106
        %v1680 = vunpack.c.l.b16 %v1107
        %v1681 = vpack.c.b16 %v1666, %v1665
        %v1682 = vpack.c.b16 %v1668, %v1667
        %v1683 = vpack.c.b16 %v1670, %v1669
        %v1684 = vpack.c.b16 %v1672, %v1671
        %v1685 = vpack.c.b16 %v1674, %v1673
        %v1686 = vpack.c.b16 %v1676, %v1675
        %v1687 = vpack.c.b16 %v1678, %v1677
        %v1688 = vpack.c.b16 %v1680, %v1679
        %1697 = vmatprep.subr.bf16.mxu0 0
        %1698 = vmatpush1.bf16.msra.mxu0 %v1681
        %1699 = vmatprep.subr.bf16.mxu0 0
        %1700 = vmatpush1.bf16.msra.mxu0 %v1682
        %1701 = vmatprep.subr.bf16.mxu0 0
        %1702 = vmatpush1.bf16.msra.mxu0 %v1683
        %1703 = vmatprep.subr.bf16.mxu0 0
        %1704 = vmatpush1.bf16.msra.mxu0 %v1684
        %1705 = vmatprep.subr.bf16.mxu0 0
        %1706 = vmatpush1.bf16.msra.mxu0 %v1685
        %1707 = vmatprep.subr.bf16.mxu0 0
        %1708 = vmatpush1.bf16.msra.mxu0 %v1686
        %1709 = vmatprep.subr.bf16.mxu0 0
        %1710 = vmatpush1.bf16.msra.mxu0 %v1687
        %1711 = vmatprep.subr.bf16.mxu0 0
        %1712 = vmatpush1.bf16.msra.mxu0 %v1688
        %1713 = vmatprep.subr.bf16.mxu0 0
        %1714 = vmatpush1.bf16.msra.mxu0 0
        %1715 = vmatprep.subr.bf16.mxu0 0
        %1716 = vmatpush1.bf16.msra.mxu0 0
        %1717 = vmatprep.subr.bf16.mxu0 0
        %1718 = vmatpush1.bf16.msra.mxu0 0
        %1719 = vmatprep.subr.bf16.mxu0 0
        %1720 = vmatpush1.bf16.msra.mxu0 0
        %1721 = vmatprep.subr.bf16.mxu0 0
        %1722 = vmatpush1.bf16.msra.mxu0 0
        %1723 = vmatprep.subr.bf16.mxu0 0
        %1724 = vmatpush1.bf16.msra.mxu0 0
        %1725 = vmatprep.subr.bf16.mxu0 0
        %1726 = vmatpush1.bf16.msra.mxu0 0
        %1727 = vmatprep.subr.bf16.mxu0 0
        %1728 = vmatpush1.bf16.msra.mxu0 0
        %1729 = vmatprep.mubr.bf16.mxu0 0
        %1730 = vmatmul.mubr.bf16.gmra.mrb[0].mxu0 %v1248
        %v1731 = vpop.f32.mrb[0].mxu0
        %v1732 = vadd.f32 %v1632, %v1731
        %v1733 = vpop.f32.mrb[0].mxu0
        %v1734 = vpop.f32.mrb[0].mxu0
        %v1735 = vpop.f32.mrb[0].mxu0
        %1736 = vdwg.mxu0
        %v1753 = vunpack.c.l.b16 %v1108
        %v1754 = vunpack.c.l.b16 %v1109
        %v1755 = vunpack.c.l.b16 %v1110
        %v1756 = vunpack.c.l.b16 %v1111
        %v1757 = vunpack.c.l.b16 %v1112
        %v1758 = vunpack.c.l.b16 %v1113
        %v1759 = vunpack.c.l.b16 %v1114
        %v1760 = vunpack.c.l.b16 %v1115
        %v1761 = vunpack.c.l.b16 %v1116
        %v1762 = vunpack.c.l.b16 %v1117
        %v1763 = vunpack.c.l.b16 %v1118
        %v1764 = vunpack.c.l.b16 %v1119
        %v1765 = vunpack.c.l.b16 %v1120
        %v1766 = vunpack.c.l.b16 %v1121
        %v1767 = vunpack.c.l.b16 %v1122
        %v1768 = vunpack.c.l.b16 %v1123
        %v1769 = vpack.c.b16 %v1754, %v1753
        %v1770 = vpack.c.b16 %v1756, %v1755
        %v1771 = vpack.c.b16 %v1758, %v1757
        %v1772 = vpack.c.b16 %v1760, %v1759
        %v1773 = vpack.c.b16 %v1762, %v1761
        %v1774 = vpack.c.b16 %v1764, %v1763
        %v1775 = vpack.c.b16 %v1766, %v1765
        %v1776 = vpack.c.b16 %v1768, %v1767
        %1785 = vmatprep.subr.bf16.mxu0 0
        %1786 = vmatpush1.bf16.msra.mxu0 %v1769
        %1787 = vmatprep.subr.bf16.mxu0 0
        %1788 = vmatpush1.bf16.msra.mxu0 %v1770
        %1789 = vmatprep.subr.bf16.mxu0 0
        %1790 = vmatpush1.bf16.msra.mxu0 %v1771
        %1791 = vmatprep.subr.bf16.mxu0 0
        %1792 = vmatpush1.bf16.msra.mxu0 %v1772
        %1793 = vmatprep.subr.bf16.mxu0 0
        %1794 = vmatpush1.bf16.msra.mxu0 %v1773
        %1795 = vmatprep.subr.bf16.mxu0 0
        %1796 = vmatpush1.bf16.msra.mxu0 %v1774
        %1797 = vmatprep.subr.bf16.mxu0 0
        %1798 = vmatpush1.bf16.msra.mxu0 %v1775
        %1799 = vmatprep.subr.bf16.mxu0 0
        %1800 = vmatpush1.bf16.msra.mxu0 %v1776
        %1801 = vmatprep.subr.bf16.mxu0 0
        %1802 = vmatpush1.bf16.msra.mxu0 0
        %1803 = vmatprep.subr.bf16.mxu0 0
        %1804 = vmatpush1.bf16.msra.mxu0 0
        %1805 = vmatprep.subr.bf16.mxu0 0
        %1806 = vmatpush1.bf16.msra.mxu0 0
        %1807 = vmatprep.subr.bf16.mxu0 0
        %1808 = vmatpush1.bf16.msra.mxu0 0
        %1809 = vmatprep.subr.bf16.mxu0 0
        %1810 = vmatpush1.bf16.msra.mxu0 0
        %1811 = vmatprep.subr.bf16.mxu0 0
        %1812 = vmatpush1.bf16.msra.mxu0 0
        %1813 = vmatprep.subr.bf16.mxu0 0
        %1814 = vmatpush1.bf16.msra.mxu0 0
        %1815 = vmatprep.subr.bf16.mxu0 0
        %1816 = vmatpush1.bf16.msra.mxu0 0
        %1817 = vmatprep.mubr.bf16.mxu0 0
        %1818 = vmatmul.mubr.bf16.gmra.mrb[0].mxu0 %v1248
        %v1819 = vpop.f32.mrb[0].mxu0
        %v1820 = vadd.f32 %v1636, %v1819
        %v1821 = vpop.f32.mrb[0].mxu0
        %v1822 = vpop.f32.mrb[0].mxu0
        %v1823 = vpop.f32.mrb[0].mxu0
        %1824 = vdwg.mxu0
        %v1841 = vunpack.c.l.b16 %v1124
        %v1842 = vunpack.c.l.b16 %v1125
        %v1843 = vunpack.c.l.b16 %v1126
        %v1844 = vunpack.c.l.b16 %v1127
        %v1845 = vunpack.c.l.b16 %v1128
        %v1846 = vunpack.c.l.b16 %v1129
        %v1847 = vunpack.c.l.b16 %v1130
        %v1848 = vunpack.c.l.b16 %v1131
        %v1849 = vunpack.c.l.b16 %v1132
        %v1850 = vunpack.c.l.b16 %v1133
        %v1851 = vunpack.c.l.b16 %v1134
        %v1852 = vunpack.c.l.b16 %v1135
        %v1853 = vunpack.c.l.b16 %v1136
        %v1854 = vunpack.c.l.b16 %v1137
        %v1855 = vunpack.c.l.b16 %v1138
        %v1856 = vunpack.c.l.b16 %v1139
        %v1857 = vpack.c.b16 %v1842, %v1841
        %v1858 = vpack.c.b16 %v1844, %v1843
        %v1859 = vpack.c.b16 %v1846, %v1845
        %v1860 = vpack.c.b16 %v1848, %v1847
        %v1861 = vpack.c.b16 %v1850, %v1849
        %v1862 = vpack.c.b16 %v1852, %v1851
        %v1863 = vpack.c.b16 %v1854, %v1853
        %v1864 = vpack.c.b16 %v1856, %v1855
        %1873 = vmatprep.subr.bf16.mxu0 0
        %1874 = vmatpush1.bf16.msra.mxu0 %v1857
        %1875 = vmatprep.subr.bf16.mxu0 0
        %1876 = vmatpush1.bf16.msra.mxu0 %v1858
        %1877 = vmatprep.subr.bf16.mxu0 0
        %1878 = vmatpush1.bf16.msra.mxu0 %v1859
        %1879 = vmatprep.subr.bf16.mxu0 0
        %1880 = vmatpush1.bf16.msra.mxu0 %v1860
        %1881 = vmatprep.subr.bf16.mxu0 0
        %1882 = vmatpush1.bf16.msra.mxu0 %v1861
        %1883 = vmatprep.subr.bf16.mxu0 0
        %1884 = vmatpush1.bf16.msra.mxu0 %v1862
        %1885 = vmatprep.subr.bf16.mxu0 0
        %1886 = vmatpush1.bf16.msra.mxu0 %v1863
        %1887 = vmatprep.subr.bf16.mxu0 0
        %1888 = vmatpush1.bf16.msra.mxu0 %v1864
        %1889 = vmatprep.subr.bf16.mxu0 0
        %1890 = vmatpush1.bf16.msra.mxu0 0
        %1891 = vmatprep.subr.bf16.mxu0 0
        %1892 = vmatpush1.bf16.msra.mxu0 0
        %1893 = vmatprep.subr.bf16.mxu0 0
        %1894 = vmatpush1.bf16.msra.mxu0 0
        %1895 = vmatprep.subr.bf16.mxu0 0
        %1896 = vmatpush1.bf16.msra.mxu0 0
        %1897 = vmatprep.subr.bf16.mxu0 0
        %1898 = vmatpush1.bf16.msra.mxu0 0
        %1899 = vmatprep.subr.bf16.mxu0 0
        %1900 = vmatpush1.bf16.msra.mxu0 0
        %1901 = vmatprep.subr.bf16.mxu0 0
        %1902 = vmatpush1.bf16.msra.mxu0 0
        %1903 = vmatprep.subr.bf16.mxu0 0
        %1904 = vmatpush1.bf16.msra.mxu0 0
        %1905 = vmatprep.mubr.bf16.mxu0 0
        %1906 = vmatmul.mubr.bf16.gmra.mrb[0].mxu0 %v1248
        %v1907 = vpop.f32.mrb[0].mxu0
        %v1908 = vadd.f32 %v1640, %v1907
        %v1909 = vpop.f32.mrb[0].mxu0
        %v1910 = vpop.f32.mrb[0].mxu0
        %v1911 = vpop.f32.mrb[0].mxu0
        %1912 = vdwg.mxu0
        %v1929 = vunpack.c.l.b16 %v1140
        %v1930 = vunpack.c.l.b16 %v1141
        %v1931 = vunpack.c.l.b16 %v1142
        %v1932 = vunpack.c.l.b16 %v1143
        %v1933 = vunpack.c.l.b16 %v1144
        %v1934 = vunpack.c.l.b16 %v1145
        %v1935 = vunpack.c.l.b16 %v1146
        %v1936 = vunpack.c.l.b16 %v1147
        %v1937 = vunpack.c.l.b16 %v1148
        %v1938 = vunpack.c.l.b16 %v1149
        %v1939 = vunpack.c.l.b16 %v1150
        %v1940 = vunpack.c.l.b16 %v1151
        %v1941 = vunpack.c.l.b16 %v1152
        %v1942 = vunpack.c.l.b16 %v1153
        %v1943 = vunpack.c.l.b16 %v1154
        %v1944 = vunpack.c.l.b16 %v1155
        %v1945 = vpack.c.b16 %v1930, %v1929
        %v1946 = vpack.c.b16 %v1932, %v1931
        %v1947 = vpack.c.b16 %v1934, %v1933
        %v1948 = vpack.c.b16 %v1936, %v1935
        %v1949 = vpack.c.b16 %v1938, %v1937
        %v1950 = vpack.c.b16 %v1940, %v1939
        %v1951 = vpack.c.b16 %v1942, %v1941
        %v1952 = vpack.c.b16 %v1944, %v1943
        %1961 = vmatprep.subr.bf16.mxu0 0
        %1962 = vmatpush1.bf16.msra.mxu0 %v1945
        %1963 = vmatprep.subr.bf16.mxu0 0
        %1964 = vmatpush1.bf16.msra.mxu0 %v1946
        %1965 = vmatprep.subr.bf16.mxu0 0
        %1966 = vmatpush1.bf16.msra.mxu0 %v1947
        %1967 = vmatprep.subr.bf16.mxu0 0
        %1968 = vmatpush1.bf16.msra.mxu0 %v1948
        %1969 = vmatprep.subr.bf16.mxu0 0
        %1970 = vmatpush1.bf16.msra.mxu0 %v1949
        %1971 = vmatprep.subr.bf16.mxu0 0
        %1972 = vmatpush1.bf16.msra.mxu0 %v1950
        %1973 = vmatprep.subr.bf16.mxu0 0
        %1974 = vmatpush1.bf16.msra.mxu0 %v1951
        %1975 = vmatprep.subr.bf16.mxu0 0
        %1976 = vmatpush1.bf16.msra.mxu0 %v1952
        %1977 = vmatprep.subr.bf16.mxu0 0
        %1978 = vmatpush1.bf16.msra.mxu0 0
        %1979 = vmatprep.subr.bf16.mxu0 0
        %1980 = vmatpush1.bf16.msra.mxu0 0
        %1981 = vmatprep.subr.bf16.mxu0 0
        %1982 = vmatpush1.bf16.msra.mxu0 0
        %1983 = vmatprep.subr.bf16.mxu0 0
        %1984 = vmatpush1.bf16.msra.mxu0 0
        %1985 = vmatprep.subr.bf16.mxu0 0
        %1986 = vmatpush1.bf16.msra.mxu0 0
        %1987 = vmatprep.subr.bf16.mxu0 0
        %1988 = vmatpush1.bf16.msra.mxu0 0
        %1989 = vmatprep.subr.bf16.mxu0 0
        %1990 = vmatpush1.bf16.msra.mxu0 0
        %1991 = vmatprep.subr.bf16.mxu0 0
        %1992 = vmatpush1.bf16.msra.mxu0 0
        %1993 = vmatprep.mubr.bf16.mxu0 0
        %1994 = vmatmul.mubr.bf16.gmra.mrb[0].mxu0 %v1248
        %v1995 = vpop.f32.mrb[0].mxu0
        %v1996 = vadd.f32 %v1644, %v1995
        %v1997 = vpop.f32.mrb[0].mxu0
        %v1998 = vpop.f32.mrb[0].mxu0
        %v1999 = vpop.f32.mrb[0].mxu0
        %2000 = vdwg.mxu0
        %v2005 = vlaneseq
        %v2006 = vshrl.u32 %v2005, 7
        %v2007 = vsub.s32 0, %v2006
        %v2008 = vrot.slane %v1228, %v2007
        %v2009 = vlaneseq
        %v2010 = vshrl.u32 %v2009, 7
        %v2011 = vsub.s32 0, %v2010
        %v2012 = vrot.slane %v1229, %v2011
        %v2013 = vlaneseq
        %v2014 = vshrl.u32 %v2013, 7
        %v2015 = vsub.s32 0, %v2014
        %v2016 = vrot.slane %v1230, %v2015
        %v2017 = vlaneseq
        %v2018 = vshrl.u32 %v2017, 7
        %v2019 = vsub.s32 0, %v2018
        %v2020 = vrot.slane %v1231, %v2019
        %v2041 = vunpack.c.l.b16 %v1156
        %v2042 = vunpack.c.l.b16 %v1157
        %v2043 = vunpack.c.l.b16 %v1158
        %v2044 = vunpack.c.l.b16 %v1159
        %v2045 = vunpack.c.l.b16 %v1160
        %v2046 = vunpack.c.l.b16 %v1161
        %v2047 = vunpack.c.l.b16 %v1162
        %v2048 = vunpack.c.l.b16 %v1163
        %v2049 = vunpack.c.l.b16 %v1164
        %v2050 = vunpack.c.l.b16 %v1165
        %v2051 = vunpack.c.l.b16 %v1166
        %v2052 = vunpack.c.l.b16 %v1167
        %v2053 = vunpack.c.l.b16 %v1168
        %v2054 = vunpack.c.l.b16 %v1169
        %v2055 = vunpack.c.l.b16 %v1170
        %v2056 = vunpack.c.l.b16 %v1171
        %v2057 = vpack.c.b16 %v2042, %v2041
        %v2058 = vpack.c.b16 %v2044, %v2043
        %v2059 = vpack.c.b16 %v2046, %v2045
        %v2060 = vpack.c.b16 %v2048, %v2047
        %v2061 = vpack.c.b16 %v2050, %v2049
        %v2062 = vpack.c.b16 %v2052, %v2051
        %v2063 = vpack.c.b16 %v2054, %v2053
        %v2064 = vpack.c.b16 %v2056, %v2055
        %2073 = vmatprep.subr.bf16.mxu0 0
        %2074 = vmatpush1.bf16.msra.mxu0 %v2057
        %2075 = vmatprep.subr.bf16.mxu0 0
        %2076 = vmatpush1.bf16.msra.mxu0 %v2058
        %2077 = vmatprep.subr.bf16.mxu0 0
        %2078 = vmatpush1.bf16.msra.mxu0 %v2059
        %2079 = vmatprep.subr.bf16.mxu0 0
        %2080 = vmatpush1.bf16.msra.mxu0 %v2060
        %2081 = vmatprep.subr.bf16.mxu0 0
        %2082 = vmatpush1.bf16.msra.mxu0 %v2061
        %2083 = vmatprep.subr.bf16.mxu0 0
        %2084 = vmatpush1.bf16.msra.mxu0 %v2062
        %2085 = vmatprep.subr.bf16.mxu0 0
        %2086 = vmatpush1.bf16.msra.mxu0 %v2063
        %2087 = vmatprep.subr.bf16.mxu0 0
        %2088 = vmatpush1.bf16.msra.mxu0 %v2064
        %2089 = vmatprep.subr.bf16.mxu0 0
        %2090 = vmatpush1.bf16.msra.mxu0 0
        %2091 = vmatprep.subr.bf16.mxu0 0
        %2092 = vmatpush1.bf16.msra.mxu0 0
        %2093 = vmatprep.subr.bf16.mxu0 0
        %2094 = vmatpush1.bf16.msra.mxu0 0
        %2095 = vmatprep.subr.bf16.mxu0 0
        %2096 = vmatpush1.bf16.msra.mxu0 0
        %2097 = vmatprep.subr.bf16.mxu0 0
        %2098 = vmatpush1.bf16.msra.mxu0 0
        %2099 = vmatprep.subr.bf16.mxu0 0
        %2100 = vmatpush1.bf16.msra.mxu0 0
        %2101 = vmatprep.subr.bf16.mxu0 0
        %2102 = vmatpush1.bf16.msra.mxu0 0
        %2103 = vmatprep.subr.bf16.mxu0 0
        %2104 = vmatpush1.bf16.msra.mxu0 0
        %2105 = vmatprep.mubr.bf16.mxu0 0
        %2106 = vmatmul.mubr.bf16.gmra.mrb[0].mxu0 %v1248
        %v2107 = vpop.f32.mrb[0].mxu0
        %v2108 = vadd.f32 %v2008, %v2107
        %v2109 = vpop.f32.mrb[0].mxu0
        %v2110 = vpop.f32.mrb[0].mxu0
        %v2111 = vpop.f32.mrb[0].mxu0
        %2112 = vdwg.mxu0
        %v2129 = vunpack.c.l.b16 %v1172
        %v2130 = vunpack.c.l.b16 %v1173
        %v2131 = vunpack.c.l.b16 %v1174
        %v2132 = vunpack.c.l.b16 %v1175
        %v2133 = vunpack.c.l.b16 %v1176
        %v2134 = vunpack.c.l.b16 %v1177
        %v2135 = vunpack.c.l.b16 %v1178
        %v2136 = vunpack.c.l.b16 %v1179
        %v2137 = vunpack.c.l.b16 %v1180
        %v2138 = vunpack.c.l.b16 %v1181
        %v2139 = vunpack.c.l.b16 %v1182
        %v2140 = vunpack.c.l.b16 %v1183
        %v2141 = vunpack.c.l.b16 %v1184
        %v2142 = vunpack.c.l.b16 %v1185
        %v2143 = vunpack.c.l.b16 %v1186
        %v2144 = vunpack.c.l.b16 %v1187
        %v2145 = vpack.c.b16 %v2130, %v2129
        %v2146 = vpack.c.b16 %v2132, %v2131
        %v2147 = vpack.c.b16 %v2134, %v2133
        %v2148 = vpack.c.b16 %v2136, %v2135
        %v2149 = vpack.c.b16 %v2138, %v2137
        %v2150 = vpack.c.b16 %v2140, %v2139
        %v2151 = vpack.c.b16 %v2142, %v2141
        %v2152 = vpack.c.b16 %v2144, %v2143
        %2161 = vmatprep.subr.bf16.mxu0 0
        %2162 = vmatpush1.bf16.msra.mxu0 %v2145
        %2163 = vmatprep.subr.bf16.mxu0 0
        %2164 = vmatpush1.bf16.msra.mxu0 %v2146
        %2165 = vmatprep.subr.bf16.mxu0 0
        %2166 = vmatpush1.bf16.msra.mxu0 %v2147
        %2167 = vmatprep.subr.bf16.mxu0 0
        %2168 = vmatpush1.bf16.msra.mxu0 %v2148
        %2169 = vmatprep.subr.bf16.mxu0 0
        %2170 = vmatpush1.bf16.msra.mxu0 %v2149
        %2171 = vmatprep.subr.bf16.mxu0 0
        %2172 = vmatpush1.bf16.msra.mxu0 %v2150
        %2173 = vmatprep.subr.bf16.mxu0 0
        %2174 = vmatpush1.bf16.msra.mxu0 %v2151
        %2175 = vmatprep.subr.bf16.mxu0 0
        %2176 = vmatpush1.bf16.msra.mxu0 %v2152
        %2177 = vmatprep.subr.bf16.mxu0 0
        %2178 = vmatpush1.bf16.msra.mxu0 0
        %2179 = vmatprep.subr.bf16.mxu0 0
        %2180 = vmatpush1.bf16.msra.mxu0 0
        %2181 = vmatprep.subr.bf16.mxu0 0
        %2182 = vmatpush1.bf16.msra.mxu0 0
        %2183 = vmatprep.subr.bf16.mxu0 0
        %2184 = vmatpush1.bf16.msra.mxu0 0
        %2185 = vmatprep.subr.bf16.mxu0 0
        %2186 = vmatpush1.bf16.msra.mxu0 0
        %2187 = vmatprep.subr.bf16.mxu0 0
        %2188 = vmatpush1.bf16.msra.mxu0 0
        %2189 = vmatprep.subr.bf16.mxu0 0
        %2190 = vmatpush1.bf16.msra.mxu0 0
        %2191 = vmatprep.subr.bf16.mxu0 0
        %2192 = vmatpush1.bf16.msra.mxu0 0
        %2193 = vmatprep.mubr.bf16.mxu0 0
        %2194 = vmatmul.mubr.bf16.gmra.mrb[0].mxu0 %v1248
        %v2195 = vpop.f32.mrb[0].mxu0
        %v2196 = vadd.f32 %v2012, %v2195
        %v2197 = vpop.f32.mrb[0].mxu0
        %v2198 = vpop.f32.mrb[0].mxu0
        %v2199 = vpop.f32.mrb[0].mxu0
        %2200 = vdwg.mxu0
        %v2217 = vunpack.c.l.b16 %v1188
        %v2218 = vunpack.c.l.b16 %v1189
        %v2219 = vunpack.c.l.b16 %v1190
        %v2220 = vunpack.c.l.b16 %v1191
        %v2221 = vunpack.c.l.b16 %v1192
        %v2222 = vunpack.c.l.b16 %v1193
        %v2223 = vunpack.c.l.b16 %v1194
        %v2224 = vunpack.c.l.b16 %v1195
        %v2225 = vunpack.c.l.b16 %v1196
        %v2226 = vunpack.c.l.b16 %v1197
        %v2227 = vunpack.c.l.b16 %v1198
        %v2228 = vunpack.c.l.b16 %v1199
        %v2229 = vunpack.c.l.b16 %v1200
        %v2230 = vunpack.c.l.b16 %v1201
        %v2231 = vunpack.c.l.b16 %v1202
        %v2232 = vunpack.c.l.b16 %v1203
        %v2233 = vpack.c.b16 %v2218, %v2217
        %v2234 = vpack.c.b16 %v2220, %v2219
        %v2235 = vpack.c.b16 %v2222, %v2221
        %v2236 = vpack.c.b16 %v2224, %v2223
        %v2237 = vpack.c.b16 %v2226, %v2225
        %v2238 = vpack.c.b16 %v2228, %v2227
        %v2239 = vpack.c.b16 %v2230, %v2229
        %v2240 = vpack.c.b16 %v2232, %v2231
        %2249 = vmatprep.subr.bf16.mxu0 0
        %2250 = vmatpush1.bf16.msra.mxu0 %v2233
        %2251 = vmatprep.subr.bf16.mxu0 0
        %2252 = vmatpush1.bf16.msra.mxu0 %v2234
        %2253 = vmatprep.subr.bf16.mxu0 0
        %2254 = vmatpush1.bf16.msra.mxu0 %v2235
        %2255 = vmatprep.subr.bf16.mxu0 0
        %2256 = vmatpush1.bf16.msra.mxu0 %v2236
        %2257 = vmatprep.subr.bf16.mxu0 0
        %2258 = vmatpush1.bf16.msra.mxu0 %v2237
        %2259 = vmatprep.subr.bf16.mxu0 0
        %2260 = vmatpush1.bf16.msra.mxu0 %v2238
        %2261 = vmatprep.subr.bf16.mxu0 0
        %2262 = vmatpush1.bf16.msra.mxu0 %v2239
        %2263 = vmatprep.subr.bf16.mxu0 0
        %2264 = vmatpush1.bf16.msra.mxu0 %v2240
        %2265 = vmatprep.subr.bf16.mxu0 0
        %2266 = vmatpush1.bf16.msra.mxu0 0
        %2267 = vmatprep.subr.bf16.mxu0 0
        %2268 = vmatpush1.bf16.msra.mxu0 0
        %2269 = vmatprep.subr.bf16.mxu0 0
        %2270 = vmatpush1.bf16.msra.mxu0 0
        %2271 = vmatprep.subr.bf16.mxu0 0
        %2272 = vmatpush1.bf16.msra.mxu0 0
        %2273 = vmatprep.subr.bf16.mxu0 0
        %2274 = vmatpush1.bf16.msra.mxu0 0
        %2275 = vmatprep.subr.bf16.mxu0 0
        %2276 = vmatpush1.bf16.msra.mxu0 0
        %2277 = vmatprep.subr.bf16.mxu0 0
        %2278 = vmatpush1.bf16.msra.mxu0 0
        %2279 = vmatprep.subr.bf16.mxu0 0
        %2280 = vmatpush1.bf16.msra.mxu0 0
        %2281 = vmatprep.mubr.bf16.mxu0 0
        %2282 = vmatmul.mubr.bf16.gmra.mrb[0].mxu0 %v1248
        %v2283 = vpop.f32.mrb[0].mxu0
        %v2284 = vadd.f32 %v2016, %v2283
        %v2285 = vpop.f32.mrb[0].mxu0
        %v2286 = vpop.f32.mrb[0].mxu0
        %v2287 = vpop.f32.mrb[0].mxu0
        %2288 = vdwg.mxu0
        %v2305 = vunpack.c.l.b16 %v1204
        %v2306 = vunpack.c.l.b16 %v1205
        %v2307 = vunpack.c.l.b16 %v1206
        %v2308 = vunpack.c.l.b16 %v1207
        %v2309 = vunpack.c.l.b16 %v1208
        %v2310 = vunpack.c.l.b16 %v1209
        %v2311 = vunpack.c.l.b16 %v1210
        %v2312 = vunpack.c.l.b16 %v1211
        %v2313 = vunpack.c.l.b16 %v1212
        %v2314 = vunpack.c.l.b16 %v1213
        %v2315 = vunpack.c.l.b16 %v1214
        %v2316 = vunpack.c.l.b16 %v1215
        %v2317 = vunpack.c.l.b16 %v1216
        %v2318 = vunpack.c.l.b16 %v1217
        %v2319 = vunpack.c.l.b16 %v1218
        %v2320 = vunpack.c.l.b16 %v1219
        %v2321 = vpack.c.b16 %v2306, %v2305
        %v2322 = vpack.c.b16 %v2308, %v2307
        %v2323 = vpack.c.b16 %v2310, %v2309
        %v2324 = vpack.c.b16 %v2312, %v2311
        %v2325 = vpack.c.b16 %v2314, %v2313
        %v2326 = vpack.c.b16 %v2316, %v2315
        %v2327 = vpack.c.b16 %v2318, %v2317
        %v2328 = vpack.c.b16 %v2320, %v2319
        %2337 = vmatprep.subr.bf16.mxu0 0
        %2338 = vmatpush1.bf16.msra.mxu0 %v2321
        %2339 = vmatprep.subr.bf16.mxu0 0
        %2340 = vmatpush1.bf16.msra.mxu0 %v2322
        %2341 = vmatprep.subr.bf16.mxu0 0
        %2342 = vmatpush1.bf16.msra.mxu0 %v2323
        %2343 = vmatprep.subr.bf16.mxu0 0
        %2344 = vmatpush1.bf16.msra.mxu0 %v2324
        %2345 = vmatprep.subr.bf16.mxu0 0
        %2346 = vmatpush1.bf16.msra.mxu0 %v2325
        %2347 = vmatprep.subr.bf16.mxu0 0
        %2348 = vmatpush1.bf16.msra.mxu0 %v2326
        %2349 = vmatprep.subr.bf16.mxu0 0
        %2350 = vmatpush1.bf16.msra.mxu0 %v2327
        %2351 = vmatprep.subr.bf16.mxu0 0
        %2352 = vmatpush1.bf16.msra.mxu0 %v2328
        %2353 = vmatprep.subr.bf16.mxu0 0
        %2354 = vmatpush1.bf16.msra.mxu0 0
        %2355 = vmatprep.subr.bf16.mxu0 0
        %2356 = vmatpush1.bf16.msra.mxu0 0
        %2357 = vmatprep.subr.bf16.mxu0 0
        %2358 = vmatpush1.bf16.msra.mxu0 0
        %2359 = vmatprep.subr.bf16.mxu0 0
        %2360 = vmatpush1.bf16.msra.mxu0 0
        %2361 = vmatprep.subr.bf16.mxu0 0
        %2362 = vmatpush1.bf16.msra.mxu0 0
        %2363 = vmatprep.subr.bf16.mxu0 0
        %2364 = vmatpush1.bf16.msra.mxu0 0
        %2365 = vmatprep.subr.bf16.mxu0 0
        %2366 = vmatpush1.bf16.msra.mxu0 0
        %2367 = vmatprep.subr.bf16.mxu0 0
        %2368 = vmatpush1.bf16.msra.mxu0 0
        %2369 = vmatprep.mubr.bf16.mxu0 0
        %2370 = vmatmul.mubr.bf16.gmra.mrb[0].mxu0 %v1248
        %v2371 = vpop.f32.mrb[0].mxu0
        %v2372 = vadd.f32 %v2020, %v2371
        %v2373 = vpop.f32.mrb[0].mxu0
        %v2374 = vpop.f32.mrb[0].mxu0
        %v2375 = vpop.f32.mrb[0].mxu0
        %2376 = vdwg.mxu0
        %v2377 = vpack.c.bf16 %v1356, %v1356
        %v2378 = vpack.c.bf16 %v1444, %v1444
        %v2379 = vpack.c.bf16 %v1532, %v1532
        %v2380 = vpack.c.bf16 %v1620, %v1620
        %v2381 = vpack.c.bf16 %v1732, %v1732
        %v2382 = vpack.c.bf16 %v1820, %v1820
        %v2383 = vpack.c.bf16 %v1908, %v1908
        %v2384 = vpack.c.bf16 %v1996, %v1996
        %v2385 = vld [vmem:[%s1] sm:$0x1]
        %v2387 = vlaneseq
        %v2388 = vshrl.u32 %v2387, 7
        %v2389 = vsub.s32 0, %v2388
        %v2390 = vrot.slane %v2385, %v2389
        %vm2392 = vcmask 261120
        %v2394 = vsel %vm2392, %v2377, 0
        %v2397 = vsel %vm2392, %v2381, 0
        %2399 = vmatprep.subr.bf16.mxu0 0
        %2400 = vmatpush1.bf16.xpose.msra.mxu0 %v2397
        %2401 = vmatprep.subr.bf16.mxu0 0
        %2402 = vmatpush1.bf16.xpose.msra.mxu0 0
        %2403 = vmatprep.subr.bf16.mxu0 0
        %2404 = vmatpush1.bf16.xpose.msra.mxu0 0
        %2405 = vmatprep.subr.bf16.mxu0 0
        %2406 = vmatpush1.bf16.xpose.msra.mxu0 0
        %2407 = vmatprep.subr.bf16.mxu0 0
        %2408 = vmatpush1.bf16.xpose.msra.mxu0 0
        %2409 = vmatprep.subr.bf16.mxu0 0
        %2410 = vmatpush1.bf16.xpose.msra.mxu0 0
        %2411 = vmatprep.subr.bf16.mxu0 0
        %2412 = vmatpush1.bf16.xpose.msra.mxu0 0
        %2413 = vmatprep.subr.bf16.mxu0 0
        %2414 = vmatpush1.bf16.xpose.msra.mxu0 0
        %2415 = vmatprep.subr.bf16.mxu0 0
        %2416 = vmatpush1.bf16.xpose.msra.mxu0 0
        %2417 = vmatprep.subr.bf16.mxu0 0
        %2418 = vmatpush1.bf16.xpose.msra.mxu0 0
        %2419 = vmatprep.subr.bf16.mxu0 0
        %2420 = vmatpush1.bf16.xpose.msra.mxu0 0
        %2421 = vmatprep.subr.bf16.mxu0 0
        %2422 = vmatpush1.bf16.xpose.msra.mxu0 0
        %2423 = vmatprep.subr.bf16.mxu0 0
        %2424 = vmatpush1.bf16.xpose.msra.mxu0 0
        %2425 = vmatprep.subr.bf16.mxu0 0
        %2426 = vmatpush1.bf16.xpose.msra.mxu0 0
        %2427 = vmatprep.subr.bf16.mxu0 0
        %2428 = vmatpush1.bf16.xpose.msra.mxu0 0
        %2429 = vmatprep.subr.bf16.mxu0 0
        %2430 = vmatpush1.bf16.xpose.msra.mxu0 0
        %2431 = vmatprep.mubr.bf16.mxu0 0
        %2432 = vmatmul.mubr.bf16.gmra.mrb[0].mxu0 %v2394
        %v2433 = vpop.f32.mrb[0].mxu0
        %v2434 = vadd.f32 %v2390, %v2433
        %v2435 = vpop.f32.mrb[0].mxu0
        %v2436 = vpop.f32.mrb[0].mxu0
        %v2437 = vpop.f32.mrb[0].mxu0
        %2438 = vdwg.mxu0
        %v2440 = vsel %vm2392, %v2378, 0
        %v2443 = vsel %vm2392, %v2382, 0
        %2445 = vmatprep.subr.bf16.mxu0 0
        %2446 = vmatpush1.bf16.xpose.msra.mxu0 %v2443
        %2447 = vmatprep.subr.bf16.mxu0 0
        %2448 = vmatpush1.bf16.xpose.msra.mxu0 0
        %2449 = vmatprep.subr.bf16.mxu0 0
        %2450 = vmatpush1.bf16.xpose.msra.mxu0 0
        %2451 = vmatprep.subr.bf16.mxu0 0
        %2452 = vmatpush1.bf16.xpose.msra.mxu0 0
        %2453 = vmatprep.subr.bf16.mxu0 0
        %2454 = vmatpush1.bf16.xpose.msra.mxu0 0
        %2455 = vmatprep.subr.bf16.mxu0 0
        %2456 = vmatpush1.bf16.xpose.msra.mxu0 0
        %2457 = vmatprep.subr.bf16.mxu0 0
        %2458 = vmatpush1.bf16.xpose.msra.mxu0 0
        %2459 = vmatprep.subr.bf16.mxu0 0
        %2460 = vmatpush1.bf16.xpose.msra.mxu0 0
        %2461 = vmatprep.subr.bf16.mxu0 0
        %2462 = vmatpush1.bf16.xpose.msra.mxu0 0
        %2463 = vmatprep.subr.bf16.mxu0 0
        %2464 = vmatpush1.bf16.xpose.msra.mxu0 0
        %2465 = vmatprep.subr.bf16.mxu0 0
        %2466 = vmatpush1.bf16.xpose.msra.mxu0 0
        %2467 = vmatprep.subr.bf16.mxu0 0
        %2468 = vmatpush1.bf16.xpose.msra.mxu0 0
        %2469 = vmatprep.subr.bf16.mxu0 0
        %2470 = vmatpush1.bf16.xpose.msra.mxu0 0
        %2471 = vmatprep.subr.bf16.mxu0 0
        %2472 = vmatpush1.bf16.xpose.msra.mxu0 0
        %2473 = vmatprep.subr.bf16.mxu0 0
        %2474 = vmatpush1.bf16.xpose.msra.mxu0 0
        %2475 = vmatprep.subr.bf16.mxu0 0
        %2476 = vmatpush1.bf16.xpose.msra.mxu0 0
        %2477 = vmatprep.mubr.bf16.mxu0 0
        %2478 = vmatmul.mubr.bf16.gmra.mrb[0].mxu0 %v2440
        %v2479 = vpop.f32.mrb[0].mxu0
        %v2480 = vadd.f32 %v2390, %v2479
        %v2481 = vpop.f32.mrb[0].mxu0
        %v2482 = vpop.f32.mrb[0].mxu0
        %v2483 = vpop.f32.mrb[0].mxu0
        %2484 = vdwg.mxu0
        %v2486 = vsel %vm2392, %v2379, 0
        %v2489 = vsel %vm2392, %v2383, 0
        %2491 = vmatprep.subr.bf16.mxu0 0
        %2492 = vmatpush1.bf16.xpose.msra.mxu0 %v2489
        %2493 = vmatprep.subr.bf16.mxu0 0
        %2494 = vmatpush1.bf16.xpose.msra.mxu0 0
        %2495 = vmatprep.subr.bf16.mxu0 0
        %2496 = vmatpush1.bf16.xpose.msra.mxu0 0
        %2497 = vmatprep.subr.bf16.mxu0 0
        %2498 = vmatpush1.bf16.xpose.msra.mxu0 0
        %2499 = vmatprep.subr.bf16.mxu0 0
        %2500 = vmatpush1.bf16.xpose.msra.mxu0 0
        %2501 = vmatprep.subr.bf16.mxu0 0
        %2502 = vmatpush1.bf16.xpose.msra.mxu0 0
        %2503 = vmatprep.subr.bf16.mxu0 0
        %2504 = vmatpush1.bf16.xpose.msra.mxu0 0
        %2505 = vmatprep.subr.bf16.mxu0 0
        %2506 = vmatpush1.bf16.xpose.msra.mxu0 0
        %2507 = vmatprep.subr.bf16.mxu0 0
        %2508 = vmatpush1.bf16.xpose.msra.mxu0 0
        %2509 = vmatprep.subr.bf16.mxu0 0
        %2510 = vmatpush1.bf16.xpose.msra.mxu0 0
        %2511 = vmatprep.subr.bf16.mxu0 0
        %2512 = vmatpush1.bf16.xpose.msra.mxu0 0
        %2513 = vmatprep.subr.bf16.mxu0 0
        %2514 = vmatpush1.bf16.xpose.msra.mxu0 0
        %2515 = vmatprep.subr.bf16.mxu0 0
        %2516 = vmatpush1.bf16.xpose.msra.mxu0 0
        %2517 = vmatprep.subr.bf16.mxu0 0
        %2518 = vmatpush1.bf16.xpose.msra.mxu0 0
        %2519 = vmatprep.subr.bf16.mxu0 0
        %2520 = vmatpush1.bf16.xpose.msra.mxu0 0
        %2521 = vmatprep.subr.bf16.mxu0 0
        %2522 = vmatpush1.bf16.xpose.msra.mxu0 0
        %2523 = vmatprep.mubr.bf16.mxu0 0
        %2524 = vmatmul.mubr.bf16.gmra.mrb[0].mxu0 %v2486
        %v2525 = vpop.f32.mrb[0].mxu0
        %v2526 = vadd.f32 %v2390, %v2525
        %v2527 = vpop.f32.mrb[0].mxu0
        %v2528 = vpop.f32.mrb[0].mxu0
        %v2529 = vpop.f32.mrb[0].mxu0
        %2530 = vdwg.mxu0
        %v2532 = vsel %vm2392, %v2380, 0
        %v2535 = vsel %vm2392, %v2384, 0
        %2537 = vmatprep.subr.bf16.mxu0 0
        %2538 = vmatpush1.bf16.xpose.msra.mxu0 %v2535
        %2539 = vmatprep.subr.bf16.mxu0 0
        %2540 = vmatpush1.bf16.xpose.msra.mxu0 0
        %2541 = vmatprep.subr.bf16.mxu0 0
        %2542 = vmatpush1.bf16.xpose.msra.mxu0 0
        %2543 = vmatprep.subr.bf16.mxu0 0
        %2544 = vmatpush1.bf16.xpose.msra.mxu0 0
        %2545 = vmatprep.subr.bf16.mxu0 0
        %2546 = vmatpush1.bf16.xpose.msra.mxu0 0
        %2547 = vmatprep.subr.bf16.mxu0 0
        %2548 = vmatpush1.bf16.xpose.msra.mxu0 0
        %2549 = vmatprep.subr.bf16.mxu0 0
        %2550 = vmatpush1.bf16.xpose.msra.mxu0 0
        %2551 = vmatprep.subr.bf16.mxu0 0
        %2552 = vmatpush1.bf16.xpose.msra.mxu0 0
        %2553 = vmatprep.subr.bf16.mxu0 0
        %2554 = vmatpush1.bf16.xpose.msra.mxu0 0
        %2555 = vmatprep.subr.bf16.mxu0 0
        %2556 = vmatpush1.bf16.xpose.msra.mxu0 0
        %2557 = vmatprep.subr.bf16.mxu0 0
        %2558 = vmatpush1.bf16.xpose.msra.mxu0 0
        %2559 = vmatprep.subr.bf16.mxu0 0
        %2560 = vmatpush1.bf16.xpose.msra.mxu0 0
        %2561 = vmatprep.subr.bf16.mxu0 0
        %2562 = vmatpush1.bf16.xpose.msra.mxu0 0
        %2563 = vmatprep.subr.bf16.mxu0 0
        %2564 = vmatpush1.bf16.xpose.msra.mxu0 0
        %2565 = vmatprep.subr.bf16.mxu0 0
        %2566 = vmatpush1.bf16.xpose.msra.mxu0 0
        %2567 = vmatprep.subr.bf16.mxu0 0
        %2568 = vmatpush1.bf16.xpose.msra.mxu0 0
        %2569 = vmatprep.mubr.bf16.mxu0 0
        %2570 = vmatmul.mubr.bf16.gmra.mrb[0].mxu0 %v2532
        %v2571 = vpop.f32.mrb[0].mxu0
        %v2572 = vadd.f32 %v2390, %v2571
        %v2573 = vpop.f32.mrb[0].mxu0
        %v2574 = vpop.f32.mrb[0].mxu0
        %v2575 = vpop.f32.mrb[0].mxu0
        %2576 = vdwg.mxu0
        %vm2577 = vcmask 64512
        %v2578 = vsel %vm2577, %v2434, -inf
        %2579 = vmax.xlane.f32.xlu0 %v2578
        %v2580 = vpop.xlane.xlu0 %2579
        %v2581 = vsel %vm2577, %v2480, -inf
        %2582 = vmax.xlane.f32.xlu0 %v2581
        %v2583 = vpop.xlane.xlu0 %2582
        %v2584 = vsel %vm2577, %v2526, -inf
        %2585 = vmax.xlane.f32.xlu0 %v2584
        %v2586 = vpop.xlane.xlu0 %2585
        %v2587 = vsel %vm2577, %v2572, -inf
        %2588 = vmax.xlane.f32.xlu0 %v2587
        %v2589 = vpop.xlane.xlu0 %2588
        %v2590 = vsub.f32 %v2434, %v2580
        %v2591 = vsub.f32 %v2480, %v2583
        %v2592 = vsub.f32 %v2526, %v2586
        %v2593 = vsub.f32 %v2572, %v2589
        %v2594 = vmul.f32 %v2590, 1.442695
        %v2595 = vpow.pop %v2594
        %v2596 = vmul.f32 %v2591, 1.442695
        %v2597 = vpow.pop %v2596
        %v2598 = vmul.f32 %v2592, 1.442695
        %v2599 = vpow.pop %v2598
        %v2600 = vmul.f32 %v2593, 1.442695
        %v2601 = vpow.pop %v2600
        %v2602 = vsel %vm2577, %v2595, 0.0
        %2603 = vadd.xlane.f32.xlu0 %v2602
        %v2604 = vpop.xlane.xlu0 %2603
        %v2605 = vsel %vm2577, %v2597, 0.0
        %2606 = vadd.xlane.f32.xlu0 %v2605
        %v2607 = vpop.xlane.xlu0 %2606
        %v2608 = vsel %vm2577, %v2599, 0.0
        %2609 = vadd.xlane.f32.xlu0 %v2608
        %v2610 = vpop.xlane.xlu0 %2609
        %v2611 = vsel %vm2577, %v2601, 0.0
        %2612 = vadd.xlane.f32.xlu0 %v2611
        %v2613 = vpop.xlane.xlu0 %2612
        %v2614 = vrcp.pop %v2604
        %v2615 = vrcp.pop %v2607
        %v2616 = vrcp.pop %v2610
        %v2617 = vrcp.pop %v2613
        %v2618 = vmul.f32 %v2595, %v2614
        %v2619 = vmul.f32 %v2597, %v2615
        %v2620 = vmul.f32 %v2599, %v2616
        %v2621 = vmul.f32 %v2601, %v2617
        %v2622 = vpack.c.bf16 %v2618, %v2618
        %v2623 = vpack.c.bf16 %v2619, %v2619
        %v2624 = vpack.c.bf16 %v2620, %v2620
        %v2625 = vpack.c.bf16 %v2621, %v2621
        %v2626 = vpack.c.bf16 %v2108, %v2108
        %v2627 = vpack.c.bf16 %v2196, %v2196
        %v2628 = vpack.c.bf16 %v2284, %v2284
        %v2629 = vpack.c.bf16 %v2372, %v2372
        %v2631 = vsel %vm2577, %v2622, 0
        %vm2633 = vcmask 1043456
        %v2635 = vsel %vm2633, %v2626, 0
        %2637 = vmatprep.subr.bf16.mxu0 0
        %2638 = vmatpush1.bf16.msra.mxu0 %v2635
        %2639 = vmatprep.subr.bf16.mxu0 0
        %2640 = vmatpush1.bf16.msra.mxu0 0
        %2641 = vmatprep.subr.bf16.mxu0 0
        %2642 = vmatpush1.bf16.msra.mxu0 0
        %2643 = vmatprep.subr.bf16.mxu0 0
        %2644 = vmatpush1.bf16.msra.mxu0 0
        %2645 = vmatprep.subr.bf16.mxu0 0
        %2646 = vmatpush1.bf16.msra.mxu0 0
        %2647 = vmatprep.subr.bf16.mxu0 0
        %2648 = vmatpush1.bf16.msra.mxu0 0
        %2649 = vmatprep.subr.bf16.mxu0 0
        %2650 = vmatpush1.bf16.msra.mxu0 0
        %2651 = vmatprep.subr.bf16.mxu0 0
        %2652 = vmatpush1.bf16.msra.mxu0 0
        %2653 = vmatprep.subr.bf16.mxu0 0
        %2654 = vmatpush1.bf16.msra.mxu0 0
        %2655 = vmatprep.subr.bf16.mxu0 0
        %2656 = vmatpush1.bf16.msra.mxu0 0
        %2657 = vmatprep.subr.bf16.mxu0 0
        %2658 = vmatpush1.bf16.msra.mxu0 0
        %2659 = vmatprep.subr.bf16.mxu0 0
        %2660 = vmatpush1.bf16.msra.mxu0 0
        %2661 = vmatprep.subr.bf16.mxu0 0
        %2662 = vmatpush1.bf16.msra.mxu0 0
        %2663 = vmatprep.subr.bf16.mxu0 0
        %2664 = vmatpush1.bf16.msra.mxu0 0
        %2665 = vmatprep.subr.bf16.mxu0 0
        %2666 = vmatpush1.bf16.msra.mxu0 0
        %2667 = vmatprep.subr.bf16.mxu0 0
        %2668 = vmatpush1.bf16.msra.mxu0 0
        %2669 = vmatprep.mubr.bf16.mxu0 0
        %2670 = vmatmul.mubr.bf16.gmra.mrb[0].mxu0 %v2631
        %v2671 = vpop.f32.mrb[0].mxu0
        %v2672 = vadd.f32 0.0, %v2671
        %v2673 = vpop.f32.mrb[0].mxu0
        %v2674 = vpop.f32.mrb[0].mxu0
        %v2675 = vpop.f32.mrb[0].mxu0
        %2676 = vdwg.mxu0
        %v2678 = vsel %vm2577, %v2623, 0
        %v2681 = vsel %vm2633, %v2627, 0
        %2683 = vmatprep.subr.bf16.mxu0 0
        %2684 = vmatpush1.bf16.msra.mxu0 %v2681
        %2685 = vmatprep.subr.bf16.mxu0 0
        %2686 = vmatpush1.bf16.msra.mxu0 0
        %2687 = vmatprep.subr.bf16.mxu0 0
        %2688 = vmatpush1.bf16.msra.mxu0 0
        %2689 = vmatprep.subr.bf16.mxu0 0
        %2690 = vmatpush1.bf16.msra.mxu0 0
        %2691 = vmatprep.subr.bf16.mxu0 0
        %2692 = vmatpush1.bf16.msra.mxu0 0
        %2693 = vmatprep.subr.bf16.mxu0 0
        %2694 = vmatpush1.bf16.msra.mxu0 0
        %2695 = vmatprep.subr.bf16.mxu0 0
        %2696 = vmatpush1.bf16.msra.mxu0 0
        %2697 = vmatprep.subr.bf16.mxu0 0
        %2698 = vmatpush1.bf16.msra.mxu0 0
        %2699 = vmatprep.subr.bf16.mxu0 0
        %2700 = vmatpush1.bf16.msra.mxu0 0
        %2701 = vmatprep.subr.bf16.mxu0 0
        %2702 = vmatpush1.bf16.msra.mxu0 0
        %2703 = vmatprep.subr.bf16.mxu0 0
        %2704 = vmatpush1.bf16.msra.mxu0 0
        %2705 = vmatprep.subr.bf16.mxu0 0
        %2706 = vmatpush1.bf16.msra.mxu0 0
        %2707 = vmatprep.subr.bf16.mxu0 0
        %2708 = vmatpush1.bf16.msra.mxu0 0
        %2709 = vmatprep.subr.bf16.mxu0 0
        %2710 = vmatpush1.bf16.msra.mxu0 0
        %2711 = vmatprep.subr.bf16.mxu0 0
        %2712 = vmatpush1.bf16.msra.mxu0 0
        %2713 = vmatprep.subr.bf16.mxu0 0
        %2714 = vmatpush1.bf16.msra.mxu0 0
        %2715 = vmatprep.mubr.bf16.mxu0 0
        %2716 = vmatmul.mubr.bf16.gmra.mrb[0].mxu0 %v2678
        %v2717 = vpop.f32.mrb[0].mxu0
        %v2718 = vadd.f32 0.0, %v2717
        %v2719 = vpop.f32.mrb[0].mxu0
        %v2720 = vpop.f32.mrb[0].mxu0
        %v2721 = vpop.f32.mrb[0].mxu0
        %2722 = vdwg.mxu0
        %v2724 = vsel %vm2577, %v2624, 0
        %v2727 = vsel %vm2633, %v2628, 0
        %2729 = vmatprep.subr.bf16.mxu0 0
        %2730 = vmatpush1.bf16.msra.mxu0 %v2727
        %2731 = vmatprep.subr.bf16.mxu0 0
        %2732 = vmatpush1.bf16.msra.mxu0 0
        %2733 = vmatprep.subr.bf16.mxu0 0
        %2734 = vmatpush1.bf16.msra.mxu0 0
        %2735 = vmatprep.subr.bf16.mxu0 0
        %2736 = vmatpush1.bf16.msra.mxu0 0
        %2737 = vmatprep.subr.bf16.mxu0 0
        %2738 = vmatpush1.bf16.msra.mxu0 0
        %2739 = vmatprep.subr.bf16.mxu0 0
        %2740 = vmatpush1.bf16.msra.mxu0 0
        %2741 = vmatprep.subr.bf16.mxu0 0
        %2742 = vmatpush1.bf16.msra.mxu0 0
        %2743 = vmatprep.subr.bf16.mxu0 0
        %2744 = vmatpush1.bf16.msra.mxu0 0
        %2745 = vmatprep.subr.bf16.mxu0 0
        %2746 = vmatpush1.bf16.msra.mxu0 0
        %2747 = vmatprep.subr.bf16.mxu0 0
        %2748 = vmatpush1.bf16.msra.mxu0 0
        %2749 = vmatprep.subr.bf16.mxu0 0
        %2750 = vmatpush1.bf16.msra.mxu0 0
        %2751 = vmatprep.subr.bf16.mxu0 0
        %2752 = vmatpush1.bf16.msra.mxu0 0
        %2753 = vmatprep.subr.bf16.mxu0 0
        %2754 = vmatpush1.bf16.msra.mxu0 0
        %2755 = vmatprep.subr.bf16.mxu0 0
        %2756 = vmatpush1.bf16.msra.mxu0 0
        %2757 = vmatprep.subr.bf16.mxu0 0
        %2758 = vmatpush1.bf16.msra.mxu0 0
        %2759 = vmatprep.subr.bf16.mxu0 0
        %2760 = vmatpush1.bf16.msra.mxu0 0
        %2761 = vmatprep.mubr.bf16.mxu0 0
        %2762 = vmatmul.mubr.bf16.gmra.mrb[0].mxu0 %v2724
        %v2763 = vpop.f32.mrb[0].mxu0
        %v2764 = vadd.f32 0.0, %v2763
        %v2765 = vpop.f32.mrb[0].mxu0
        %v2766 = vpop.f32.mrb[0].mxu0
        %v2767 = vpop.f32.mrb[0].mxu0
        %2768 = vdwg.mxu0
        %v2770 = vsel %vm2577, %v2625, 0
        %v2773 = vsel %vm2633, %v2629, 0
        %2775 = vmatprep.subr.bf16.mxu0 0
        %2776 = vmatpush1.bf16.msra.mxu0 %v2773
        %2777 = vmatprep.subr.bf16.mxu0 0
        %2778 = vmatpush1.bf16.msra.mxu0 0
        %2779 = vmatprep.subr.bf16.mxu0 0
        %2780 = vmatpush1.bf16.msra.mxu0 0
        %2781 = vmatprep.subr.bf16.mxu0 0
        %2782 = vmatpush1.bf16.msra.mxu0 0
        %2783 = vmatprep.subr.bf16.mxu0 0
        %2784 = vmatpush1.bf16.msra.mxu0 0
        %2785 = vmatprep.subr.bf16.mxu0 0
        %2786 = vmatpush1.bf16.msra.mxu0 0
        %2787 = vmatprep.subr.bf16.mxu0 0
        %2788 = vmatpush1.bf16.msra.mxu0 0
        %2789 = vmatprep.subr.bf16.mxu0 0
        %2790 = vmatpush1.bf16.msra.mxu0 0
        %2791 = vmatprep.subr.bf16.mxu0 0
        %2792 = vmatpush1.bf16.msra.mxu0 0
        %2793 = vmatprep.subr.bf16.mxu0 0
        %2794 = vmatpush1.bf16.msra.mxu0 0
        %2795 = vmatprep.subr.bf16.mxu0 0
        %2796 = vmatpush1.bf16.msra.mxu0 0
        %2797 = vmatprep.subr.bf16.mxu0 0
        %2798 = vmatpush1.bf16.msra.mxu0 0
        %2799 = vmatprep.subr.bf16.mxu0 0
        %2800 = vmatpush1.bf16.msra.mxu0 0
        %2801 = vmatprep.subr.bf16.mxu0 0
        %2802 = vmatpush1.bf16.msra.mxu0 0
        %2803 = vmatprep.subr.bf16.mxu0 0
        %2804 = vmatpush1.bf16.msra.mxu0 0
        %2805 = vmatprep.subr.bf16.mxu0 0
        %2806 = vmatpush1.bf16.msra.mxu0 0
        %2807 = vmatprep.mubr.bf16.mxu0 0
        %2808 = vmatmul.mubr.bf16.gmra.mrb[0].mxu0 %v2770
        %v2809 = vpop.f32.mrb[0].mxu0
        %v2810 = vadd.f32 0.0, %v2809
        %v2811 = vpop.f32.mrb[0].mxu0
        %v2812 = vpop.f32.mrb[0].mxu0
        %v2813 = vpop.f32.mrb[0].mxu0
        %2814 = vdwg.mxu0
        %v2815 = vpack.c.bf16 %v2672, %v2672
        %v2816 = vpack.c.bf16 %v2718, %v2718
        %v2817 = vpack.c.bf16 %v2764, %v2764
        %v2818 = vpack.c.bf16 %v2810, %v2810
        %v2823 = vunpack.c.l.b16 %v1232
        %v2824 = vunpack.c.l.b16 %v1233
        %v2825 = vunpack.c.l.b16 %v1234
        %v2826 = vunpack.c.l.b16 %v1235
        %v2827 = vpack.c.b16 %v2824, %v2823
        %v2828 = vpack.c.b16 %v2826, %v2825
        %v2832 = vsel %vm2392, %v2815, 0
        %2834 = vmatprep.subr.bf16.mxu0 0
        %2835 = vmatpush1.bf16.msra.mxu0 %v2827
        %2836 = vmatprep.subr.bf16.mxu0 0
        %2837 = vmatpush1.bf16.msra.mxu0 %v2828
        %2838 = vmatprep.subr.bf16.mxu0 0
        %2839 = vmatpush1.bf16.msra.mxu0 0
        %2840 = vmatprep.subr.bf16.mxu0 0
        %2841 = vmatpush1.bf16.msra.mxu0 0
        %2842 = vmatprep.subr.bf16.mxu0 0
        %2843 = vmatpush1.bf16.msra.mxu0 0
        %2844 = vmatprep.subr.bf16.mxu0 0
        %2845 = vmatpush1.bf16.msra.mxu0 0
        %2846 = vmatprep.subr.bf16.mxu0 0
        %2847 = vmatpush1.bf16.msra.mxu0 0
        %2848 = vmatprep.subr.bf16.mxu0 0
        %2849 = vmatpush1.bf16.msra.mxu0 0
        %2850 = vmatprep.subr.bf16.mxu0 0
        %2851 = vmatpush1.bf16.msra.mxu0 0
        %2852 = vmatprep.subr.bf16.mxu0 0
        %2853 = vmatpush1.bf16.msra.mxu0 0
        %2854 = vmatprep.subr.bf16.mxu0 0
        %2855 = vmatpush1.bf16.msra.mxu0 0
        %2856 = vmatprep.subr.bf16.mxu0 0
        %2857 = vmatpush1.bf16.msra.mxu0 0
        %2858 = vmatprep.subr.bf16.mxu0 0
        %2859 = vmatpush1.bf16.msra.mxu0 0
        %2860 = vmatprep.subr.bf16.mxu0 0
        %2861 = vmatpush1.bf16.msra.mxu0 0
        %2862 = vmatprep.subr.bf16.mxu0 0
        %2863 = vmatpush1.bf16.msra.mxu0 0
        %2864 = vmatprep.subr.bf16.mxu0 0
        %2865 = vmatpush1.bf16.msra.mxu0 0
        %2866 = vmatprep.mubr.bf16.mxu0 0
        %2867 = vmatmul.mubr.bf16.gmra.mrb[0].mxu0 %v2832
        %v2868 = vpop.f32.mrb[0].mxu0
        %v2869 = vadd.f32 0.0, %v2868
        %v2870 = vpop.f32.mrb[0].mxu0
        %v2871 = vpop.f32.mrb[0].mxu0
        %v2872 = vpop.f32.mrb[0].mxu0
        %2873 = vdwg.mxu0
        %v2878 = vunpack.c.l.b16 %v1236
        %v2879 = vunpack.c.l.b16 %v1237
        %v2880 = vunpack.c.l.b16 %v1238
        %v2881 = vunpack.c.l.b16 %v1239
        %v2882 = vpack.c.b16 %v2879, %v2878
        %v2883 = vpack.c.b16 %v2881, %v2880
        %v2887 = vsel %vm2392, %v2816, 0
        %2889 = vmatprep.subr.bf16.mxu0 0
        %2890 = vmatpush1.bf16.msra.mxu0 %v2882
        %2891 = vmatprep.subr.bf16.mxu0 0
        %2892 = vmatpush1.bf16.msra.mxu0 %v2883
        %2893 = vmatprep.subr.bf16.mxu0 0
        %2894 = vmatpush1.bf16.msra.mxu0 0
        %2895 = vmatprep.subr.bf16.mxu0 0
        %2896 = vmatpush1.bf16.msra.mxu0 0
        %2897 = vmatprep.subr.bf16.mxu0 0
        %2898 = vmatpush1.bf16.msra.mxu0 0
        %2899 = vmatprep.subr.bf16.mxu0 0
        %2900 = vmatpush1.bf16.msra.mxu0 0
        %2901 = vmatprep.subr.bf16.mxu0 0
        %2902 = vmatpush1.bf16.msra.mxu0 0
        %2903 = vmatprep.subr.bf16.mxu0 0
        %2904 = vmatpush1.bf16.msra.mxu0 0
        %2905 = vmatprep.subr.bf16.mxu0 0
        %2906 = vmatpush1.bf16.msra.mxu0 0
        %2907 = vmatprep.subr.bf16.mxu0 0
        %2908 = vmatpush1.bf16.msra.mxu0 0
        %2909 = vmatprep.subr.bf16.mxu0 0
        %2910 = vmatpush1.bf16.msra.mxu0 0
        %2911 = vmatprep.subr.bf16.mxu0 0
        %2912 = vmatpush1.bf16.msra.mxu0 0
        %2913 = vmatprep.subr.bf16.mxu0 0
        %2914 = vmatpush1.bf16.msra.mxu0 0
        %2915 = vmatprep.subr.bf16.mxu0 0
        %2916 = vmatpush1.bf16.msra.mxu0 0
        %2917 = vmatprep.subr.bf16.mxu0 0
        %2918 = vmatpush1.bf16.msra.mxu0 0
        %2919 = vmatprep.subr.bf16.mxu0 0
        %2920 = vmatpush1.bf16.msra.mxu0 0
        %2921 = vmatprep.mubr.bf16.mxu0 0
        %2922 = vmatmul.mubr.bf16.gmra.mrb[0].mxu0 %v2887
        %v2923 = vpop.f32.mrb[0].mxu0
        %v2924 = vadd.f32 0.0, %v2923
        %v2925 = vpop.f32.mrb[0].mxu0
        %v2926 = vpop.f32.mrb[0].mxu0
        %v2927 = vpop.f32.mrb[0].mxu0
        %2928 = vdwg.mxu0
        %v2933 = vunpack.c.l.b16 %v1240
        %v2934 = vunpack.c.l.b16 %v1241
        %v2935 = vunpack.c.l.b16 %v1242
        %v2936 = vunpack.c.l.b16 %v1243
        %v2937 = vpack.c.b16 %v2934, %v2933
        %v2938 = vpack.c.b16 %v2936, %v2935
        %v2942 = vsel %vm2392, %v2817, 0
        %2944 = vmatprep.subr.bf16.mxu0 0
        %2945 = vmatpush1.bf16.msra.mxu0 %v2937
        %2946 = vmatprep.subr.bf16.mxu0 0
        %2947 = vmatpush1.bf16.msra.mxu0 %v2938
        %2948 = vmatprep.subr.bf16.mxu0 0
        %2949 = vmatpush1.bf16.msra.mxu0 0
        %2950 = vmatprep.subr.bf16.mxu0 0
        %2951 = vmatpush1.bf16.msra.mxu0 0
        %2952 = vmatprep.subr.bf16.mxu0 0
        %2953 = vmatpush1.bf16.msra.mxu0 0
        %2954 = vmatprep.subr.bf16.mxu0 0
        %2955 = vmatpush1.bf16.msra.mxu0 0
        %2956 = vmatprep.subr.bf16.mxu0 0
        %2957 = vmatpush1.bf16.msra.mxu0 0
        %2958 = vmatprep.subr.bf16.mxu0 0
        %2959 = vmatpush1.bf16.msra.mxu0 0
        %2960 = vmatprep.subr.bf16.mxu0 0
        %2961 = vmatpush1.bf16.msra.mxu0 0
        %2962 = vmatprep.subr.bf16.mxu0 0
        %2963 = vmatpush1.bf16.msra.mxu0 0
        %2964 = vmatprep.subr.bf16.mxu0 0
        %2965 = vmatpush1.bf16.msra.mxu0 0
        %2966 = vmatprep.subr.bf16.mxu0 0
        %2967 = vmatpush1.bf16.msra.mxu0 0
        %2968 = vmatprep.subr.bf16.mxu0 0
        %2969 = vmatpush1.bf16.msra.mxu0 0
        %2970 = vmatprep.subr.bf16.mxu0 0
        %2971 = vmatpush1.bf16.msra.mxu0 0
        %2972 = vmatprep.subr.bf16.mxu0 0
        %2973 = vmatpush1.bf16.msra.mxu0 0
        %2974 = vmatprep.subr.bf16.mxu0 0
        %2975 = vmatpush1.bf16.msra.mxu0 0
        %2976 = vmatprep.mubr.bf16.mxu0 0
        %2977 = vmatmul.mubr.bf16.gmra.mrb[0].mxu0 %v2942
        %v2978 = vpop.f32.mrb[0].mxu0
        %v2979 = vadd.f32 0.0, %v2978
        %v2980 = vpop.f32.mrb[0].mxu0
        %v2981 = vpop.f32.mrb[0].mxu0
        %v2982 = vpop.f32.mrb[0].mxu0
        %2983 = vdwg.mxu0
        %v2988 = vunpack.c.l.b16 %v1244
        %v2989 = vunpack.c.l.b16 %v1245
        %v2990 = vunpack.c.l.b16 %v1246
        %v2991 = vunpack.c.l.b16 %v1247
        %v2992 = vpack.c.b16 %v2989, %v2988
        %v2993 = vpack.c.b16 %v2991, %v2990
        %v2997 = vsel %vm2392, %v2818, 0
        %2999 = vmatprep.subr.bf16.mxu0 0
        %3000 = vmatpush1.bf16.msra.mxu0 %v2992
        %3001 = vmatprep.subr.bf16.mxu0 0
        %3002 = vmatpush1.bf16.msra.mxu0 %v2993
        %3003 = vmatprep.subr.bf16.mxu0 0
        %3004 = vmatpush1.bf16.msra.mxu0 0
        %3005 = vmatprep.subr.bf16.mxu0 0
        %3006 = vmatpush1.bf16.msra.mxu0 0
        %3007 = vmatprep.subr.bf16.mxu0 0
        %3008 = vmatpush1.bf16.msra.mxu0 0
        %3009 = vmatprep.subr.bf16.mxu0 0
        %3010 = vmatpush1.bf16.msra.mxu0 0
        %3011 = vmatprep.subr.bf16.mxu0 0
        %3012 = vmatpush1.bf16.msra.mxu0 0
        %3013 = vmatprep.subr.bf16.mxu0 0
        %3014 = vmatpush1.bf16.msra.mxu0 0
        %3015 = vmatprep.subr.bf16.mxu0 0
        %3016 = vmatpush1.bf16.msra.mxu0 0
        %3017 = vmatprep.subr.bf16.mxu0 0
        %3018 = vmatpush1.bf16.msra.mxu0 0
        %3019 = vmatprep.subr.bf16.mxu0 0
        %3020 = vmatpush1.bf16.msra.mxu0 0
        %3021 = vmatprep.subr.bf16.mxu0 0
        %3022 = vmatpush1.bf16.msra.mxu0 0
        %3023 = vmatprep.subr.bf16.mxu0 0
        %3024 = vmatpush1.bf16.msra.mxu0 0
        %3025 = vmatprep.subr.bf16.mxu0 0
        %3026 = vmatpush1.bf16.msra.mxu0 0
        %3027 = vmatprep.subr.bf16.mxu0 0
        %3028 = vmatpush1.bf16.msra.mxu0 0
        %3029 = vmatprep.subr.bf16.mxu0 0
        %3030 = vmatpush1.bf16.msra.mxu0 0
        %3031 = vmatprep.mubr.bf16.mxu0 0
        %3032 = vmatmul.mubr.bf16.gmra.mrb[0].mxu0 %v2997
        %v3033 = vpop.f32.mrb[0].mxu0
        %v3034 = vadd.f32 0.0, %v3033
        %v3035 = vpop.f32.mrb[0].mxu0
        %v3036 = vpop.f32.mrb[0].mxu0
        %v3037 = vpop.f32.mrb[0].mxu0
        %3038 = vdwg.mxu0
        %v3039 = vadd.f32 %v2869, %v2924
        %v3040 = vadd.f32 %v3039, %v2979
        %v3041 = vadd.f32 %v3040, %v3034
        %v3042 = vpack.c.bf16 %v1027, %v1027
        %3043 = vmatprep.subr.bf16.mxu0 0
        %3044 = vmatpush1.bf16.msra.mxu0 %v1305
        %3045 = vmatprep.subr.bf16.mxu0 0
        %3046 = vmatpush1.bf16.msra.mxu0 %v1306
        %3047 = vmatprep.subr.bf16.mxu0 0
        %3048 = vmatpush1.bf16.msra.mxu0 %v1307
        %3049 = vmatprep.subr.bf16.mxu0 0
        %3050 = vmatpush1.bf16.msra.mxu0 %v1308
        %3051 = vmatprep.subr.bf16.mxu0 0
        %3052 = vmatpush1.bf16.msra.mxu0 %v1309
        %3053 = vmatprep.subr.bf16.mxu0 0
        %3054 = vmatpush1.bf16.msra.mxu0 %v1310
        %3055 = vmatprep.subr.bf16.mxu0 0
        %3056 = vmatpush1.bf16.msra.mxu0 %v1311
        %3057 = vmatprep.subr.bf16.mxu0 0
        %3058 = vmatpush1.bf16.msra.mxu0 %v1312
        %3059 = vmatprep.subr.bf16.mxu0 0
        %3060 = vmatpush1.bf16.msra.mxu0 0
        %3061 = vmatprep.subr.bf16.mxu0 0
        %3062 = vmatpush1.bf16.msra.mxu0 0
        %3063 = vmatprep.subr.bf16.mxu0 0
        %3064 = vmatpush1.bf16.msra.mxu0 0
        %3065 = vmatprep.subr.bf16.mxu0 0
        %3066 = vmatpush1.bf16.msra.mxu0 0
        %3067 = vmatprep.subr.bf16.mxu0 0
        %3068 = vmatpush1.bf16.msra.mxu0 0
        %3069 = vmatprep.subr.bf16.mxu0 0
        %3070 = vmatpush1.bf16.msra.mxu0 0
        %3071 = vmatprep.subr.bf16.mxu0 0
        %3072 = vmatpush1.bf16.msra.mxu0 0
        %3073 = vmatprep.subr.bf16.mxu0 0
        %3074 = vmatpush1.bf16.msra.mxu0 0
        %3075 = vmatprep.mubr.bf16.mxu0 0
        %3076 = vmatmul.mubr.bf16.gmra.mrb[0].mxu0 %v3042
        %v3077 = vpop.f32.mrb[0].mxu0
        %v3078 = vadd.f32 %v1256, %v3077
        %v3079 = vpop.f32.mrb[0].mxu0
        %v3080 = vpop.f32.mrb[0].mxu0
        %v3081 = vpop.f32.mrb[0].mxu0
        %3082 = vdwg.mxu0
        %3083 = vmatprep.subr.bf16.mxu0 0
        %3084 = vmatpush1.bf16.msra.mxu0 %v1393
        %3085 = vmatprep.subr.bf16.mxu0 0
        %3086 = vmatpush1.bf16.msra.mxu0 %v1394
        %3087 = vmatprep.subr.bf16.mxu0 0
        %3088 = vmatpush1.bf16.msra.mxu0 %v1395
        %3089 = vmatprep.subr.bf16.mxu0 0
        %3090 = vmatpush1.bf16.msra.mxu0 %v1396
        %3091 = vmatprep.subr.bf16.mxu0 0
        %3092 = vmatpush1.bf16.msra.mxu0 %v1397
        %3093 = vmatprep.subr.bf16.mxu0 0
        %3094 = vmatpush1.bf16.msra.mxu0 %v1398
        %3095 = vmatprep.subr.bf16.mxu0 0
        %3096 = vmatpush1.bf16.msra.mxu0 %v1399
        %3097 = vmatprep.subr.bf16.mxu0 0
        %3098 = vmatpush1.bf16.msra.mxu0 %v1400
        %3099 = vmatprep.subr.bf16.mxu0 0
        %3100 = vmatpush1.bf16.msra.mxu0 0
        %3101 = vmatprep.subr.bf16.mxu0 0
        %3102 = vmatpush1.bf16.msra.mxu0 0
        %3103 = vmatprep.subr.bf16.mxu0 0
        %3104 = vmatpush1.bf16.msra.mxu0 0
        %3105 = vmatprep.subr.bf16.mxu0 0
        %3106 = vmatpush1.bf16.msra.mxu0 0
        %3107 = vmatprep.subr.bf16.mxu0 0
        %3108 = vmatpush1.bf16.msra.mxu0 0
        %3109 = vmatprep.subr.bf16.mxu0 0
        %3110 = vmatpush1.bf16.msra.mxu0 0
        %3111 = vmatprep.subr.bf16.mxu0 0
        %3112 = vmatpush1.bf16.msra.mxu0 0
        %3113 = vmatprep.subr.bf16.mxu0 0
        %3114 = vmatpush1.bf16.msra.mxu0 0
        %3115 = vmatprep.mubr.bf16.mxu0 0
        %3116 = vmatmul.mubr.bf16.gmra.mrb[0].mxu0 %v3042
        %v3117 = vpop.f32.mrb[0].mxu0
        %v3118 = vadd.f32 %v1260, %v3117
        %v3119 = vpop.f32.mrb[0].mxu0
        %v3120 = vpop.f32.mrb[0].mxu0
        %v3121 = vpop.f32.mrb[0].mxu0
        %3122 = vdwg.mxu0
        %3123 = vmatprep.subr.bf16.mxu0 0
        %3124 = vmatpush1.bf16.msra.mxu0 %v1481
        %3125 = vmatprep.subr.bf16.mxu0 0
        %3126 = vmatpush1.bf16.msra.mxu0 %v1482
        %3127 = vmatprep.subr.bf16.mxu0 0
        %3128 = vmatpush1.bf16.msra.mxu0 %v1483
        %3129 = vmatprep.subr.bf16.mxu0 0
        %3130 = vmatpush1.bf16.msra.mxu0 %v1484
        %3131 = vmatprep.subr.bf16.mxu0 0
        %3132 = vmatpush1.bf16.msra.mxu0 %v1485
        %3133 = vmatprep.subr.bf16.mxu0 0
        %3134 = vmatpush1.bf16.msra.mxu0 %v1486
        %3135 = vmatprep.subr.bf16.mxu0 0
        %3136 = vmatpush1.bf16.msra.mxu0 %v1487
        %3137 = vmatprep.subr.bf16.mxu0 0
        %3138 = vmatpush1.bf16.msra.mxu0 %v1488
        %3139 = vmatprep.subr.bf16.mxu0 0
        %3140 = vmatpush1.bf16.msra.mxu0 0
        %3141 = vmatprep.subr.bf16.mxu0 0
        %3142 = vmatpush1.bf16.msra.mxu0 0
        %3143 = vmatprep.subr.bf16.mxu0 0
        %3144 = vmatpush1.bf16.msra.mxu0 0
        %3145 = vmatprep.subr.bf16.mxu0 0
        %3146 = vmatpush1.bf16.msra.mxu0 0
        %3147 = vmatprep.subr.bf16.mxu0 0
        %3148 = vmatpush1.bf16.msra.mxu0 0
        %3149 = vmatprep.subr.bf16.mxu0 0
        %3150 = vmatpush1.bf16.msra.mxu0 0
        %3151 = vmatprep.subr.bf16.mxu0 0
        %3152 = vmatpush1.bf16.msra.mxu0 0
        %3153 = vmatprep.subr.bf16.mxu0 0
        %3154 = vmatpush1.bf16.msra.mxu0 0
        %3155 = vmatprep.mubr.bf16.mxu0 0
        %3156 = vmatmul.mubr.bf16.gmra.mrb[0].mxu0 %v3042
        %v3157 = vpop.f32.mrb[0].mxu0
        %v3158 = vadd.f32 %v1264, %v3157
        %v3159 = vpop.f32.mrb[0].mxu0
        %v3160 = vpop.f32.mrb[0].mxu0
        %v3161 = vpop.f32.mrb[0].mxu0
        %3162 = vdwg.mxu0
        %3163 = vmatprep.subr.bf16.mxu0 0
        %3164 = vmatpush1.bf16.msra.mxu0 %v1569
        %3165 = vmatprep.subr.bf16.mxu0 0
        %3166 = vmatpush1.bf16.msra.mxu0 %v1570
        %3167 = vmatprep.subr.bf16.mxu0 0
        %3168 = vmatpush1.bf16.msra.mxu0 %v1571
        %3169 = vmatprep.subr.bf16.mxu0 0
        %3170 = vmatpush1.bf16.msra.mxu0 %v1572
        %3171 = vmatprep.subr.bf16.mxu0 0
        %3172 = vmatpush1.bf16.msra.mxu0 %v1573
        %3173 = vmatprep.subr.bf16.mxu0 0
        %3174 = vmatpush1.bf16.msra.mxu0 %v1574
        %3175 = vmatprep.subr.bf16.mxu0 0
        %3176 = vmatpush1.bf16.msra.mxu0 %v1575
        %3177 = vmatprep.subr.bf16.mxu0 0
        %3178 = vmatpush1.bf16.msra.mxu0 %v1576
        %3179 = vmatprep.subr.bf16.mxu0 0
        %3180 = vmatpush1.bf16.msra.mxu0 0
        %3181 = vmatprep.subr.bf16.mxu0 0
        %3182 = vmatpush1.bf16.msra.mxu0 0
        %3183 = vmatprep.subr.bf16.mxu0 0
        %3184 = vmatpush1.bf16.msra.mxu0 0
        %3185 = vmatprep.subr.bf16.mxu0 0
        %3186 = vmatpush1.bf16.msra.mxu0 0
        %3187 = vmatprep.subr.bf16.mxu0 0
        %3188 = vmatpush1.bf16.msra.mxu0 0
        %3189 = vmatprep.subr.bf16.mxu0 0
        %3190 = vmatpush1.bf16.msra.mxu0 0
        %3191 = vmatprep.subr.bf16.mxu0 0
        %3192 = vmatpush1.bf16.msra.mxu0 0
        %3193 = vmatprep.subr.bf16.mxu0 0
        %3194 = vmatpush1.bf16.msra.mxu0 0
        %3195 = vmatprep.mubr.bf16.mxu0 0
        %3196 = vmatmul.mubr.bf16.gmra.mrb[0].mxu0 %v3042
        %v3197 = vpop.f32.mrb[0].mxu0
        %v3198 = vadd.f32 %v1268, %v3197
        %v3199 = vpop.f32.mrb[0].mxu0
        %v3200 = vpop.f32.mrb[0].mxu0
        %v3201 = vpop.f32.mrb[0].mxu0
        %3202 = vdwg.mxu0
        %3203 = vmatprep.subr.bf16.mxu0 0
        %3204 = vmatpush1.bf16.msra.mxu0 %v1681
        %3205 = vmatprep.subr.bf16.mxu0 0
        %3206 = vmatpush1.bf16.msra.mxu0 %v1682
        %3207 = vmatprep.subr.bf16.mxu0 0
        %3208 = vmatpush1.bf16.msra.mxu0 %v1683
        %3209 = vmatprep.subr.bf16.mxu0 0
        %3210 = vmatpush1.bf16.msra.mxu0 %v1684
        %3211 = vmatprep.subr.bf16.mxu0 0
        %3212 = vmatpush1.bf16.msra.mxu0 %v1685
        %3213 = vmatprep.subr.bf16.mxu0 0
        %3214 = vmatpush1.bf16.msra.mxu0 %v1686
        %3215 = vmatprep.subr.bf16.mxu0 0
        %3216 = vmatpush1.bf16.msra.mxu0 %v1687
        %3217 = vmatprep.subr.bf16.mxu0 0
        %3218 = vmatpush1.bf16.msra.mxu0 %v1688
        %3219 = vmatprep.subr.bf16.mxu0 0
        %3220 = vmatpush1.bf16.msra.mxu0 0
        %3221 = vmatprep.subr.bf16.mxu0 0
        %3222 = vmatpush1.bf16.msra.mxu0 0
        %3223 = vmatprep.subr.bf16.mxu0 0
        %3224 = vmatpush1.bf16.msra.mxu0 0
        %3225 = vmatprep.subr.bf16.mxu0 0
        %3226 = vmatpush1.bf16.msra.mxu0 0
        %3227 = vmatprep.subr.bf16.mxu0 0
        %3228 = vmatpush1.bf16.msra.mxu0 0
        %3229 = vmatprep.subr.bf16.mxu0 0
        %3230 = vmatpush1.bf16.msra.mxu0 0
        %3231 = vmatprep.subr.bf16.mxu0 0
        %3232 = vmatpush1.bf16.msra.mxu0 0
        %3233 = vmatprep.subr.bf16.mxu0 0
        %3234 = vmatpush1.bf16.msra.mxu0 0
        %3235 = vmatprep.mubr.bf16.mxu0 0
        %3236 = vmatmul.mubr.bf16.gmra.mrb[0].mxu0 %v3042
        %v3237 = vpop.f32.mrb[0].mxu0
        %v3238 = vadd.f32 %v1632, %v3237
        %v3239 = vpop.f32.mrb[0].mxu0
        %v3240 = vpop.f32.mrb[0].mxu0
        %v3241 = vpop.f32.mrb[0].mxu0
        %3242 = vdwg.mxu0
        %3243 = vmatprep.subr.bf16.mxu0 0
        %3244 = vmatpush1.bf16.msra.mxu0 %v1769
        %3245 = vmatprep.subr.bf16.mxu0 0
        %3246 = vmatpush1.bf16.msra.mxu0 %v1770
        %3247 = vmatprep.subr.bf16.mxu0 0
        %3248 = vmatpush1.bf16.msra.mxu0 %v1771
        %3249 = vmatprep.subr.bf16.mxu0 0
        %3250 = vmatpush1.bf16.msra.mxu0 %v1772
        %3251 = vmatprep.subr.bf16.mxu0 0
        %3252 = vmatpush1.bf16.msra.mxu0 %v1773
        %3253 = vmatprep.subr.bf16.mxu0 0
        %3254 = vmatpush1.bf16.msra.mxu0 %v1774
        %3255 = vmatprep.subr.bf16.mxu0 0
        %3256 = vmatpush1.bf16.msra.mxu0 %v1775
        %3257 = vmatprep.subr.bf16.mxu0 0
        %3258 = vmatpush1.bf16.msra.mxu0 %v1776
        %3259 = vmatprep.subr.bf16.mxu0 0
        %3260 = vmatpush1.bf16.msra.mxu0 0
        %3261 = vmatprep.subr.bf16.mxu0 0
        %3262 = vmatpush1.bf16.msra.mxu0 0
        %3263 = vmatprep.subr.bf16.mxu0 0
        %3264 = vmatpush1.bf16.msra.mxu0 0
        %3265 = vmatprep.subr.bf16.mxu0 0
        %3266 = vmatpush1.bf16.msra.mxu0 0
        %3267 = vmatprep.subr.bf16.mxu0 0
        %3268 = vmatpush1.bf16.msra.mxu0 0
        %3269 = vmatprep.subr.bf16.mxu0 0
        %3270 = vmatpush1.bf16.msra.mxu0 0
        %3271 = vmatprep.subr.bf16.mxu0 0
        %3272 = vmatpush1.bf16.msra.mxu0 0
        %3273 = vmatprep.subr.bf16.mxu0 0
        %3274 = vmatpush1.bf16.msra.mxu0 0
        %3275 = vmatprep.mubr.bf16.mxu0 0
        %3276 = vmatmul.mubr.bf16.gmra.mrb[0].mxu0 %v3042
        %v3277 = vpop.f32.mrb[0].mxu0
        %v3278 = vadd.f32 %v1636, %v3277
        %v3279 = vpop.f32.mrb[0].mxu0
        %v3280 = vpop.f32.mrb[0].mxu0
        %v3281 = vpop.f32.mrb[0].mxu0
        %3282 = vdwg.mxu0
        %3283 = vmatprep.subr.bf16.mxu0 0
        %3284 = vmatpush1.bf16.msra.mxu0 %v1857
        %3285 = vmatprep.subr.bf16.mxu0 0
        %3286 = vmatpush1.bf16.msra.mxu0 %v1858
        %3287 = vmatprep.subr.bf16.mxu0 0
        %3288 = vmatpush1.bf16.msra.mxu0 %v1859
        %3289 = vmatprep.subr.bf16.mxu0 0
        %3290 = vmatpush1.bf16.msra.mxu0 %v1860
        %3291 = vmatprep.subr.bf16.mxu0 0
        %3292 = vmatpush1.bf16.msra.mxu0 %v1861
        %3293 = vmatprep.subr.bf16.mxu0 0
        %3294 = vmatpush1.bf16.msra.mxu0 %v1862
        %3295 = vmatprep.subr.bf16.mxu0 0
        %3296 = vmatpush1.bf16.msra.mxu0 %v1863
        %3297 = vmatprep.subr.bf16.mxu0 0
        %3298 = vmatpush1.bf16.msra.mxu0 %v1864
        %3299 = vmatprep.subr.bf16.mxu0 0
        %3300 = vmatpush1.bf16.msra.mxu0 0
        %3301 = vmatprep.subr.bf16.mxu0 0
        %3302 = vmatpush1.bf16.msra.mxu0 0
        %3303 = vmatprep.subr.bf16.mxu0 0
        %3304 = vmatpush1.bf16.msra.mxu0 0
        %3305 = vmatprep.subr.bf16.mxu0 0
        %3306 = vmatpush1.bf16.msra.mxu0 0
        %3307 = vmatprep.subr.bf16.mxu0 0
        %3308 = vmatpush1.bf16.msra.mxu0 0
        %3309 = vmatprep.subr.bf16.mxu0 0
        %3310 = vmatpush1.bf16.msra.mxu0 0
        %3311 = vmatprep.subr.bf16.mxu0 0
        %3312 = vmatpush1.bf16.msra.mxu0 0
        %3313 = vmatprep.subr.bf16.mxu0 0
        %3314 = vmatpush1.bf16.msra.mxu0 0
        %3315 = vmatprep.mubr.bf16.mxu0 0
        %3316 = vmatmul.mubr.bf16.gmra.mrb[0].mxu0 %v3042
        %v3317 = vpop.f32.mrb[0].mxu0
        %v3318 = vadd.f32 %v1640, %v3317
        %v3319 = vpop.f32.mrb[0].mxu0
        %v3320 = vpop.f32.mrb[0].mxu0
        %v3321 = vpop.f32.mrb[0].mxu0
        %3322 = vdwg.mxu0
        %3323 = vmatprep.subr.bf16.mxu0 0
        %3324 = vmatpush1.bf16.msra.mxu0 %v1945
        %3325 = vmatprep.subr.bf16.mxu0 0
        %3326 = vmatpush1.bf16.msra.mxu0 %v1946
        %3327 = vmatprep.subr.bf16.mxu0 0
        %3328 = vmatpush1.bf16.msra.mxu0 %v1947
        %3329 = vmatprep.subr.bf16.mxu0 0
        %3330 = vmatpush1.bf16.msra.mxu0 %v1948
        %3331 = vmatprep.subr.bf16.mxu0 0
        %3332 = vmatpush1.bf16.msra.mxu0 %v1949
        %3333 = vmatprep.subr.bf16.mxu0 0
        %3334 = vmatpush1.bf16.msra.mxu0 %v1950
        %3335 = vmatprep.subr.bf16.mxu0 0
        %3336 = vmatpush1.bf16.msra.mxu0 %v1951
        %3337 = vmatprep.subr.bf16.mxu0 0
        %3338 = vmatpush1.bf16.msra.mxu0 %v1952
        %3339 = vmatprep.subr.bf16.mxu0 0
        %3340 = vmatpush1.bf16.msra.mxu0 0
        %3341 = vmatprep.subr.bf16.mxu0 0
        %3342 = vmatpush1.bf16.msra.mxu0 0
        %3343 = vmatprep.subr.bf16.mxu0 0
        %3344 = vmatpush1.bf16.msra.mxu0 0
        %3345 = vmatprep.subr.bf16.mxu0 0
        %3346 = vmatpush1.bf16.msra.mxu0 0
        %3347 = vmatprep.subr.bf16.mxu0 0
        %3348 = vmatpush1.bf16.msra.mxu0 0
        %3349 = vmatprep.subr.bf16.mxu0 0
        %3350 = vmatpush1.bf16.msra.mxu0 0
        %3351 = vmatprep.subr.bf16.mxu0 0
        %3352 = vmatpush1.bf16.msra.mxu0 0
        %3353 = vmatprep.subr.bf16.mxu0 0
        %3354 = vmatpush1.bf16.msra.mxu0 0
        %3355 = vmatprep.mubr.bf16.mxu0 0
        %3356 = vmatmul.mubr.bf16.gmra.mrb[0].mxu0 %v3042
        %v3357 = vpop.f32.mrb[0].mxu0
        %v3358 = vadd.f32 %v1644, %v3357
        %v3359 = vpop.f32.mrb[0].mxu0
        %v3360 = vpop.f32.mrb[0].mxu0
        %v3361 = vpop.f32.mrb[0].mxu0
        %3362 = vdwg.mxu0
        %3363 = vmatprep.subr.bf16.mxu0 0
        %3364 = vmatpush1.bf16.msra.mxu0 %v2057
        %3365 = vmatprep.subr.bf16.mxu0 0
        %3366 = vmatpush1.bf16.msra.mxu0 %v2058
        %3367 = vmatprep.subr.bf16.mxu0 0
        %3368 = vmatpush1.bf16.msra.mxu0 %v2059
        %3369 = vmatprep.subr.bf16.mxu0 0
        %3370 = vmatpush1.bf16.msra.mxu0 %v2060
        %3371 = vmatprep.subr.bf16.mxu0 0
        %3372 = vmatpush1.bf16.msra.mxu0 %v2061
        %3373 = vmatprep.subr.bf16.mxu0 0
        %3374 = vmatpush1.bf16.msra.mxu0 %v2062
        %3375 = vmatprep.subr.bf16.mxu0 0
        %3376 = vmatpush1.bf16.msra.mxu0 %v2063
        %3377 = vmatprep.subr.bf16.mxu0 0
        %3378 = vmatpush1.bf16.msra.mxu0 %v2064
        %3379 = vmatprep.subr.bf16.mxu0 0
        %3380 = vmatpush1.bf16.msra.mxu0 0
        %3381 = vmatprep.subr.bf16.mxu0 0
        %3382 = vmatpush1.bf16.msra.mxu0 0
        %3383 = vmatprep.subr.bf16.mxu0 0
        %3384 = vmatpush1.bf16.msra.mxu0 0
        %3385 = vmatprep.subr.bf16.mxu0 0
        %3386 = vmatpush1.bf16.msra.mxu0 0
        %3387 = vmatprep.subr.bf16.mxu0 0
        %3388 = vmatpush1.bf16.msra.mxu0 0
        %3389 = vmatprep.subr.bf16.mxu0 0
        %3390 = vmatpush1.bf16.msra.mxu0 0
        %3391 = vmatprep.subr.bf16.mxu0 0
        %3392 = vmatpush1.bf16.msra.mxu0 0
        %3393 = vmatprep.subr.bf16.mxu0 0
        %3394 = vmatpush1.bf16.msra.mxu0 0
        %3395 = vmatprep.mubr.bf16.mxu0 0
        %3396 = vmatmul.mubr.bf16.gmra.mrb[0].mxu0 %v3042
        %v3397 = vpop.f32.mrb[0].mxu0
        %v3398 = vadd.f32 %v2008, %v3397
        %v3399 = vpop.f32.mrb[0].mxu0
        %v3400 = vpop.f32.mrb[0].mxu0
        %v3401 = vpop.f32.mrb[0].mxu0
        %3402 = vdwg.mxu0
        %3403 = vmatprep.subr.bf16.mxu0 0
        %3404 = vmatpush1.bf16.msra.mxu0 %v2145
        %3405 = vmatprep.subr.bf16.mxu0 0
        %3406 = vmatpush1.bf16.msra.mxu0 %v2146
        %3407 = vmatprep.subr.bf16.mxu0 0
        %3408 = vmatpush1.bf16.msra.mxu0 %v2147
        %3409 = vmatprep.subr.bf16.mxu0 0
        %3410 = vmatpush1.bf16.msra.mxu0 %v2148
        %3411 = vmatprep.subr.bf16.mxu0 0
        %3412 = vmatpush1.bf16.msra.mxu0 %v2149
        %3413 = vmatprep.subr.bf16.mxu0 0
        %3414 = vmatpush1.bf16.msra.mxu0 %v2150
        %3415 = vmatprep.subr.bf16.mxu0 0
        %3416 = vmatpush1.bf16.msra.mxu0 %v2151
        %3417 = vmatprep.subr.bf16.mxu0 0
        %3418 = vmatpush1.bf16.msra.mxu0 %v2152
        %3419 = vmatprep.subr.bf16.mxu0 0
        %3420 = vmatpush1.bf16.msra.mxu0 0
        %3421 = vmatprep.subr.bf16.mxu0 0
        %3422 = vmatpush1.bf16.msra.mxu0 0
        %3423 = vmatprep.subr.bf16.mxu0 0
        %3424 = vmatpush1.bf16.msra.mxu0 0
        %3425 = vmatprep.subr.bf16.mxu0 0
        %3426 = vmatpush1.bf16.msra.mxu0 0
        %3427 = vmatprep.subr.bf16.mxu0 0
        %3428 = vmatpush1.bf16.msra.mxu0 0
        %3429 = vmatprep.subr.bf16.mxu0 0
        %3430 = vmatpush1.bf16.msra.mxu0 0
        %3431 = vmatprep.subr.bf16.mxu0 0
        %3432 = vmatpush1.bf16.msra.mxu0 0
        %3433 = vmatprep.subr.bf16.mxu0 0
        %3434 = vmatpush1.bf16.msra.mxu0 0
        %3435 = vmatprep.mubr.bf16.mxu0 0
        %3436 = vmatmul.mubr.bf16.gmra.mrb[0].mxu0 %v3042
        %v3437 = vpop.f32.mrb[0].mxu0
        %v3438 = vadd.f32 %v2012, %v3437
        %v3439 = vpop.f32.mrb[0].mxu0
        %v3440 = vpop.f32.mrb[0].mxu0
        %v3441 = vpop.f32.mrb[0].mxu0
        %3442 = vdwg.mxu0
        %3443 = vmatprep.subr.bf16.mxu0 0
        %3444 = vmatpush1.bf16.msra.mxu0 %v2233
        %3445 = vmatprep.subr.bf16.mxu0 0
        %3446 = vmatpush1.bf16.msra.mxu0 %v2234
        %3447 = vmatprep.subr.bf16.mxu0 0
        %3448 = vmatpush1.bf16.msra.mxu0 %v2235
        %3449 = vmatprep.subr.bf16.mxu0 0
        %3450 = vmatpush1.bf16.msra.mxu0 %v2236
        %3451 = vmatprep.subr.bf16.mxu0 0
        %3452 = vmatpush1.bf16.msra.mxu0 %v2237
        %3453 = vmatprep.subr.bf16.mxu0 0
        %3454 = vmatpush1.bf16.msra.mxu0 %v2238
        %3455 = vmatprep.subr.bf16.mxu0 0
        %3456 = vmatpush1.bf16.msra.mxu0 %v2239
        %3457 = vmatprep.subr.bf16.mxu0 0
        %3458 = vmatpush1.bf16.msra.mxu0 %v2240
        %3459 = vmatprep.subr.bf16.mxu0 0
        %3460 = vmatpush1.bf16.msra.mxu0 0
        %3461 = vmatprep.subr.bf16.mxu0 0
        %3462 = vmatpush1.bf16.msra.mxu0 0
        %3463 = vmatprep.subr.bf16.mxu0 0
        %3464 = vmatpush1.bf16.msra.mxu0 0
        %3465 = vmatprep.subr.bf16.mxu0 0
        %3466 = vmatpush1.bf16.msra.mxu0 0
        %3467 = vmatprep.subr.bf16.mxu0 0
        %3468 = vmatpush1.bf16.msra.mxu0 0
        %3469 = vmatprep.subr.bf16.mxu0 0
        %3470 = vmatpush1.bf16.msra.mxu0 0
        %3471 = vmatprep.subr.bf16.mxu0 0
        %3472 = vmatpush1.bf16.msra.mxu0 0
        %3473 = vmatprep.subr.bf16.mxu0 0
        %3474 = vmatpush1.bf16.msra.mxu0 0
        %3475 = vmatprep.mubr.bf16.mxu0 0
        %3476 = vmatmul.mubr.bf16.gmra.mrb[0].mxu0 %v3042
        %v3477 = vpop.f32.mrb[0].mxu0
        %v3478 = vadd.f32 %v2016, %v3477
        %v3479 = vpop.f32.mrb[0].mxu0
        %v3480 = vpop.f32.mrb[0].mxu0
        %v3481 = vpop.f32.mrb[0].mxu0
        %3482 = vdwg.mxu0
        %3483 = vmatprep.subr.bf16.mxu0 0
        %3484 = vmatpush1.bf16.msra.mxu0 %v2321
        %3485 = vmatprep.subr.bf16.mxu0 0
        %3486 = vmatpush1.bf16.msra.mxu0 %v2322
        %3487 = vmatprep.subr.bf16.mxu0 0
        %3488 = vmatpush1.bf16.msra.mxu0 %v2323
        %3489 = vmatprep.subr.bf16.mxu0 0
        %3490 = vmatpush1.bf16.msra.mxu0 %v2324
        %3491 = vmatprep.subr.bf16.mxu0 0
        %3492 = vmatpush1.bf16.msra.mxu0 %v2325
        %3493 = vmatprep.subr.bf16.mxu0 0
        %3494 = vmatpush1.bf16.msra.mxu0 %v2326
        %3495 = vmatprep.subr.bf16.mxu0 0
        %3496 = vmatpush1.bf16.msra.mxu0 %v2327
        %3497 = vmatprep.subr.bf16.mxu0 0
        %3498 = vmatpush1.bf16.msra.mxu0 %v2328
        %3499 = vmatprep.subr.bf16.mxu0 0
        %3500 = vmatpush1.bf16.msra.mxu0 0
        %3501 = vmatprep.subr.bf16.mxu0 0
        %3502 = vmatpush1.bf16.msra.mxu0 0
        %3503 = vmatprep.subr.bf16.mxu0 0
        %3504 = vmatpush1.bf16.msra.mxu0 0
        %3505 = vmatprep.subr.bf16.mxu0 0
        %3506 = vmatpush1.bf16.msra.mxu0 0
        %3507 = vmatprep.subr.bf16.mxu0 0
        %3508 = vmatpush1.bf16.msra.mxu0 0
        %3509 = vmatprep.subr.bf16.mxu0 0
        %3510 = vmatpush1.bf16.msra.mxu0 0
        %3511 = vmatprep.subr.bf16.mxu0 0
        %3512 = vmatpush1.bf16.msra.mxu0 0
        %3513 = vmatprep.subr.bf16.mxu0 0
        %3514 = vmatpush1.bf16.msra.mxu0 0
        %3515 = vmatprep.mubr.bf16.mxu0 0
        %3516 = vmatmul.mubr.bf16.gmra.mrb[0].mxu0 %v3042
        %v3517 = vpop.f32.mrb[0].mxu0
        %v3518 = vadd.f32 %v2020, %v3517
        %v3519 = vpop.f32.mrb[0].mxu0
        %v3520 = vpop.f32.mrb[0].mxu0
        %v3521 = vpop.f32.mrb[0].mxu0
        %3522 = vdwg.mxu0
        %v3523 = vpack.c.bf16 %v3078, %v3078
        %v3524 = vpack.c.bf16 %v3118, %v3118
        %v3525 = vpack.c.bf16 %v3158, %v3158
        %v3526 = vpack.c.bf16 %v3198, %v3198
        %v3527 = vpack.c.bf16 %v3238, %v3238
        %v3528 = vpack.c.bf16 %v3278, %v3278
        %v3529 = vpack.c.bf16 %v3318, %v3318
        %v3530 = vpack.c.bf16 %v3358, %v3358
        %s3531 = scalar_lea.vmem %s1, 1
        %v3532 = vld [vmem:[%s3531] sm:$0x1]
        %v3534 = vlaneseq
        %v3535 = vshrl.u32 %v3534, 7
        %v3536 = vsub.s32 0, %v3535
        %v3537 = vrot.slane %v3532, %v3536
        %v3540 = vsel %vm2392, %v3523, 0
        %v3543 = vsel %vm2392, %v3527, 0
        %3545 = vmatprep.subr.bf16.mxu0 0
        %3546 = vmatpush1.bf16.xpose.msra.mxu0 %v3543
        %3547 = vmatprep.subr.bf16.mxu0 0
        %3548 = vmatpush1.bf16.xpose.msra.mxu0 0
        %3549 = vmatprep.subr.bf16.mxu0 0
        %3550 = vmatpush1.bf16.xpose.msra.mxu0 0
        %3551 = vmatprep.subr.bf16.mxu0 0
        %3552 = vmatpush1.bf16.xpose.msra.mxu0 0
        %3553 = vmatprep.subr.bf16.mxu0 0
        %3554 = vmatpush1.bf16.xpose.msra.mxu0 0
        %3555 = vmatprep.subr.bf16.mxu0 0
        %3556 = vmatpush1.bf16.xpose.msra.mxu0 0
        %3557 = vmatprep.subr.bf16.mxu0 0
        %3558 = vmatpush1.bf16.xpose.msra.mxu0 0
        %3559 = vmatprep.subr.bf16.mxu0 0
        %3560 = vmatpush1.bf16.xpose.msra.mxu0 0
        %3561 = vmatprep.subr.bf16.mxu0 0
        %3562 = vmatpush1.bf16.xpose.msra.mxu0 0
        %3563 = vmatprep.subr.bf16.mxu0 0
        %3564 = vmatpush1.bf16.xpose.msra.mxu0 0
        %3565 = vmatprep.subr.bf16.mxu0 0
        %3566 = vmatpush1.bf16.xpose.msra.mxu0 0
        %3567 = vmatprep.subr.bf16.mxu0 0
        %3568 = vmatpush1.bf16.xpose.msra.mxu0 0
        %3569 = vmatprep.subr.bf16.mxu0 0
        %3570 = vmatpush1.bf16.xpose.msra.mxu0 0
        %3571 = vmatprep.subr.bf16.mxu0 0
        %3572 = vmatpush1.bf16.xpose.msra.mxu0 0
        %3573 = vmatprep.subr.bf16.mxu0 0
        %3574 = vmatpush1.bf16.xpose.msra.mxu0 0
        %3575 = vmatprep.subr.bf16.mxu0 0
        %3576 = vmatpush1.bf16.xpose.msra.mxu0 0
        %3577 = vmatprep.mubr.bf16.mxu0 0
        %3578 = vmatmul.mubr.bf16.gmra.mrb[0].mxu0 %v3540
        %v3579 = vpop.f32.mrb[0].mxu0
        %v3580 = vadd.f32 %v3537, %v3579
        %v3581 = vpop.f32.mrb[0].mxu0
        %v3582 = vpop.f32.mrb[0].mxu0
        %v3583 = vpop.f32.mrb[0].mxu0
        %3584 = vdwg.mxu0
        %v3586 = vsel %vm2392, %v3524, 0
        %v3589 = vsel %vm2392, %v3528, 0
        %3591 = vmatprep.subr.bf16.mxu0 0
        %3592 = vmatpush1.bf16.xpose.msra.mxu0 %v3589
        %3593 = vmatprep.subr.bf16.mxu0 0
        %3594 = vmatpush1.bf16.xpose.msra.mxu0 0
        %3595 = vmatprep.subr.bf16.mxu0 0
        %3596 = vmatpush1.bf16.xpose.msra.mxu0 0
        %3597 = vmatprep.subr.bf16.mxu0 0
        %3598 = vmatpush1.bf16.xpose.msra.mxu0 0
        %3599 = vmatprep.subr.bf16.mxu0 0
        %3600 = vmatpush1.bf16.xpose.msra.mxu0 0
        %3601 = vmatprep.subr.bf16.mxu0 0
        %3602 = vmatpush1.bf16.xpose.msra.mxu0 0
        %3603 = vmatprep.subr.bf16.mxu0 0
        %3604 = vmatpush1.bf16.xpose.msra.mxu0 0
        %3605 = vmatprep.subr.bf16.mxu0 0
        %3606 = vmatpush1.bf16.xpose.msra.mxu0 0
        %3607 = vmatprep.subr.bf16.mxu0 0
        %3608 = vmatpush1.bf16.xpose.msra.mxu0 0
        %3609 = vmatprep.subr.bf16.mxu0 0
        %3610 = vmatpush1.bf16.xpose.msra.mxu0 0
        %3611 = vmatprep.subr.bf16.mxu0 0
        %3612 = vmatpush1.bf16.xpose.msra.mxu0 0
        %3613 = vmatprep.subr.bf16.mxu0 0
        %3614 = vmatpush1.bf16.xpose.msra.mxu0 0
        %3615 = vmatprep.subr.bf16.mxu0 0
        %3616 = vmatpush1.bf16.xpose.msra.mxu0 0
        %3617 = vmatprep.subr.bf16.mxu0 0
        %3618 = vmatpush1.bf16.xpose.msra.mxu0 0
        %3619 = vmatprep.subr.bf16.mxu0 0
        %3620 = vmatpush1.bf16.xpose.msra.mxu0 0
        %3621 = vmatprep.subr.bf16.mxu0 0
        %3622 = vmatpush1.bf16.xpose.msra.mxu0 0
        %3623 = vmatprep.mubr.bf16.mxu0 0
        %3624 = vmatmul.mubr.bf16.gmra.mrb[0].mxu0 %v3586
        %v3625 = vpop.f32.mrb[0].mxu0
        %v3626 = vadd.f32 %v3537, %v3625
        %v3627 = vpop.f32.mrb[0].mxu0
        %v3628 = vpop.f32.mrb[0].mxu0
        %v3629 = vpop.f32.mrb[0].mxu0
        %3630 = vdwg.mxu0
        %v3632 = vsel %vm2392, %v3525, 0
        %v3635 = vsel %vm2392, %v3529, 0
        %3637 = vmatprep.subr.bf16.mxu0 0
        %3638 = vmatpush1.bf16.xpose.msra.mxu0 %v3635
        %3639 = vmatprep.subr.bf16.mxu0 0
        %3640 = vmatpush1.bf16.xpose.msra.mxu0 0
        %3641 = vmatprep.subr.bf16.mxu0 0
        %3642 = vmatpush1.bf16.xpose.msra.mxu0 0
        %3643 = vmatprep.subr.bf16.mxu0 0
        %3644 = vmatpush1.bf16.xpose.msra.mxu0 0
        %3645 = vmatprep.subr.bf16.mxu0 0
        %3646 = vmatpush1.bf16.xpose.msra.mxu0 0
        %3647 = vmatprep.subr.bf16.mxu0 0
        %3648 = vmatpush1.bf16.xpose.msra.mxu0 0
        %3649 = vmatprep.subr.bf16.mxu0 0
        %3650 = vmatpush1.bf16.xpose.msra.mxu0 0
        %3651 = vmatprep.subr.bf16.mxu0 0
        %3652 = vmatpush1.bf16.xpose.msra.mxu0 0
        %3653 = vmatprep.subr.bf16.mxu0 0
        %3654 = vmatpush1.bf16.xpose.msra.mxu0 0
        %3655 = vmatprep.subr.bf16.mxu0 0
        %3656 = vmatpush1.bf16.xpose.msra.mxu0 0
        %3657 = vmatprep.subr.bf16.mxu0 0
        %3658 = vmatpush1.bf16.xpose.msra.mxu0 0
        %3659 = vmatprep.subr.bf16.mxu0 0
        %3660 = vmatpush1.bf16.xpose.msra.mxu0 0
        %3661 = vmatprep.subr.bf16.mxu0 0
        %3662 = vmatpush1.bf16.xpose.msra.mxu0 0
        %3663 = vmatprep.subr.bf16.mxu0 0
        %3664 = vmatpush1.bf16.xpose.msra.mxu0 0
        %3665 = vmatprep.subr.bf16.mxu0 0
        %3666 = vmatpush1.bf16.xpose.msra.mxu0 0
        %3667 = vmatprep.subr.bf16.mxu0 0
        %3668 = vmatpush1.bf16.xpose.msra.mxu0 0
        %3669 = vmatprep.mubr.bf16.mxu0 0
        %3670 = vmatmul.mubr.bf16.gmra.mrb[0].mxu0 %v3632
        %v3671 = vpop.f32.mrb[0].mxu0
        %v3672 = vadd.f32 %v3537, %v3671
        %v3673 = vpop.f32.mrb[0].mxu0
        %v3674 = vpop.f32.mrb[0].mxu0
        %v3675 = vpop.f32.mrb[0].mxu0
        %3676 = vdwg.mxu0
        %v3678 = vsel %vm2392, %v3526, 0
        %v3681 = vsel %vm2392, %v3530, 0
        %3683 = vmatprep.subr.bf16.mxu0 0
        %3684 = vmatpush1.bf16.xpose.msra.mxu0 %v3681
        %3685 = vmatprep.subr.bf16.mxu0 0
        %3686 = vmatpush1.bf16.xpose.msra.mxu0 0
        %3687 = vmatprep.subr.bf16.mxu0 0
        %3688 = vmatpush1.bf16.xpose.msra.mxu0 0
        %3689 = vmatprep.subr.bf16.mxu0 0
        %3690 = vmatpush1.bf16.xpose.msra.mxu0 0
        %3691 = vmatprep.subr.bf16.mxu0 0
        %3692 = vmatpush1.bf16.xpose.msra.mxu0 0
        %3693 = vmatprep.subr.bf16.mxu0 0
        %3694 = vmatpush1.bf16.xpose.msra.mxu0 0
        %3695 = vmatprep.subr.bf16.mxu0 0
        %3696 = vmatpush1.bf16.xpose.msra.mxu0 0
        %3697 = vmatprep.subr.bf16.mxu0 0
        %3698 = vmatpush1.bf16.xpose.msra.mxu0 0
        %3699 = vmatprep.subr.bf16.mxu0 0
        %3700 = vmatpush1.bf16.xpose.msra.mxu0 0
        %3701 = vmatprep.subr.bf16.mxu0 0
        %3702 = vmatpush1.bf16.xpose.msra.mxu0 0
        %3703 = vmatprep.subr.bf16.mxu0 0
        %3704 = vmatpush1.bf16.xpose.msra.mxu0 0
        %3705 = vmatprep.subr.bf16.mxu0 0
        %3706 = vmatpush1.bf16.xpose.msra.mxu0 0
        %3707 = vmatprep.subr.bf16.mxu0 0
        %3708 = vmatpush1.bf16.xpose.msra.mxu0 0
        %3709 = vmatprep.subr.bf16.mxu0 0
        %3710 = vmatpush1.bf16.xpose.msra.mxu0 0
        %3711 = vmatprep.subr.bf16.mxu0 0
        %3712 = vmatpush1.bf16.xpose.msra.mxu0 0
        %3713 = vmatprep.subr.bf16.mxu0 0
        %3714 = vmatpush1.bf16.xpose.msra.mxu0 0
        %3715 = vmatprep.mubr.bf16.mxu0 0
        %3716 = vmatmul.mubr.bf16.gmra.mrb[0].mxu0 %v3678
        %v3717 = vpop.f32.mrb[0].mxu0
        %v3718 = vadd.f32 %v3537, %v3717
        %v3719 = vpop.f32.mrb[0].mxu0
        %v3720 = vpop.f32.mrb[0].mxu0
        %v3721 = vpop.f32.mrb[0].mxu0
        %3722 = vdwg.mxu0
        %v3723 = vsel %vm2577, %v3580, -inf
        %3724 = vmax.xlane.f32.xlu0 %v3723
        %v3725 = vpop.xlane.xlu0 %3724
        %v3726 = vsel %vm2577, %v3626, -inf
        %3727 = vmax.xlane.f32.xlu0 %v3726
        %v3728 = vpop.xlane.xlu0 %3727
        %v3729 = vsel %vm2577, %v3672, -inf
        %3730 = vmax.xlane.f32.xlu0 %v3729
        %v3731 = vpop.xlane.xlu0 %3730
        %v3732 = vsel %vm2577, %v3718, -inf
        %3733 = vmax.xlane.f32.xlu0 %v3732
        %v3734 = vpop.xlane.xlu0 %3733
        %v3735 = vsub.f32 %v3580, %v3725
        %v3736 = vsub.f32 %v3626, %v3728
        %v3737 = vsub.f32 %v3672, %v3731
        %v3738 = vsub.f32 %v3718, %v3734
        %v3739 = vmul.f32 %v3735, 1.442695
        %v3740 = vpow.pop %v3739
        %v3741 = vmul.f32 %v3736, 1.442695
        %v3742 = vpow.pop %v3741
        %v3743 = vmul.f32 %v3737, 1.442695
        %v3744 = vpow.pop %v3743
        %v3745 = vmul.f32 %v3738, 1.442695
        %v3746 = vpow.pop %v3745
        %v3747 = vsel %vm2577, %v3740, 0.0
        %3748 = vadd.xlane.f32.xlu0 %v3747
        %v3749 = vpop.xlane.xlu0 %3748
        %v3750 = vsel %vm2577, %v3742, 0.0
        %3751 = vadd.xlane.f32.xlu0 %v3750
        %v3752 = vpop.xlane.xlu0 %3751
        %v3753 = vsel %vm2577, %v3744, 0.0
        %3754 = vadd.xlane.f32.xlu0 %v3753
        %v3755 = vpop.xlane.xlu0 %3754
        %v3756 = vsel %vm2577, %v3746, 0.0
        %3757 = vadd.xlane.f32.xlu0 %v3756
        %v3758 = vpop.xlane.xlu0 %3757
        %v3759 = vrcp.pop %v3749
        %v3760 = vrcp.pop %v3752
        %v3761 = vrcp.pop %v3755
        %v3762 = vrcp.pop %v3758
        %v3763 = vmul.f32 %v3740, %v3759
        %v3764 = vmul.f32 %v3742, %v3760
        %v3765 = vmul.f32 %v3744, %v3761
        %v3766 = vmul.f32 %v3746, %v3762
        %v3767 = vpack.c.bf16 %v3763, %v3763
        %v3768 = vpack.c.bf16 %v3764, %v3764
        %v3769 = vpack.c.bf16 %v3765, %v3765
        %v3770 = vpack.c.bf16 %v3766, %v3766
        %v3771 = vpack.c.bf16 %v3398, %v3398
        %v3772 = vpack.c.bf16 %v3438, %v3438
        %v3773 = vpack.c.bf16 %v3478, %v3478
        %v3774 = vpack.c.bf16 %v3518, %v3518
        %v3776 = vsel %vm2577, %v3767, 0
        %v3779 = vsel %vm2633, %v3771, 0
        %3781 = vmatprep.subr.bf16.mxu0 0
        %3782 = vmatpush1.bf16.msra.mxu0 %v3779
        %3783 = vmatprep.subr.bf16.mxu0 0
        %3784 = vmatpush1.bf16.msra.mxu0 0
        %3785 = vmatprep.subr.bf16.mxu0 0
        %3786 = vmatpush1.bf16.msra.mxu0 0
        %3787 = vmatprep.subr.bf16.mxu0 0
        %3788 = vmatpush1.bf16.msra.mxu0 0
        %3789 = vmatprep.subr.bf16.mxu0 0
        %3790 = vmatpush1.bf16.msra.mxu0 0
        %3791 = vmatprep.subr.bf16.mxu0 0
        %3792 = vmatpush1.bf16.msra.mxu0 0
        %3793 = vmatprep.subr.bf16.mxu0 0
        %3794 = vmatpush1.bf16.msra.mxu0 0
        %3795 = vmatprep.subr.bf16.mxu0 0
        %3796 = vmatpush1.bf16.msra.mxu0 0
        %3797 = vmatprep.subr.bf16.mxu0 0
        %3798 = vmatpush1.bf16.msra.mxu0 0
        %3799 = vmatprep.subr.bf16.mxu0 0
        %3800 = vmatpush1.bf16.msra.mxu0 0
        %3801 = vmatprep.subr.bf16.mxu0 0
        %3802 = vmatpush1.bf16.msra.mxu0 0
        %3803 = vmatprep.subr.bf16.mxu0 0
        %3804 = vmatpush1.bf16.msra.mxu0 0
        %3805 = vmatprep.subr.bf16.mxu0 0
        %3806 = vmatpush1.bf16.msra.mxu0 0
        %3807 = vmatprep.subr.bf16.mxu0 0
        %3808 = vmatpush1.bf16.msra.mxu0 0
        %3809 = vmatprep.subr.bf16.mxu0 0
        %3810 = vmatpush1.bf16.msra.mxu0 0
        %3811 = vmatprep.subr.bf16.mxu0 0
        %3812 = vmatpush1.bf16.msra.mxu0 0
        %3813 = vmatprep.mubr.bf16.mxu0 0
        %3814 = vmatmul.mubr.bf16.gmra.mrb[0].mxu0 %v3776
        %v3815 = vpop.f32.mrb[0].mxu0
        %v3816 = vadd.f32 0.0, %v3815
        %v3817 = vpop.f32.mrb[0].mxu0
        %v3818 = vpop.f32.mrb[0].mxu0
        %v3819 = vpop.f32.mrb[0].mxu0
        %3820 = vdwg.mxu0
        %v3822 = vsel %vm2577, %v3768, 0
        %v3825 = vsel %vm2633, %v3772, 0
        %3827 = vmatprep.subr.bf16.mxu0 0
        %3828 = vmatpush1.bf16.msra.mxu0 %v3825
        %3829 = vmatprep.subr.bf16.mxu0 0
        %3830 = vmatpush1.bf16.msra.mxu0 0
        %3831 = vmatprep.subr.bf16.mxu0 0
        %3832 = vmatpush1.bf16.msra.mxu0 0
        %3833 = vmatprep.subr.bf16.mxu0 0
        %3834 = vmatpush1.bf16.msra.mxu0 0
        %3835 = vmatprep.subr.bf16.mxu0 0
        %3836 = vmatpush1.bf16.msra.mxu0 0
        %3837 = vmatprep.subr.bf16.mxu0 0
        %3838 = vmatpush1.bf16.msra.mxu0 0
        %3839 = vmatprep.subr.bf16.mxu0 0
        %3840 = vmatpush1.bf16.msra.mxu0 0
        %3841 = vmatprep.subr.bf16.mxu0 0
        %3842 = vmatpush1.bf16.msra.mxu0 0
        %3843 = vmatprep.subr.bf16.mxu0 0
        %3844 = vmatpush1.bf16.msra.mxu0 0
        %3845 = vmatprep.subr.bf16.mxu0 0
        %3846 = vmatpush1.bf16.msra.mxu0 0
        %3847 = vmatprep.subr.bf16.mxu0 0
        %3848 = vmatpush1.bf16.msra.mxu0 0
        %3849 = vmatprep.subr.bf16.mxu0 0
        %3850 = vmatpush1.bf16.msra.mxu0 0
        %3851 = vmatprep.subr.bf16.mxu0 0
        %3852 = vmatpush1.bf16.msra.mxu0 0
        %3853 = vmatprep.subr.bf16.mxu0 0
        %3854 = vmatpush1.bf16.msra.mxu0 0
        %3855 = vmatprep.subr.bf16.mxu0 0
        %3856 = vmatpush1.bf16.msra.mxu0 0
        %3857 = vmatprep.subr.bf16.mxu0 0
        %3858 = vmatpush1.bf16.msra.mxu0 0
        %3859 = vmatprep.mubr.bf16.mxu0 0
        %3860 = vmatmul.mubr.bf16.gmra.mrb[0].mxu0 %v3822
        %v3861 = vpop.f32.mrb[0].mxu0
        %v3862 = vadd.f32 0.0, %v3861
        %v3863 = vpop.f32.mrb[0].mxu0
        %v3864 = vpop.f32.mrb[0].mxu0
        %v3865 = vpop.f32.mrb[0].mxu0
        %3866 = vdwg.mxu0
        %v3868 = vsel %vm2577, %v3769, 0
        %v3871 = vsel %vm2633, %v3773, 0
        %3873 = vmatprep.subr.bf16.mxu0 0
        %3874 = vmatpush1.bf16.msra.mxu0 %v3871
        %3875 = vmatprep.subr.bf16.mxu0 0
        %3876 = vmatpush1.bf16.msra.mxu0 0
        %3877 = vmatprep.subr.bf16.mxu0 0
        %3878 = vmatpush1.bf16.msra.mxu0 0
        %3879 = vmatprep.subr.bf16.mxu0 0
        %3880 = vmatpush1.bf16.msra.mxu0 0
        %3881 = vmatprep.subr.bf16.mxu0 0
        %3882 = vmatpush1.bf16.msra.mxu0 0
        %3883 = vmatprep.subr.bf16.mxu0 0
        %3884 = vmatpush1.bf16.msra.mxu0 0
        %3885 = vmatprep.subr.bf16.mxu0 0
        %3886 = vmatpush1.bf16.msra.mxu0 0
        %3887 = vmatprep.subr.bf16.mxu0 0
        %3888 = vmatpush1.bf16.msra.mxu0 0
        %3889 = vmatprep.subr.bf16.mxu0 0
        %3890 = vmatpush1.bf16.msra.mxu0 0
        %3891 = vmatprep.subr.bf16.mxu0 0
        %3892 = vmatpush1.bf16.msra.mxu0 0
        %3893 = vmatprep.subr.bf16.mxu0 0
        %3894 = vmatpush1.bf16.msra.mxu0 0
        %3895 = vmatprep.subr.bf16.mxu0 0
        %3896 = vmatpush1.bf16.msra.mxu0 0
        %3897 = vmatprep.subr.bf16.mxu0 0
        %3898 = vmatpush1.bf16.msra.mxu0 0
        %3899 = vmatprep.subr.bf16.mxu0 0
        %3900 = vmatpush1.bf16.msra.mxu0 0
        %3901 = vmatprep.subr.bf16.mxu0 0
        %3902 = vmatpush1.bf16.msra.mxu0 0
        %3903 = vmatprep.subr.bf16.mxu0 0
        %3904 = vmatpush1.bf16.msra.mxu0 0
        %3905 = vmatprep.mubr.bf16.mxu0 0
        %3906 = vmatmul.mubr.bf16.gmra.mrb[0].mxu0 %v3868
        %v3907 = vpop.f32.mrb[0].mxu0
        %v3908 = vadd.f32 0.0, %v3907
        %v3909 = vpop.f32.mrb[0].mxu0
        %v3910 = vpop.f32.mrb[0].mxu0
        %v3911 = vpop.f32.mrb[0].mxu0
        %3912 = vdwg.mxu0
        %v3914 = vsel %vm2577, %v3770, 0
        %v3917 = vsel %vm2633, %v3774, 0
        %3919 = vmatprep.subr.bf16.mxu0 0
        %3920 = vmatpush1.bf16.msra.mxu0 %v3917
        %3921 = vmatprep.subr.bf16.mxu0 0
        %3922 = vmatpush1.bf16.msra.mxu0 0
        %3923 = vmatprep.subr.bf16.mxu0 0
        %3924 = vmatpush1.bf16.msra.mxu0 0
        %3925 = vmatprep.subr.bf16.mxu0 0
        %3926 = vmatpush1.bf16.msra.mxu0 0
        %3927 = vmatprep.subr.bf16.mxu0 0
        %3928 = vmatpush1.bf16.msra.mxu0 0
        %3929 = vmatprep.subr.bf16.mxu0 0
        %3930 = vmatpush1.bf16.msra.mxu0 0
        %3931 = vmatprep.subr.bf16.mxu0 0
        %3932 = vmatpush1.bf16.msra.mxu0 0
        %3933 = vmatprep.subr.bf16.mxu0 0
        %3934 = vmatpush1.bf16.msra.mxu0 0
        %3935 = vmatprep.subr.bf16.mxu0 0
        %3936 = vmatpush1.bf16.msra.mxu0 0
        %3937 = vmatprep.subr.bf16.mxu0 0
        %3938 = vmatpush1.bf16.msra.mxu0 0
        %3939 = vmatprep.subr.bf16.mxu0 0
        %3940 = vmatpush1.bf16.msra.mxu0 0
        %3941 = vmatprep.subr.bf16.mxu0 0
        %3942 = vmatpush1.bf16.msra.mxu0 0
        %3943 = vmatprep.subr.bf16.mxu0 0
        %3944 = vmatpush1.bf16.msra.mxu0 0
        %3945 = vmatprep.subr.bf16.mxu0 0
        %3946 = vmatpush1.bf16.msra.mxu0 0
        %3947 = vmatprep.subr.bf16.mxu0 0
        %3948 = vmatpush1.bf16.msra.mxu0 0
        %3949 = vmatprep.subr.bf16.mxu0 0
        %3950 = vmatpush1.bf16.msra.mxu0 0
        %3951 = vmatprep.mubr.bf16.mxu0 0
        %3952 = vmatmul.mubr.bf16.gmra.mrb[0].mxu0 %v3914
        %v3953 = vpop.f32.mrb[0].mxu0
        %v3954 = vadd.f32 0.0, %v3953
        %v3955 = vpop.f32.mrb[0].mxu0
        %v3956 = vpop.f32.mrb[0].mxu0
        %v3957 = vpop.f32.mrb[0].mxu0
        %3958 = vdwg.mxu0
        %v3959 = vpack.c.bf16 %v3816, %v3816
        %v3960 = vpack.c.bf16 %v3862, %v3862
        %v3961 = vpack.c.bf16 %v3908, %v3908
        %v3962 = vpack.c.bf16 %v3954, %v3954
        %v3964 = vsel %vm2392, %v3959, 0
        %3966 = vmatprep.subr.bf16.mxu0 0
        %3967 = vmatpush1.bf16.msra.mxu0 %v2827
        %3968 = vmatprep.subr.bf16.mxu0 0
        %3969 = vmatpush1.bf16.msra.mxu0 %v2828
        %3970 = vmatprep.subr.bf16.mxu0 0
        %3971 = vmatpush1.bf16.msra.mxu0 0
        %3972 = vmatprep.subr.bf16.mxu0 0
        %3973 = vmatpush1.bf16.msra.mxu0 0
        %3974 = vmatprep.subr.bf16.mxu0 0
        %3975 = vmatpush1.bf16.msra.mxu0 0
        %3976 = vmatprep.subr.bf16.mxu0 0
        %3977 = vmatpush1.bf16.msra.mxu0 0
        %3978 = vmatprep.subr.bf16.mxu0 0
        %3979 = vmatpush1.bf16.msra.mxu0 0
        %3980 = vmatprep.subr.bf16.mxu0 0
        %3981 = vmatpush1.bf16.msra.mxu0 0
        %3982 = vmatprep.subr.bf16.mxu0 0
        %3983 = vmatpush1.bf16.msra.mxu0 0
        %3984 = vmatprep.subr.bf16.mxu0 0
        %3985 = vmatpush1.bf16.msra.mxu0 0
        %3986 = vmatprep.subr.bf16.mxu0 0
        %3987 = vmatpush1.bf16.msra.mxu0 0
        %3988 = vmatprep.subr.bf16.mxu0 0
        %3989 = vmatpush1.bf16.msra.mxu0 0
        %3990 = vmatprep.subr.bf16.mxu0 0
        %3991 = vmatpush1.bf16.msra.mxu0 0
        %3992 = vmatprep.subr.bf16.mxu0 0
        %3993 = vmatpush1.bf16.msra.mxu0 0
        %3994 = vmatprep.subr.bf16.mxu0 0
        %3995 = vmatpush1.bf16.msra.mxu0 0
        %3996 = vmatprep.subr.bf16.mxu0 0
        %3997 = vmatpush1.bf16.msra.mxu0 0
        %3998 = vmatprep.mubr.bf16.mxu0 0
        %3999 = vmatmul.mubr.bf16.gmra.mrb[0].mxu0 %v3964
        %v4000 = vpop.f32.mrb[0].mxu0
        %v4001 = vadd.f32 0.0, %v4000
        %v4002 = vpop.f32.mrb[0].mxu0
        %v4003 = vpop.f32.mrb[0].mxu0
        %v4004 = vpop.f32.mrb[0].mxu0
        %4005 = vdwg.mxu0
        %v4007 = vsel %vm2392, %v3960, 0
        %4009 = vmatprep.subr.bf16.mxu0 0
        %4010 = vmatpush1.bf16.msra.mxu0 %v2882
        %4011 = vmatprep.subr.bf16.mxu0 0
        %4012 = vmatpush1.bf16.msra.mxu0 %v2883
        %4013 = vmatprep.subr.bf16.mxu0 0
        %4014 = vmatpush1.bf16.msra.mxu0 0
        %4015 = vmatprep.subr.bf16.mxu0 0
        %4016 = vmatpush1.bf16.msra.mxu0 0
        %4017 = vmatprep.subr.bf16.mxu0 0
        %4018 = vmatpush1.bf16.msra.mxu0 0
        %4019 = vmatprep.subr.bf16.mxu0 0
        %4020 = vmatpush1.bf16.msra.mxu0 0
        %4021 = vmatprep.subr.bf16.mxu0 0
        %4022 = vmatpush1.bf16.msra.mxu0 0
        %4023 = vmatprep.subr.bf16.mxu0 0
        %4024 = vmatpush1.bf16.msra.mxu0 0
        %4025 = vmatprep.subr.bf16.mxu0 0
        %4026 = vmatpush1.bf16.msra.mxu0 0
        %4027 = vmatprep.subr.bf16.mxu0 0
        %4028 = vmatpush1.bf16.msra.mxu0 0
        %4029 = vmatprep.subr.bf16.mxu0 0
        %4030 = vmatpush1.bf16.msra.mxu0 0
        %4031 = vmatprep.subr.bf16.mxu0 0
        %4032 = vmatpush1.bf16.msra.mxu0 0
        %4033 = vmatprep.subr.bf16.mxu0 0
        %4034 = vmatpush1.bf16.msra.mxu0 0
        %4035 = vmatprep.subr.bf16.mxu0 0
        %4036 = vmatpush1.bf16.msra.mxu0 0
        %4037 = vmatprep.subr.bf16.mxu0 0
        %4038 = vmatpush1.bf16.msra.mxu0 0
        %4039 = vmatprep.subr.bf16.mxu0 0
        %4040 = vmatpush1.bf16.msra.mxu0 0
        %4041 = vmatprep.mubr.bf16.mxu0 0
        %4042 = vmatmul.mubr.bf16.gmra.mrb[0].mxu0 %v4007
        %v4043 = vpop.f32.mrb[0].mxu0
        %v4044 = vadd.f32 0.0, %v4043
        %v4045 = vpop.f32.mrb[0].mxu0
        %v4046 = vpop.f32.mrb[0].mxu0
        %v4047 = vpop.f32.mrb[0].mxu0
        %4048 = vdwg.mxu0
        %v4050 = vsel %vm2392, %v3961, 0
        %4052 = vmatprep.subr.bf16.mxu0 0
        %4053 = vmatpush1.bf16.msra.mxu0 %v2937
        %4054 = vmatprep.subr.bf16.mxu0 0
        %4055 = vmatpush1.bf16.msra.mxu0 %v2938
        %4056 = vmatprep.subr.bf16.mxu0 0
        %4057 = vmatpush1.bf16.msra.mxu0 0
        %4058 = vmatprep.subr.bf16.mxu0 0
        %4059 = vmatpush1.bf16.msra.mxu0 0
        %4060 = vmatprep.subr.bf16.mxu0 0
        %4061 = vmatpush1.bf16.msra.mxu0 0
        %4062 = vmatprep.subr.bf16.mxu0 0
        %4063 = vmatpush1.bf16.msra.mxu0 0
        %4064 = vmatprep.subr.bf16.mxu0 0
        %4065 = vmatpush1.bf16.msra.mxu0 0
        %4066 = vmatprep.subr.bf16.mxu0 0
        %4067 = vmatpush1.bf16.msra.mxu0 0
        %4068 = vmatprep.subr.bf16.mxu0 0
        %4069 = vmatpush1.bf16.msra.mxu0 0
        %4070 = vmatprep.subr.bf16.mxu0 0
        %4071 = vmatpush1.bf16.msra.mxu0 0
        %4072 = vmatprep.subr.bf16.mxu0 0
        %4073 = vmatpush1.bf16.msra.mxu0 0
        %4074 = vmatprep.subr.bf16.mxu0 0
        %4075 = vmatpush1.bf16.msra.mxu0 0
        %4076 = vmatprep.subr.bf16.mxu0 0
        %4077 = vmatpush1.bf16.msra.mxu0 0
        %4078 = vmatprep.subr.bf16.mxu0 0
        %4079 = vmatpush1.bf16.msra.mxu0 0
        %4080 = vmatprep.subr.bf16.mxu0 0
        %4081 = vmatpush1.bf16.msra.mxu0 0
        %4082 = vmatprep.subr.bf16.mxu0 0
        %4083 = vmatpush1.bf16.msra.mxu0 0
        %4084 = vmatprep.mubr.bf16.mxu0 0
        %4085 = vmatmul.mubr.bf16.gmra.mrb[0].mxu0 %v4050
        %v4086 = vpop.f32.mrb[0].mxu0
        %v4087 = vadd.f32 0.0, %v4086
        %v4088 = vpop.f32.mrb[0].mxu0
        %v4089 = vpop.f32.mrb[0].mxu0
        %v4090 = vpop.f32.mrb[0].mxu0
        %4091 = vdwg.mxu0
        %v4093 = vsel %vm2392, %v3962, 0
        %4095 = vmatprep.subr.bf16.mxu0 0
        %4096 = vmatpush1.bf16.msra.mxu0 %v2992
        %4097 = vmatprep.subr.bf16.mxu0 0
        %4098 = vmatpush1.bf16.msra.mxu0 %v2993
        %4099 = vmatprep.subr.bf16.mxu0 0
        %4100 = vmatpush1.bf16.msra.mxu0 0
        %4101 = vmatprep.subr.bf16.mxu0 0
        %4102 = vmatpush1.bf16.msra.mxu0 0
        %4103 = vmatprep.subr.bf16.mxu0 0
        %4104 = vmatpush1.bf16.msra.mxu0 0
        %4105 = vmatprep.subr.bf16.mxu0 0
        %4106 = vmatpush1.bf16.msra.mxu0 0
        %4107 = vmatprep.subr.bf16.mxu0 0
        %4108 = vmatpush1.bf16.msra.mxu0 0
        %4109 = vmatprep.subr.bf16.mxu0 0
        %4110 = vmatpush1.bf16.msra.mxu0 0
        %4111 = vmatprep.subr.bf16.mxu0 0
        %4112 = vmatpush1.bf16.msra.mxu0 0
        %4113 = vmatprep.subr.bf16.mxu0 0
        %4114 = vmatpush1.bf16.msra.mxu0 0
        %4115 = vmatprep.subr.bf16.mxu0 0
        %4116 = vmatpush1.bf16.msra.mxu0 0
        %4117 = vmatprep.subr.bf16.mxu0 0
        %4118 = vmatpush1.bf16.msra.mxu0 0
        %4119 = vmatprep.subr.bf16.mxu0 0
        %4120 = vmatpush1.bf16.msra.mxu0 0
        %4121 = vmatprep.subr.bf16.mxu0 0
        %4122 = vmatpush1.bf16.msra.mxu0 0
        %4123 = vmatprep.subr.bf16.mxu0 0
        %4124 = vmatpush1.bf16.msra.mxu0 0
        %4125 = vmatprep.subr.bf16.mxu0 0
        %4126 = vmatpush1.bf16.msra.mxu0 0
        %4127 = vmatprep.mubr.bf16.mxu0 0
        %4128 = vmatmul.mubr.bf16.gmra.mrb[0].mxu0 %v4093
        %v4129 = vpop.f32.mrb[0].mxu0
        %v4130 = vadd.f32 0.0, %v4129
        %v4131 = vpop.f32.mrb[0].mxu0
        %v4132 = vpop.f32.mrb[0].mxu0
        %v4133 = vpop.f32.mrb[0].mxu0
        %4134 = vdwg.mxu0
        %v4135 = vadd.f32 %v4001, %v4044
        %v4136 = vadd.f32 %v4135, %v4087
        %v4137 = vadd.f32 %v4136, %v4130
        %v4138 = vld [vmem:[%s946] sm:$0x1]
        %v4140 = vlaneseq
        %v4141 = vshrl.u32 %v4140, 7
        %v4142 = vsub.s32 0, %v4141
        %v4143 = vrot.slane %v4138, %v4142
        %v4145 = vadd.f32 %v3041, %v4143
        %v4146 = vadd.f32 %v4137, %v4143
        %v4147 = vadd.f32 %v4145, %v1026
        %v4148 = vadd.f32 %v4146, %v1027
        %v4149 = vld [vmem:[%s949] sm:$0x1]
        %v4150 = vld [vmem:[%s952] sm:$0x1]
        %4151 = vadd.xlane.f32.xlu0 %v4147
        %v4152 = vpop.xlane.xlu0 %4151
        %4153 = vadd.xlane.f32.xlu0 %v4148
        %v4154 = vpop.xlane.xlu0 %4153
        %v4155 = vrcp.pop 128.0
        %v4156 = vmul.f32 %v4152, %v4155
        %v4157 = vmul.f32 %v4154, %v4155
        %v4158 = vsub.f32 %v4147, %v4156
        %v4159 = vsub.f32 %v4148, %v4157
        %v4160 = vmul.f32 %v4158, %v4158
        %v4161 = vmul.f32 %v4159, %v4159
        %4162 = vadd.xlane.f32.xlu0 %v4160
        %v4163 = vpop.xlane.xlu0 %4162
        %4164 = vadd.xlane.f32.xlu0 %v4161
        %v4165 = vpop.xlane.xlu0 %4164
        %v4166 = vmul.f32 %v4163, %v4155
        %v4167 = vmul.f32 %v4165, %v4155
        %v4168 = vadd.f32 %v4166, 1e-12
        %v4169 = vadd.f32 %v4167, 1e-12
        %v4170 = vrsqrt.pop %v4168
        %v4171 = vrsqrt.pop %v4169
        %v4172 = vmul.f32 %v4158, %v4170
        %v4173 = vmul.f32 %v4159, %v4171
        %v4175 = vlaneseq
        %v4176 = vshrl.u32 %v4175, 7
        %v4177 = vsub.s32 0, %v4176
        %v4178 = vrot.slane %v4149, %v4177
        %v4180 = vmul.f32 %v4172, %v4178
        %v4181 = vmul.f32 %v4173, %v4178
        %v4183 = vlaneseq
        %v4184 = vshrl.u32 %v4183, 7
        %v4185 = vsub.s32 0, %v4184
        %v4186 = vrot.slane %v4150, %v4185
        %v4188 = vadd.f32 %v4180, %v4186
        %v4189 = vadd.f32 %v4181, %v4186
        %v4190 = vld [vmem:[%s957] sm:$0xff]
        %v4191 = vld [vmem:[%s957 + $0x8] sm:$0xff]
        %v4192 = vld [vmem:[%s957 + $0x10] sm:$0xff]
        %v4193 = vld [vmem:[%s957 + $0x18] sm:$0xff]
        %v4194 = vld [vmem:[%s957 + $0x20] sm:$0xff]
        %v4195 = vld [vmem:[%s957 + $0x28] sm:$0xff]
        %v4196 = vld [vmem:[%s957 + $0x30] sm:$0xff]
        %v4197 = vld [vmem:[%s957 + $0x38] sm:$0xff]
        %v4198 = vld [vmem:[%s957 + $0x40] sm:$0xff]
        %v4199 = vld [vmem:[%s957 + $0x48] sm:$0xff]
        %v4200 = vld [vmem:[%s957 + $0x50] sm:$0xff]
        %v4201 = vld [vmem:[%s957 + $0x58] sm:$0xff]
        %v4202 = vld [vmem:[%s957 + $0x60] sm:$0xff]
        %v4203 = vld [vmem:[%s957 + $0x68] sm:$0xff]
        %v4204 = vld [vmem:[%s957 + $0x70] sm:$0xff]
        %v4205 = vld [vmem:[%s957 + $0x78] sm:$0xff]
        %v4206 = vld [vmem:[%s957 + $0x80] sm:$0xff]
        %v4207 = vld [vmem:[%s957 + $0x88] sm:$0xff]
        %v4208 = vld [vmem:[%s957 + $0x90] sm:$0xff]
        %v4209 = vld [vmem:[%s957 + $0x98] sm:$0xff]
        %v4210 = vld [vmem:[%s957 + $0xa0] sm:$0xff]
        %v4211 = vld [vmem:[%s957 + $0xa8] sm:$0xff]
        %v4212 = vld [vmem:[%s957 + $0xb0] sm:$0xff]
        %v4213 = vld [vmem:[%s957 + $0xb8] sm:$0xff]
        %v4214 = vld [vmem:[%s957 + $0xc0] sm:$0xff]
        %v4215 = vld [vmem:[%s957 + $0xc8] sm:$0xff]
        %v4216 = vld [vmem:[%s957 + $0xd0] sm:$0xff]
        %v4217 = vld [vmem:[%s957 + $0xd8] sm:$0xff]
        %v4218 = vld [vmem:[%s957 + $0xe0] sm:$0xff]
        %v4219 = vld [vmem:[%s957 + $0xe8] sm:$0xff]
        %v4220 = vld [vmem:[%s957 + $0xf0] sm:$0xff]
        %v4221 = vld [vmem:[%s957 + $0xf8] sm:$0xff]
        %v4222 = vpack.c.bf16 %v4189, %v4188
        %v4223 = vld [vmem:[%s961] sm:$0xf]
        %v4225 = vlaneseq
        %v4226 = vshrl.u32 %v4225, 7
        %v4227 = vsub.s32 0, %v4226
        %v4228 = vrot.slane %v4223, %v4227
        %v4229 = vlaneseq
        %v4230 = vshrl.u32 %v4229, 7
        %v4231 = vsub.s32 1, %v4230
        %v4232 = vrot.slane %v4223, %v4231
        %v4233 = vlaneseq
        %v4234 = vshrl.u32 %v4233, 7
        %v4235 = vsub.s32 2, %v4234
        %v4236 = vrot.slane %v4223, %v4235
        %v4237 = vlaneseq
        %v4238 = vshrl.u32 %v4237, 7
        %v4239 = vsub.s32 3, %v4238
        %v4240 = vrot.slane %v4223, %v4239
        %v4277 = vunpack.c.l.b16 %v4190
        %v4278 = vunpack.c.h.b16 %v4190
        %v4279 = vunpack.c.l.b16 %v4191
        %v4280 = vunpack.c.h.b16 %v4191
        %v4281 = vunpack.c.l.b16 %v4192
        %v4282 = vunpack.c.h.b16 %v4192
        %v4283 = vunpack.c.l.b16 %v4193
        %v4284 = vunpack.c.h.b16 %v4193
        %v4285 = vunpack.c.l.b16 %v4194
        %v4286 = vunpack.c.h.b16 %v4194
        %v4287 = vunpack.c.l.b16 %v4195
        %v4288 = vunpack.c.h.b16 %v4195
        %v4289 = vunpack.c.l.b16 %v4196
        %v4290 = vunpack.c.h.b16 %v4196
        %v4291 = vunpack.c.l.b16 %v4197
        %v4292 = vunpack.c.h.b16 %v4197
        %v4293 = vunpack.c.l.b16 %v4198
        %v4294 = vunpack.c.h.b16 %v4198
        %v4295 = vunpack.c.l.b16 %v4199
        %v4296 = vunpack.c.h.b16 %v4199
        %v4297 = vunpack.c.l.b16 %v4200
        %v4298 = vunpack.c.h.b16 %v4200
        %v4299 = vunpack.c.l.b16 %v4201
        %v4300 = vunpack.c.h.b16 %v4201
        %v4301 = vunpack.c.l.b16 %v4202
        %v4302 = vunpack.c.h.b16 %v4202
        %v4303 = vunpack.c.l.b16 %v4203
        %v4304 = vunpack.c.h.b16 %v4203
        %v4305 = vunpack.c.l.b16 %v4204
        %v4306 = vunpack.c.h.b16 %v4204
        %v4307 = vunpack.c.l.b16 %v4205
        %v4308 = vunpack.c.h.b16 %v4205
        %v4309 = vunpack.c.l.b16 %v4206
        %v4310 = vunpack.c.h.b16 %v4206
        %v4311 = vunpack.c.l.b16 %v4207
        %v4312 = vunpack.c.h.b16 %v4207
        %v4313 = vunpack.c.l.b16 %v4208
        %v4314 = vunpack.c.h.b16 %v4208
        %v4315 = vunpack.c.l.b16 %v4209
        %v4316 = vunpack.c.h.b16 %v4209
        %v4317 = vunpack.c.l.b16 %v4210
        %v4318 = vunpack.c.h.b16 %v4210
        %v4319 = vunpack.c.l.b16 %v4211
        %v4320 = vunpack.c.h.b16 %v4211
        %v4321 = vunpack.c.l.b16 %v4212
        %v4322 = vunpack.c.h.b16 %v4212
        %v4323 = vunpack.c.l.b16 %v4213
        %v4324 = vunpack.c.h.b16 %v4213
        %v4325 = vunpack.c.l.b16 %v4214
        %v4326 = vunpack.c.h.b16 %v4214
        %v4327 = vunpack.c.l.b16 %v4215
        %v4328 = vunpack.c.h.b16 %v4215
        %v4329 = vunpack.c.l.b16 %v4216
        %v4330 = vunpack.c.h.b16 %v4216
        %v4331 = vunpack.c.l.b16 %v4217
        %v4332 = vunpack.c.h.b16 %v4217
        %v4333 = vunpack.c.l.b16 %v4218
        %v4334 = vunpack.c.h.b16 %v4218
        %v4335 = vunpack.c.l.b16 %v4219
        %v4336 = vunpack.c.h.b16 %v4219
        %v4337 = vunpack.c.l.b16 %v4220
        %v4338 = vunpack.c.h.b16 %v4220
        %v4339 = vunpack.c.l.b16 %v4221
        %v4340 = vunpack.c.h.b16 %v4221
        %v4341 = vpack.c.b16 %v4281, %v4277
        %v4342 = vpack.c.b16 %v4282, %v4278
        %v4343 = vpack.c.b16 %v4283, %v4279
        %v4344 = vpack.c.b16 %v4284, %v4280
        %v4345 = vpack.c.b16 %v4289, %v4285
        %v4346 = vpack.c.b16 %v4290, %v4286
        %v4347 = vpack.c.b16 %v4291, %v4287
        %v4348 = vpack.c.b16 %v4292, %v4288
        %v4349 = vpack.c.b16 %v4297, %v4293
        %v4350 = vpack.c.b16 %v4298, %v4294
        %v4351 = vpack.c.b16 %v4299, %v4295
        %v4352 = vpack.c.b16 %v4300, %v4296
        %v4353 = vpack.c.b16 %v4305, %v4301
        %v4354 = vpack.c.b16 %v4306, %v4302
        %v4355 = vpack.c.b16 %v4307, %v4303
        %v4356 = vpack.c.b16 %v4308, %v4304
        %v4357 = vpack.c.b16 %v4313, %v4309
        %v4358 = vpack.c.b16 %v4314, %v4310
        %v4359 = vpack.c.b16 %v4315, %v4311
        %v4360 = vpack.c.b16 %v4316, %v4312
        %v4361 = vpack.c.b16 %v4321, %v4317
        %v4362 = vpack.c.b16 %v4322, %v4318
        %v4363 = vpack.c.b16 %v4323, %v4319
        %v4364 = vpack.c.b16 %v4324, %v4320
        %v4365 = vpack.c.b16 %v4329, %v4325
        %v4366 = vpack.c.b16 %v4330, %v4326
        %v4367 = vpack.c.b16 %v4331, %v4327
        %v4368 = vpack.c.b16 %v4332, %v4328
        %v4369 = vpack.c.b16 %v4337, %v4333
        %v4370 = vpack.c.b16 %v4338, %v4334
        %v4371 = vpack.c.b16 %v4339, %v4335
        %v4372 = vpack.c.b16 %v4340, %v4336
        %4405 = vmatprep.subr.bf16.mxu0 %v4342
        %4406 = vmatpush1.bf16.msra.mxu0 %v4341
        %4407 = vmatprep.subr.bf16.mxu0 %v4346
        %4408 = vmatpush1.bf16.msra.mxu0 %v4345
        %4409 = vmatprep.subr.bf16.mxu0 %v4350
        %4410 = vmatpush1.bf16.msra.mxu0 %v4349
        %4411 = vmatprep.subr.bf16.mxu0 %v4354
        %4412 = vmatpush1.bf16.msra.mxu0 %v4353
        %4413 = vmatprep.subr.bf16.mxu0 %v4358
        %4414 = vmatpush1.bf16.msra.mxu0 %v4357
        %4415 = vmatprep.subr.bf16.mxu0 %v4362
        %4416 = vmatpush1.bf16.msra.mxu0 %v4361
        %4417 = vmatprep.subr.bf16.mxu0 %v4366
        %4418 = vmatpush1.bf16.msra.mxu0 %v4365
        %4419 = vmatprep.subr.bf16.mxu0 %v4370
        %4420 = vmatpush1.bf16.msra.mxu0 %v4369
        %4421 = vmatprep.subr.bf16.mxu0 0
        %4422 = vmatpush1.bf16.msra.mxu0 0
        %4423 = vmatprep.subr.bf16.mxu0 0
        %4424 = vmatpush1.bf16.msra.mxu0 0
        %4425 = vmatprep.subr.bf16.mxu0 0
        %4426 = vmatpush1.bf16.msra.mxu0 0
        %4427 = vmatprep.subr.bf16.mxu0 0
        %4428 = vmatpush1.bf16.msra.mxu0 0
        %4429 = vmatprep.subr.bf16.mxu0 0
        %4430 = vmatpush1.bf16.msra.mxu0 0
        %4431 = vmatprep.subr.bf16.mxu0 0
        %4432 = vmatpush1.bf16.msra.mxu0 0
        %4433 = vmatprep.subr.bf16.mxu0 0
        %4434 = vmatpush1.bf16.msra.mxu0 0
        %4435 = vmatprep.subr.bf16.mxu0 0
        %4436 = vmatpush1.bf16.msra.mxu0 0
        %4437 = vmatprep.mubr.bf16.mxu0 0
        %4438 = vmatmul.mubr.bf16.gmra.mrb[0].mxu0 %v4222
        %v4439 = vpop.f32.mrb[0].mxu0
        %v4440 = vadd.f32 %v4228, %v4439
        %v4441 = vpop.f32.mrb[0].mxu0
        %v4442 = vadd.f32 %v4232, %v4441
        %v4443 = vpop.f32.mrb[0].mxu0
        %v4444 = vadd.f32 %v4228, %v4443
        %v4445 = vpop.f32.mrb[0].mxu0
        %v4446 = vadd.f32 %v4232, %v4445
        %4447 = vdwg.mxu0
        %4448 = vmatprep.subr.bf16.mxu0 %v4344
        %4449 = vmatpush1.bf16.msra.mxu0 %v4343
        %4450 = vmatprep.subr.bf16.mxu0 %v4348
        %4451 = vmatpush1.bf16.msra.mxu0 %v4347
        %4452 = vmatprep.subr.bf16.mxu0 %v4352
        %4453 = vmatpush1.bf16.msra.mxu0 %v4351
        %4454 = vmatprep.subr.bf16.mxu0 %v4356
        %4455 = vmatpush1.bf16.msra.mxu0 %v4355
        %4456 = vmatprep.subr.bf16.mxu0 %v4360
        %4457 = vmatpush1.bf16.msra.mxu0 %v4359
        %4458 = vmatprep.subr.bf16.mxu0 %v4364
        %4459 = vmatpush1.bf16.msra.mxu0 %v4363
        %4460 = vmatprep.subr.bf16.mxu0 %v4368
        %4461 = vmatpush1.bf16.msra.mxu0 %v4367
        %4462 = vmatprep.subr.bf16.mxu0 %v4372
        %4463 = vmatpush1.bf16.msra.mxu0 %v4371
        %4464 = vmatprep.subr.bf16.mxu0 0
        %4465 = vmatpush1.bf16.msra.mxu0 0
        %4466 = vmatprep.subr.bf16.mxu0 0
        %4467 = vmatpush1.bf16.msra.mxu0 0
        %4468 = vmatprep.subr.bf16.mxu0 0
        %4469 = vmatpush1.bf16.msra.mxu0 0
        %4470 = vmatprep.subr.bf16.mxu0 0
        %4471 = vmatpush1.bf16.msra.mxu0 0
        %4472 = vmatprep.subr.bf16.mxu0 0
        %4473 = vmatpush1.bf16.msra.mxu0 0
        %4474 = vmatprep.subr.bf16.mxu0 0
        %4475 = vmatpush1.bf16.msra.mxu0 0
        %4476 = vmatprep.subr.bf16.mxu0 0
        %4477 = vmatpush1.bf16.msra.mxu0 0
        %4478 = vmatprep.subr.bf16.mxu0 0
        %4479 = vmatpush1.bf16.msra.mxu0 0
        %4480 = vmatprep.mubr.bf16.mxu0 0
        %4481 = vmatmul.mubr.bf16.gmra.mrb[0].mxu0 %v4222
        %v4482 = vpop.f32.mrb[0].mxu0
        %v4483 = vadd.f32 %v4236, %v4482
        %v4484 = vpop.f32.mrb[0].mxu0
        %v4485 = vadd.f32 %v4240, %v4484
        %v4486 = vpop.f32.mrb[0].mxu0
        %v4487 = vadd.f32 %v4236, %v4486
        %v4488 = vpop.f32.mrb[0].mxu0
        %v4489 = vadd.f32 %v4240, %v4488
        %4490 = vdwg.mxu0
        %v4491 = vmul.f32 %v4440, 0.5
        %v4492 = vmul.f32 %v4442, 0.5
        %v4493 = vmul.f32 %v4483, 0.5
        %v4494 = vmul.f32 %v4485, 0.5
        %v4495 = vmul.f32 %v4444, 0.5
        %v4496 = vmul.f32 %v4446, 0.5
        %v4497 = vmul.f32 %v4487, 0.5
        %v4498 = vmul.f32 %v4489, 0.5
        %v4499 = vmul.f32 %v4440, 0.044715
        %v4500 = vmul.f32 %v4442, 0.044715
        %v4501 = vmul.f32 %v4483, 0.044715
        %v4502 = vmul.f32 %v4485, 0.044715
        %v4503 = vmul.f32 %v4444, 0.044715
        %v4504 = vmul.f32 %v4446, 0.044715
        %v4505 = vmul.f32 %v4487, 0.044715
        %v4506 = vmul.f32 %v4489, 0.044715
        %v4507 = vmul.f32 %v4499, %v4440
        %v4508 = vmul.f32 %v4500, %v4442
        %v4509 = vmul.f32 %v4501, %v4483
        %v4510 = vmul.f32 %v4502, %v4485
        %v4511 = vmul.f32 %v4503, %v4444
        %v4512 = vmul.f32 %v4504, %v4446
        %v4513 = vmul.f32 %v4505, %v4487
        %v4514 = vmul.f32 %v4506, %v4489
        %v4515 = vmul.f32 %v4507, %v4440
        %v4516 = vmul.f32 %v4508, %v4442
        %v4517 = vmul.f32 %v4509, %v4483
        %v4518 = vmul.f32 %v4510, %v4485
        %v4519 = vmul.f32 %v4511, %v4444
        %v4520 = vmul.f32 %v4512, %v4446
        %v4521 = vmul.f32 %v4513, %v4487
        %v4522 = vmul.f32 %v4514, %v4489
        %v4523 = vadd.f32 %v4440, %v4515
        %v4524 = vadd.f32 %v4442, %v4516
        %v4525 = vadd.f32 %v4483, %v4517
        %v4526 = vadd.f32 %v4485, %v4518
        %v4527 = vadd.f32 %v4444, %v4519
        %v4528 = vadd.f32 %v4446, %v4520
        %v4529 = vadd.f32 %v4487, %v4521
        %v4530 = vadd.f32 %v4489, %v4522
        %v4531 = vmul.f32 %v4523, 0.7978846
        %v4532 = vmul.f32 %v4524, 0.7978846
        %v4533 = vmul.f32 %v4525, 0.7978846
        %v4534 = vmul.f32 %v4526, 0.7978846
        %v4535 = vmul.f32 %v4527, 0.7978846
        %v4536 = vmul.f32 %v4528, 0.7978846
        %v4537 = vmul.f32 %v4529, 0.7978846
        %v4538 = vmul.f32 %v4530, 0.7978846
        %v4539 = vtanh.pop %v4531
        %v4540 = vtanh.pop %v4532
        %v4541 = vtanh.pop %v4533
        %v4542 = vtanh.pop %v4534
        %v4543 = vtanh.pop %v4535
        %v4544 = vtanh.pop %v4536
        %v4545 = vtanh.pop %v4537
        %v4546 = vtanh.pop %v4538
        %v4547 = vadd.f32 %v4539, 1.0
        %v4548 = vadd.f32 %v4540, 1.0
        %v4549 = vadd.f32 %v4541, 1.0
        %v4550 = vadd.f32 %v4542, 1.0
        %v4551 = vadd.f32 %v4543, 1.0
        %v4552 = vadd.f32 %v4544, 1.0
        %v4553 = vadd.f32 %v4545, 1.0
        %v4554 = vadd.f32 %v4546, 1.0
        %v4555 = vmul.f32 %v4491, %v4547
        %v4556 = vmul.f32 %v4492, %v4548
        %v4557 = vmul.f32 %v4493, %v4549
        %v4558 = vmul.f32 %v4494, %v4550
        %v4559 = vmul.f32 %v4495, %v4551
        %v4560 = vmul.f32 %v4496, %v4552
        %v4561 = vmul.f32 %v4497, %v4553
        %v4562 = vmul.f32 %v4498, %v4554
        %v4563 = vld [vmem:[%s966] sm:$0xf]
        %v4564 = vld [vmem:[%s966 + $0x4] sm:$0xf]
        %v4565 = vld [vmem:[%s966 + $0x8] sm:$0xf]
        %v4566 = vld [vmem:[%s966 + $0xc] sm:$0xf]
        %v4567 = vld [vmem:[%s966 + $0x10] sm:$0xf]
        %v4568 = vld [vmem:[%s966 + $0x14] sm:$0xf]
        %v4569 = vld [vmem:[%s966 + $0x18] sm:$0xf]
        %v4570 = vld [vmem:[%s966 + $0x1c] sm:$0xf]
        %v4571 = vld [vmem:[%s966 + $0x20] sm:$0xf]
        %v4572 = vld [vmem:[%s966 + $0x24] sm:$0xf]
        %v4573 = vld [vmem:[%s966 + $0x28] sm:$0xf]
        %v4574 = vld [vmem:[%s966 + $0x2c] sm:$0xf]
        %v4575 = vld [vmem:[%s966 + $0x30] sm:$0xf]
        %v4576 = vld [vmem:[%s966 + $0x34] sm:$0xf]
        %v4577 = vld [vmem:[%s966 + $0x38] sm:$0xf]
        %v4578 = vld [vmem:[%s966 + $0x3c] sm:$0xf]
        %v4579 = vld [vmem:[%s966 + $0x40] sm:$0xf]
        %v4580 = vld [vmem:[%s966 + $0x44] sm:$0xf]
        %v4581 = vld [vmem:[%s966 + $0x48] sm:$0xf]
        %v4582 = vld [vmem:[%s966 + $0x4c] sm:$0xf]
        %v4583 = vld [vmem:[%s966 + $0x50] sm:$0xf]
        %v4584 = vld [vmem:[%s966 + $0x54] sm:$0xf]
        %v4585 = vld [vmem:[%s966 + $0x58] sm:$0xf]
        %v4586 = vld [vmem:[%s966 + $0x5c] sm:$0xf]
        %v4587 = vld [vmem:[%s966 + $0x60] sm:$0xf]
        %v4588 = vld [vmem:[%s966 + $0x64] sm:$0xf]
        %v4589 = vld [vmem:[%s966 + $0x68] sm:$0xf]
        %v4590 = vld [vmem:[%s966 + $0x6c] sm:$0xf]
        %v4591 = vld [vmem:[%s966 + $0x70] sm:$0xf]
        %v4592 = vld [vmem:[%s966 + $0x74] sm:$0xf]
        %v4593 = vld [vmem:[%s966 + $0x78] sm:$0xf]
        %v4594 = vld [vmem:[%s966 + $0x7c] sm:$0xf]
        %v4595 = vld [vmem:[%s966 + $0x80] sm:$0xf]
        %v4596 = vld [vmem:[%s966 + $0x84] sm:$0xf]
        %v4597 = vld [vmem:[%s966 + $0x88] sm:$0xf]
        %v4598 = vld [vmem:[%s966 + $0x8c] sm:$0xf]
        %v4599 = vld [vmem:[%s966 + $0x90] sm:$0xf]
        %v4600 = vld [vmem:[%s966 + $0x94] sm:$0xf]
        %v4601 = vld [vmem:[%s966 + $0x98] sm:$0xf]
        %v4602 = vld [vmem:[%s966 + $0x9c] sm:$0xf]
        %v4603 = vld [vmem:[%s966 + $0xa0] sm:$0xf]
        %v4604 = vld [vmem:[%s966 + $0xa4] sm:$0xf]
        %v4605 = vld [vmem:[%s966 + $0xa8] sm:$0xf]
        %v4606 = vld [vmem:[%s966 + $0xac] sm:$0xf]
        %v4607 = vld [vmem:[%s966 + $0xb0] sm:$0xf]
        %v4608 = vld [vmem:[%s966 + $0xb4] sm:$0xf]
        %v4609 = vld [vmem:[%s966 + $0xb8] sm:$0xf]
        %v4610 = vld [vmem:[%s966 + $0xbc] sm:$0xf]
        %v4611 = vld [vmem:[%s966 + $0xc0] sm:$0xf]
        %v4612 = vld [vmem:[%s966 + $0xc4] sm:$0xf]
        %v4613 = vld [vmem:[%s966 + $0xc8] sm:$0xf]
        %v4614 = vld [vmem:[%s966 + $0xcc] sm:$0xf]
        %v4615 = vld [vmem:[%s966 + $0xd0] sm:$0xf]
        %v4616 = vld [vmem:[%s966 + $0xd4] sm:$0xf]
        %v4617 = vld [vmem:[%s966 + $0xd8] sm:$0xf]
        %v4618 = vld [vmem:[%s966 + $0xdc] sm:$0xf]
        %v4619 = vld [vmem:[%s966 + $0xe0] sm:$0xf]
        %v4620 = vld [vmem:[%s966 + $0xe4] sm:$0xf]
        %v4621 = vld [vmem:[%s966 + $0xe8] sm:$0xf]
        %v4622 = vld [vmem:[%s966 + $0xec] sm:$0xf]
        %v4623 = vld [vmem:[%s966 + $0xf0] sm:$0xf]
        %v4624 = vld [vmem:[%s966 + $0xf4] sm:$0xf]
        %v4625 = vld [vmem:[%s966 + $0xf8] sm:$0xf]
        %v4626 = vld [vmem:[%s966 + $0xfc] sm:$0xf]
        %v4627 = vpack.c.bf16 %v4559, %v4555
        %v4628 = vpack.c.bf16 %v4560, %v4556
        %v4629 = vpack.c.bf16 %v4561, %v4557
        %v4630 = vpack.c.bf16 %v4562, %v4558
        %v4631 = vld [vmem:[%s969] sm:$0x1]
        %v4633 = vlaneseq
        %v4634 = vshrl.u32 %v4633, 7
        %v4635 = vsub.s32 0, %v4634
        %v4636 = vrot.slane %v4631, %v4635
        %v4702 = vunpack.c.l.b16 %v4563
        %v4703 = vunpack.c.l.b16 %v4564
        %v4704 = vunpack.c.l.b16 %v4565
        %v4705 = vunpack.c.l.b16 %v4566
        %v4706 = vunpack.c.l.b16 %v4567
        %v4707 = vunpack.c.l.b16 %v4568
        %v4708 = vunpack.c.l.b16 %v4569
        %v4709 = vunpack.c.l.b16 %v4570
        %v4710 = vunpack.c.l.b16 %v4571
        %v4711 = vunpack.c.l.b16 %v4572
        %v4712 = vunpack.c.l.b16 %v4573
        %v4713 = vunpack.c.l.b16 %v4574
        %v4714 = vunpack.c.l.b16 %v4575
        %v4715 = vunpack.c.l.b16 %v4576
        %v4716 = vunpack.c.l.b16 %v4577
        %v4717 = vunpack.c.l.b16 %v4578
        %v4718 = vunpack.c.l.b16 %v4579
        %v4719 = vunpack.c.l.b16 %v4580
        %v4720 = vunpack.c.l.b16 %v4581
        %v4721 = vunpack.c.l.b16 %v4582
        %v4722 = vunpack.c.l.b16 %v4583
        %v4723 = vunpack.c.l.b16 %v4584
        %v4724 = vunpack.c.l.b16 %v4585
        %v4725 = vunpack.c.l.b16 %v4586
        %v4726 = vunpack.c.l.b16 %v4587
        %v4727 = vunpack.c.l.b16 %v4588
        %v4728 = vunpack.c.l.b16 %v4589
        %v4729 = vunpack.c.l.b16 %v4590
        %v4730 = vunpack.c.l.b16 %v4591
        %v4731 = vunpack.c.l.b16 %v4592
        %v4732 = vunpack.c.l.b16 %v4593
        %v4733 = vunpack.c.l.b16 %v4594
        %v4734 = vunpack.c.l.b16 %v4595
        %v4735 = vunpack.c.l.b16 %v4596
        %v4736 = vunpack.c.l.b16 %v4597
        %v4737 = vunpack.c.l.b16 %v4598
        %v4738 = vunpack.c.l.b16 %v4599
        %v4739 = vunpack.c.l.b16 %v4600
        %v4740 = vunpack.c.l.b16 %v4601
        %v4741 = vunpack.c.l.b16 %v4602
        %v4742 = vunpack.c.l.b16 %v4603
        %v4743 = vunpack.c.l.b16 %v4604
        %v4744 = vunpack.c.l.b16 %v4605
        %v4745 = vunpack.c.l.b16 %v4606
        %v4746 = vunpack.c.l.b16 %v4607
        %v4747 = vunpack.c.l.b16 %v4608
        %v4748 = vunpack.c.l.b16 %v4609
        %v4749 = vunpack.c.l.b16 %v4610
        %v4750 = vunpack.c.l.b16 %v4611
        %v4751 = vunpack.c.l.b16 %v4612
        %v4752 = vunpack.c.l.b16 %v4613
        %v4753 = vunpack.c.l.b16 %v4614
        %v4754 = vunpack.c.l.b16 %v4615
        %v4755 = vunpack.c.l.b16 %v4616
        %v4756 = vunpack.c.l.b16 %v4617
        %v4757 = vunpack.c.l.b16 %v4618
        %v4758 = vunpack.c.l.b16 %v4619
        %v4759 = vunpack.c.l.b16 %v4620
        %v4760 = vunpack.c.l.b16 %v4621
        %v4761 = vunpack.c.l.b16 %v4622
        %v4762 = vunpack.c.l.b16 %v4623
        %v4763 = vunpack.c.l.b16 %v4624
        %v4764 = vunpack.c.l.b16 %v4625
        %v4765 = vunpack.c.l.b16 %v4626
        %v4766 = vpack.c.b16 %v4703, %v4702
        %v4767 = vpack.c.b16 %v4705, %v4704
        %v4768 = vpack.c.b16 %v4707, %v4706
        %v4769 = vpack.c.b16 %v4709, %v4708
        %v4770 = vpack.c.b16 %v4711, %v4710
        %v4771 = vpack.c.b16 %v4713, %v4712
        %v4772 = vpack.c.b16 %v4715, %v4714
        %v4773 = vpack.c.b16 %v4717, %v4716
        %v4774 = vpack.c.b16 %v4719, %v4718
        %v4775 = vpack.c.b16 %v4721, %v4720
        %v4776 = vpack.c.b16 %v4723, %v4722
        %v4777 = vpack.c.b16 %v4725, %v4724
        %v4778 = vpack.c.b16 %v4727, %v4726
        %v4779 = vpack.c.b16 %v4729, %v4728
        %v4780 = vpack.c.b16 %v4731, %v4730
        %v4781 = vpack.c.b16 %v4733, %v4732
        %v4782 = vpack.c.b16 %v4735, %v4734
        %v4783 = vpack.c.b16 %v4737, %v4736
        %v4784 = vpack.c.b16 %v4739, %v4738
        %v4785 = vpack.c.b16 %v4741, %v4740
        %v4786 = vpack.c.b16 %v4743, %v4742
        %v4787 = vpack.c.b16 %v4745, %v4744
        %v4788 = vpack.c.b16 %v4747, %v4746
        %v4789 = vpack.c.b16 %v4749, %v4748
        %v4790 = vpack.c.b16 %v4751, %v4750
        %v4791 = vpack.c.b16 %v4753, %v4752
        %v4792 = vpack.c.b16 %v4755, %v4754
        %v4793 = vpack.c.b16 %v4757, %v4756
        %v4794 = vpack.c.b16 %v4759, %v4758
        %v4795 = vpack.c.b16 %v4761, %v4760
        %v4796 = vpack.c.b16 %v4763, %v4762
        %v4797 = vpack.c.b16 %v4765, %v4764
        %4830 = vmatprep.subr.bf16.mxu0 0
        %4831 = vmatpush1.bf16.msra.mxu0 %v4766
        %4832 = vmatprep.subr.bf16.mxu0 0
        %4833 = vmatpush1.bf16.msra.mxu0 %v4767
        %4834 = vmatprep.subr.bf16.mxu0 0
        %4835 = vmatpush1.bf16.msra.mxu0 %v4768
        %4836 = vmatprep.subr.bf16.mxu0 0
        %4837 = vmatpush1.bf16.msra.mxu0 %v4769
        %4838 = vmatprep.subr.bf16.mxu0 0
        %4839 = vmatpush1.bf16.msra.mxu0 %v4770
        %4840 = vmatprep.subr.bf16.mxu0 0
        %4841 = vmatpush1.bf16.msra.mxu0 %v4771
        %4842 = vmatprep.subr.bf16.mxu0 0
        %4843 = vmatpush1.bf16.msra.mxu0 %v4772
        %4844 = vmatprep.subr.bf16.mxu0 0
        %4845 = vmatpush1.bf16.msra.mxu0 %v4773
        %4846 = vmatprep.subr.bf16.mxu0 0
        %4847 = vmatpush1.bf16.msra.mxu0 %v4774
        %4848 = vmatprep.subr.bf16.mxu0 0
        %4849 = vmatpush1.bf16.msra.mxu0 %v4775
        %4850 = vmatprep.subr.bf16.mxu0 0
        %4851 = vmatpush1.bf16.msra.mxu0 %v4776
        %4852 = vmatprep.subr.bf16.mxu0 0
        %4853 = vmatpush1.bf16.msra.mxu0 %v4777
        %4854 = vmatprep.subr.bf16.mxu0 0
        %4855 = vmatpush1.bf16.msra.mxu0 %v4778
        %4856 = vmatprep.subr.bf16.mxu0 0
        %4857 = vmatpush1.bf16.msra.mxu0 %v4779
        %4858 = vmatprep.subr.bf16.mxu0 0
        %4859 = vmatpush1.bf16.msra.mxu0 %v4780
        %4860 = vmatprep.subr.bf16.mxu0 0
        %4861 = vmatpush1.bf16.msra.mxu0 %v4781
        %4862 = vmatprep.mubr.bf16.mxu0 %v4628
        %4863 = vmatmul.mubr.bf16.gmra.mrb[0].mxu0 %v4627
        %v4864 = vpop.f32.mrb[0].mxu0
        %v4865 = vadd.f32 %v4636, %v4864
        %v4866 = vpop.f32.mrb[0].mxu0
        %v4867 = vpop.f32.mrb[0].mxu0
        %v4868 = vadd.f32 %v4636, %v4867
        %v4869 = vpop.f32.mrb[0].mxu0
        %4870 = vdwg.mxu0
        %4871 = vmatprep.subr.bf16.mxu0 0
        %4872 = vmatpush1.bf16.msra.mxu0 %v4782
        %4873 = vmatprep.subr.bf16.mxu0 0
        %4874 = vmatpush1.bf16.msra.mxu0 %v4783
        %4875 = vmatprep.subr.bf16.mxu0 0
        %4876 = vmatpush1.bf16.msra.mxu0 %v4784
        %4877 = vmatprep.subr.bf16.mxu0 0
        %4878 = vmatpush1.bf16.msra.mxu0 %v4785
        %4879 = vmatprep.subr.bf16.mxu0 0
        %4880 = vmatpush1.bf16.msra.mxu0 %v4786
        %4881 = vmatprep.subr.bf16.mxu0 0
        %4882 = vmatpush1.bf16.msra.mxu0 %v4787
        %4883 = vmatprep.subr.bf16.mxu0 0
        %4884 = vmatpush1.bf16.msra.mxu0 %v4788
        %4885 = vmatprep.subr.bf16.mxu0 0
        %4886 = vmatpush1.bf16.msra.mxu0 %v4789
        %4887 = vmatprep.subr.bf16.mxu0 0
        %4888 = vmatpush1.bf16.msra.mxu0 %v4790
        %4889 = vmatprep.subr.bf16.mxu0 0
        %4890 = vmatpush1.bf16.msra.mxu0 %v4791
        %4891 = vmatprep.subr.bf16.mxu0 0
        %4892 = vmatpush1.bf16.msra.mxu0 %v4792
        %4893 = vmatprep.subr.bf16.mxu0 0
        %4894 = vmatpush1.bf16.msra.mxu0 %v4793
        %4895 = vmatprep.subr.bf16.mxu0 0
        %4896 = vmatpush1.bf16.msra.mxu0 %v4794
        %4897 = vmatprep.subr.bf16.mxu0 0
        %4898 = vmatpush1.bf16.msra.mxu0 %v4795
        %4899 = vmatprep.subr.bf16.mxu0 0
        %4900 = vmatpush1.bf16.msra.mxu0 %v4796
        %4901 = vmatprep.subr.bf16.mxu0 0
        %4902 = vmatpush1.bf16.msra.mxu0 %v4797
        %4903 = vmatprep.mubr.bf16.mxu0 %v4630
        %4904 = vmatmul.mubr.bf16.gmra.mrb[0].mxu0 %v4629
        %v4905 = vpop.f32.mrb[0].mxu0
        %v4906 = vadd.f32 %v4865, %v4905
        %v4907 = vpop.f32.mrb[0].mxu0
        %v4908 = vpop.f32.mrb[0].mxu0
        %v4909 = vadd.f32 %v4868, %v4908
        %v4910 = vpop.f32.mrb[0].mxu0
        %4911 = vdwg.mxu0
        %v4912 = vadd.f32 %v4906, %v4188
        %v4913 = vadd.f32 %v4909, %v4189
        %v4914 = vld [vmem:[%s972] sm:$0x1]
        %v4915 = vld [vmem:[%s975] sm:$0x1]
        %4916 = vadd.xlane.f32.xlu0 %v4912
        %v4917 = vpop.xlane.xlu0 %4916
        %4918 = vadd.xlane.f32.xlu0 %v4913
        %v4919 = vpop.xlane.xlu0 %4918
        %v4920 = vmul.f32 %v4917, %v4155
        %v4921 = vmul.f32 %v4919, %v4155
        %v4922 = vsub.f32 %v4912, %v4920
        %v4923 = vsub.f32 %v4913, %v4921
        %v4924 = vmul.f32 %v4922, %v4922
        %v4925 = vmul.f32 %v4923, %v4923
        %4926 = vadd.xlane.f32.xlu0 %v4924
        %v4927 = vpop.xlane.xlu0 %4926
        %4928 = vadd.xlane.f32.xlu0 %v4925
        %v4929 = vpop.xlane.xlu0 %4928
        %v4930 = vmul.f32 %v4927, %v4155
        %v4931 = vmul.f32 %v4929, %v4155
        %v4932 = vadd.f32 %v4930, 1e-12
        %v4933 = vadd.f32 %v4931, 1e-12
        %v4934 = vrsqrt.pop %v4932
        %v4935 = vrsqrt.pop %v4933
        %v4936 = vmul.f32 %v4922, %v4934
        %v4937 = vmul.f32 %v4923, %v4935
        %v4939 = vlaneseq
        %v4940 = vshrl.u32 %v4939, 7
        %v4941 = vsub.s32 0, %v4940
        %v4942 = vrot.slane %v4914, %v4941
        %v4944 = vmul.f32 %v4936, %v4942
        %v4945 = vmul.f32 %v4937, %v4942
        %v4947 = vlaneseq
        %v4948 = vshrl.u32 %v4947, 7
        %v4949 = vsub.s32 0, %v4948
        %v4950 = vrot.slane %v4915, %v4949
        %v4952 = vadd.f32 %v4944, %v4950
        %v4953 = vadd.f32 %v4945, %v4950
        %4954 = vst [vmem:[#allocation2] sm:$0xff] %v4952
        %4955 = vst [vmem:[#allocation2 + $0x8] sm:$0xff] %v4953
        %p4956 = scmp.eq.s32.totalorder %s36, 1
        // Predicated region
        $region121: #{bert_classifier_forward.1} parent=115 // pred_check
          %p4957 = pneg %p4956
        $region122: #{bert_classifier_forward.1} parent=115 // pred_check_branch
          %4959 = sbr.rel (%p4957) target = $region124
        $region123: #{bert_classifier_forward.1} parent=115 // pred_region
          %v4961 = vrot.slane %v4953, 7
          %vm4963 = vcmask 1040384
          %v4964 = vsel %vm4963, %v4952, %v4961
          %v4965 = vld [vmem:[%s20] sm:$0xf]
          %v4966 = vld [vmem:[%s20 + $0x4] sm:$0xf]
          %v4967 = vld [vmem:[%s20 + $0x8] sm:$0xf]
          %v4968 = vld [vmem:[%s20 + $0xc] sm:$0xf]
          %v4969 = vld [vmem:[%s20 + $0x10] sm:$0xf]
          %v4970 = vld [vmem:[%s20 + $0x14] sm:$0xf]
          %v4971 = vld [vmem:[%s20 + $0x18] sm:$0xf]
          %v4972 = vld [vmem:[%s20 + $0x1c] sm:$0xf]
          %v4973 = vld [vmem:[%s20 + $0x20] sm:$0xf]
          %v4974 = vld [vmem:[%s20 + $0x24] sm:$0xf]
          %v4975 = vld [vmem:[%s20 + $0x28] sm:$0xf]
          %v4976 = vld [vmem:[%s20 + $0x2c] sm:$0xf]
          %v4977 = vld [vmem:[%s20 + $0x30] sm:$0xf]
          %v4978 = vld [vmem:[%s20 + $0x34] sm:$0xf]
          %v4979 = vld [vmem:[%s20 + $0x38] sm:$0xf]
          %v4980 = vld [vmem:[%s20 + $0x3c] sm:$0xf]
          %v4981 = vpack.c.bf16 %v4964, %v4964
          %v4982 = vld [vmem:[%s21] sm:$0x1]
          %v4984 = vlaneseq
          %v4985 = vshrl.u32 %v4984, 7
          %v4986 = vsub.s32 0, %v4985
          %v4987 = vrot.slane %v4982, %v4986
          %v5005 = vunpack.c.l.b16 %v4965
          %v5006 = vunpack.c.l.b16 %v4966
          %v5007 = vunpack.c.l.b16 %v4967
          %v5008 = vunpack.c.l.b16 %v4968
          %v5009 = vunpack.c.l.b16 %v4969
          %v5010 = vunpack.c.l.b16 %v4970
          %v5011 = vunpack.c.l.b16 %v4971
          %v5012 = vunpack.c.l.b16 %v4972
          %v5013 = vunpack.c.l.b16 %v4973
          %v5014 = vunpack.c.l.b16 %v4974
          %v5015 = vunpack.c.l.b16 %v4975
          %v5016 = vunpack.c.l.b16 %v4976
          %v5017 = vunpack.c.l.b16 %v4977
          %v5018 = vunpack.c.l.b16 %v4978
          %v5019 = vunpack.c.l.b16 %v4979
          %v5020 = vunpack.c.l.b16 %v4980
          %v5021 = vpack.c.b16 %v5006, %v5005
          %v5022 = vpack.c.b16 %v5008, %v5007
          %v5023 = vpack.c.b16 %v5010, %v5009
          %v5024 = vpack.c.b16 %v5012, %v5011
          %v5025 = vpack.c.b16 %v5014, %v5013
          %v5026 = vpack.c.b16 %v5016, %v5015
          %v5027 = vpack.c.b16 %v5018, %v5017
          %v5028 = vpack.c.b16 %v5020, %v5019
          %5037 = vmatprep.subr.bf16.mxu0 0
          %5038 = vmatpush1.bf16.msra.mxu0 %v5021
          %5039 = vmatprep.subr.bf16.mxu0 0
          %5040 = vmatpush1.bf16.msra.mxu0 %v5022
          %5041 = vmatprep.subr.bf16.mxu0 0
          %5042 = vmatpush1.bf16.msra.mxu0 %v5023
          %5043 = vmatprep.subr.bf16.mxu0 0
          %5044 = vmatpush1.bf16.msra.mxu0 %v5024
          %5045 = vmatprep.subr.bf16.mxu0 0
          %5046 = vmatpush1.bf16.msra.mxu0 %v5025
          %5047 = vmatprep.subr.bf16.mxu0 0
          %5048 = vmatpush1.bf16.msra.mxu0 %v5026
          %5049 = vmatprep.subr.bf16.mxu0 0
          %5050 = vmatpush1.bf16.msra.mxu0 %v5027
          %5051 = vmatprep.subr.bf16.mxu0 0
          %5052 = vmatpush1.bf16.msra.mxu0 %v5028
          %5053 = vmatprep.subr.bf16.mxu0 0
          %5054 = vmatpush1.bf16.msra.mxu0 0
          %5055 = vmatprep.subr.bf16.mxu0 0
          %5056 = vmatpush1.bf16.msra.mxu0 0
          %5057 = vmatprep.subr.bf16.mxu0 0
          %5058 = vmatpush1.bf16.msra.mxu0 0
          %5059 = vmatprep.subr.bf16.mxu0 0
          %5060 = vmatpush1.bf16.msra.mxu0 0
          %5061 = vmatprep.subr.bf16.mxu0 0
          %5062 = vmatpush1.bf16.msra.mxu0 0
          %5063 = vmatprep.subr.bf16.mxu0 0
          %5064 = vmatpush1.bf16.msra.mxu0 0
          %5065 = vmatprep.subr.bf16.mxu0 0
          %5066 = vmatpush1.bf16.msra.mxu0 0
          %5067 = vmatprep.subr.bf16.mxu0 0
          %5068 = vmatpush1.bf16.msra.mxu0 0
          %5069 = vmatprep.mubr.bf16.mxu0 0
          %5070 = vmatmul.mubr.bf16.gmra.mrb[0].mxu0 %v4981
          %v5071 = vpop.f32.mrb[0].mxu0
          %v5072 = vadd.f32 %v4987, %v5071
          %v5073 = vpop.f32.mrb[0].mxu0
          %v5074 = vpop.f32.mrb[0].mxu0
          %v5075 = vpop.f32.mrb[0].mxu0
          %5076 = vdwg.mxu0
          %v5077 = vtanh.pop %v5072
          %v5078 = vld [vmem:[%s22] sm:$0xf]
          %v5079 = vld [vmem:[%s22 + $0x4] sm:$0xf]
          %v5080 = vld [vmem:[%s22 + $0x8] sm:$0xf]
          %v5081 = vld [vmem:[%s22 + $0xc] sm:$0xf]
          %v5082 = vld [vmem:[%s22 + $0x10] sm:$0xf]
          %v5083 = vld [vmem:[%s22 + $0x14] sm:$0xf]
          %v5084 = vld [vmem:[%s22 + $0x18] sm:$0xf]
          %v5085 = vld [vmem:[%s22 + $0x1c] sm:$0xf]
          %v5086 = vld [vmem:[%s22 + $0x20] sm:$0xf]
          %v5087 = vld [vmem:[%s22 + $0x24] sm:$0xf]
          %v5088 = vld [vmem:[%s22 + $0x28] sm:$0xf]
          %v5089 = vld [vmem:[%s22 + $0x2c] sm:$0xf]
          %v5090 = vld [vmem:[%s22 + $0x30] sm:$0xf]
          %v5091 = vld [vmem:[%s22 + $0x34] sm:$0xf]
          %v5092 = vld [vmem:[%s22 + $0x38] sm:$0xf]
          %v5093 = vld [vmem:[%s22 + $0x3c] sm:$0xf]
          %v5094 = vpack.c.bf16 %v5077, %v5077
          %v5095 = vld [vmem:[%s23] sm:$0x1]
          %v5097 = vlaneseq
          %v5098 = vshrl.u32 %v5097, 7
          %v5099 = vsub.s32 0, %v5098
          %v5100 = vrot.slane %v5095, %v5099
          %v5118 = vunpack.c.l.b16 %v5078
          %v5119 = vunpack.c.l.b16 %v5079
          %v5120 = vunpack.c.l.b16 %v5080
          %v5121 = vunpack.c.l.b16 %v5081
          %v5122 = vunpack.c.l.b16 %v5082
          %v5123 = vunpack.c.l.b16 %v5083
          %v5124 = vunpack.c.l.b16 %v5084
          %v5125 = vunpack.c.l.b16 %v5085
          %v5126 = vunpack.c.l.b16 %v5086
          %v5127 = vunpack.c.l.b16 %v5087
          %v5128 = vunpack.c.l.b16 %v5088
          %v5129 = vunpack.c.l.b16 %v5089
          %v5130 = vunpack.c.l.b16 %v5090
          %v5131 = vunpack.c.l.b16 %v5091
          %v5132 = vunpack.c.l.b16 %v5092
          %v5133 = vunpack.c.l.b16 %v5093
          %v5134 = vpack.c.b16 %v5119, %v5118
          %v5135 = vpack.c.b16 %v5121, %v5120
          %v5136 = vpack.c.b16 %v5123, %v5122
          %v5137 = vpack.c.b16 %v5125, %v5124
          %v5138 = vpack.c.b16 %v5127, %v5126
          %v5139 = vpack.c.b16 %v5129, %v5128
          %v5140 = vpack.c.b16 %v5131, %v5130
          %v5141 = vpack.c.b16 %v5133, %v5132
          %5150 = vmatprep.subr.bf16.mxu0 0
          %5151 = vmatpush1.bf16.msra.mxu0 %v5134
          %5152 = vmatprep.subr.bf16.mxu0 0
          %5153 = vmatpush1.bf16.msra.mxu0 %v5135
          %5154 = vmatprep.subr.bf16.mxu0 0
          %5155 = vmatpush1.bf16.msra.mxu0 %v5136
          %5156 = vmatprep.subr.bf16.mxu0 0
          %5157 = vmatpush1.bf16.msra.mxu0 %v5137
          %5158 = vmatprep.subr.bf16.mxu0 0
          %5159 = vmatpush1.bf16.msra.mxu0 %v5138
          %5160 = vmatprep.subr.bf16.mxu0 0
          %5161 = vmatpush1.bf16.msra.mxu0 %v5139
          %5162 = vmatprep.subr.bf16.mxu0 0
          %5163 = vmatpush1.bf16.msra.mxu0 %v5140
          %5164 = vmatprep.subr.bf16.mxu0 0
          %5165 = vmatpush1.bf16.msra.mxu0 %v5141
          %5166 = vmatprep.subr.bf16.mxu0 0
          %5167 = vmatpush1.bf16.msra.mxu0 0
          %5168 = vmatprep.subr.bf16.mxu0 0
          %5169 = vmatpush1.bf16.msra.mxu0 0
          %5170 = vmatprep.subr.bf16.mxu0 0
          %5171 = vmatpush1.bf16.msra.mxu0 0
          %5172 = vmatprep.subr.bf16.mxu0 0
          %5173 = vmatpush1.bf16.msra.mxu0 0
          %5174 = vmatprep.subr.bf16.mxu0 0
          %5175 = vmatpush1.bf16.msra.mxu0 0
          %5176 = vmatprep.subr.bf16.mxu0 0
          %5177 = vmatpush1.bf16.msra.mxu0 0
          %5178 = vmatprep.subr.bf16.mxu0 0
          %5179 = vmatpush1.bf16.msra.mxu0 0
          %5180 = vmatprep.subr.bf16.mxu0 0
          %5181 = vmatpush1.bf16.msra.mxu0 0
          %5182 = vmatprep.mubr.bf16.mxu0 0
          %5183 = vmatmul.mubr.bf16.gmra.mrb[0].mxu0 %v5094
          %v5184 = vpop.f32.mrb[0].mxu0
          %v5185 = vadd.f32 %v5100, %v5184
          %v5186 = vpop.f32.mrb[0].mxu0
          %v5187 = vpop.f32.mrb[0].mxu0
          %v5188 = vpop.f32.mrb[0].mxu0
          %5189 = vdwg.mxu0
          %5190 = vst [vmem:[#allocation3] sm:$0x3] %v5185
        $region124: #{bert_classifier_forward.1} parent=115 // pred_fallthru
          _
        // Predicated region
        $region125: #{bert_classifier_forward.1} parent=115 // pred_check
          %p5191 = pneg %p633
        $region126: #{bert_classifier_forward.1} parent=115 // pred_check_branch
          %5193 = sbr.rel (%p5191) target = $region128
        $region127: #{bert_classifier_forward.1} parent=115 // pred_region
          %s5195 = ssub.s32 32, 32
          %5196 = vsyncadd [#allocation4], %s5195
          %s5198 = sshll.u32 [#allocation3], 4
          %s5199 = int_to_ptr.vmem [resolvable:$true] %s5198
          %5201 = dma.vmem_to_hbm [thread:$0]  %s5199, 32, %s24, [#allocation4]
        $region128: #{bert_classifier_forward.1} parent=115 // pred_fallthru
          _
        // Predicated region
        $region129: #{bert_classifier_forward.1} parent=115 // pred_check
          %p5202 = pneg %p633
        $region130: #{bert_classifier_forward.1} parent=115 // pred_check_branch
          %5204 = sbr.rel (%p5202) target = $region132
        $region131: #{bert_classifier_forward.1} parent=115 // pred_region
          %5205 = dma.done [#allocation4], 32
        $region132: #{bert_classifier_forward.1} parent=115 // pred_fallthru
          _
      $region116: #{bert_classifier_forward.1} parent=5 // pred_fallthru
        _
      %p5206 = scmp.le.s32.totalorder 2, %s31
      // Predicated region
      $region133: #{bert_classifier_forward.1} parent=5 // pred_check
        %p5207 = pneg %p5206
      $region134: #{bert_classifier_forward.1} parent=5 // pred_check_branch
        %5209 = sbr.rel (%p5207) target = $region136
      $region135: #{bert_classifier_forward.1} parent=5 // pred_region
        %s5210 = ssub.s32 %s31, 2
      $region136: #{bert_classifier_forward.1} parent=5 // pred_fallthru
        _
    $region6: #{bert_classifier_forward.1} parent=1 // loop_footer
      %s35 = sadd.s32 1, %s31
    $region7: #{bert_classifier_forward.1} parent=1 // loop_footer_branch
      %30 = sbr.rel target = $region3
    $region8: #{bert_classifier_forward.1} parent=1 // loop_exit
      _
    %5211 = vsyncpa [#allocation4], 1
    %s5212 = scalar_lea.sflag [#allocation4], 1
    %5213 = vsyncpa %s5212, 1

</llo_original>
